<compile_context>
chip_gen: v6e
topology: v6e:2x2x1
jax: 0.10.0
libtpu: 0.0.40
codegen_flags: <defaults>
</compile_context>

<pallas_src>
import jax
import jax.numpy as jnp
from jax.experimental import pallas as pl
from jax.experimental.pallas import tpu as pltpu


def _se_gate_kernel(scale_ref, x_ref, o_ref, gate_ref):
    # scale_ref: (tc, 1)    -- gate logits for this channel block
    # x_ref:     (tc, t_hw) -- activation tile
    # o_ref:     (tc, t_hw) -- gated output tile
    # gate_ref:  (tc, 1)    -- VMEM scratch: sigmoid(scale) in activation dtype
    @pl.when(pl.program_id(1) == 0)
    def _():
        # sigmoid in f32 on the EUP, stored once per channel block; reused for
        # every spatial tile j of this channel block.
        gate_ref[...] = jax.nn.sigmoid(
            scale_ref[...].astype(jnp.float32)).astype(gate_ref.dtype)

    o_ref[...] = gate_ref[...] * x_ref[...]


def sigmoid_mul(scale, x, *, num_channel_blocks=1,
                max_x_block_bytes=6 * 1024 * 1024):
    """sigmoid(scale[N,C,1,1]) * x[N,C,H,W] as a Pallas TPU kernel."""
    assert x.ndim == 4 and scale.ndim == 4
    n, c, h, w = x.shape
    assert scale.shape == (n, c, 1, 1)
    rows = n * c
    hw = h * w
    itemsize = x.dtype.itemsize
    # Min sublane multiple: 8 (f32/4B), 16 (bf16/2B), 32 (int8/fp8/1B).
    min_sublane = 32 // itemsize

    x2 = x.reshape(rows, hw)     # (N*C, HW) -- free reshape of NCHW
    s2 = scale.reshape(rows, 1)  # (N*C, 1)

    # --- channel (sublane) tiling ------------------------------------------
    # Default 1 block (single contiguous HBM stream, no wasted grid steps on
    # single-TC v5e/v6e). Use 2 only when the parallel axis is known to shard
    # across v7x's two TensorCores.
    tc = rows
    if (num_channel_blocks > 1 and rows % num_channel_blocks == 0
            and (rows // num_channel_blocks) % min_sublane == 0):
        tc = rows // num_channel_blocks
    n_cb = rows // tc

    # --- spatial (lane) tiling ----------------------------------------------
    # Only when HW splits into lane-aligned chunks and the full-HW block would
    # exceed the per-block budget (large SE spatial sizes, e.g. 112x112).
    # For HW=196 this is a no-op (single full-width block).
    t_hw = hw
    if hw % 128 == 0:
        while (tc * t_hw * itemsize > max_x_block_bytes and t_hw % 256 == 0):
            t_hw //= 2
    n_hb = hw // t_hw

    # --- VMEM budget (x + out blocks double-buffered, scale + gate scratch) --
    pad_hw = -(-t_hw // 128) * 128
    pad_tc = -(-tc // min_sublane) * min_sublane
    vmem_need = 4 * pad_tc * pad_hw * itemsize + 6 * pad_tc * 128 * 4
    vmem_limit = int(min(max(vmem_need + (2 << 20), 16 << 20), 48 << 20))

    out2 = pl.pallas_call(
        _se_gate_kernel,
        out_shape=jax.ShapeDtypeStruct((rows, hw), x.dtype),
        grid_spec=pltpu.PrefetchScalarGridSpec(
            num_scalar_prefetch=0,
            grid=(n_cb, n_hb),
            in_specs=[
                # Per-channel-block gate logits: no lane-padded resident copy,
                # no in-kernel dynamic slice.
                pl.BlockSpec((tc, 1), lambda i, j: (i, 0)),
                pl.BlockSpec((tc, t_hw), lambda i, j: (i, j)),
            ],
            out_specs=pl.BlockSpec((tc, t_hw), lambda i, j: (i, j)),
            scratch_shapes=[pltpu.VMEM((tc, 1), x.dtype)],
        ),
        compiler_params=pltpu.CompilerParams(
            # Channel axis may shard across v7x TensorCores; the spatial axis
            # is "arbitrary" because the gate scratch is a carry across j.
            dimension_semantics=("parallel", "arbitrary"),
            vmem_limit_bytes=vmem_limit,
        ),
    )(s2, x2)

    return out2.reshape(n, c, h, w)


if __name__ == "__main__":
    # Shapes from the original module: x (1, 1344, 14, 14), scale (1, 1344, 1, 1).
    N, C, H, W = 1, 1344, 14, 14
    key = jax.random.PRNGKey(0)
    k1, k2 = jax.random.split(key)
    x531 = jax.random.normal(k1, (N, C, H, W), dtype=jnp.float32)
    x535 = jax.random.normal(k2, (N, C, 1, 1), dtype=jnp.float32)

    out = sigmoid_mul(x535, x531)
    out = jax.block_until_ready(out)

    # Reference check in plain JAX.
    ref = jax.nn.sigmoid(x535) * x531
    assert out.shape == ref.shape == (N, C, H, W)
    assert jnp.allclose(out, ref, atol=1e-6, rtol=1e-6)

    print("KERNEL_OK")
</pallas_src>

<mosaic_0001>
module attributes {stable_mosaic.version = 11 : i64} {
  func.func @_se_gate_kernel(%arg0: i32, %arg1: i32, %arg2: memref<1344x1xf32, #tpu.memory_space<vmem>>, %arg3: memref<1344x196xf32, #tpu.memory_space<vmem>>, %arg4: memref<1344x196xf32, #tpu.memory_space<vmem>>, %arg5: memref<1344x1xf32, #tpu.memory_space<vmem>>) attributes {dimension_semantics = [#tpu.dimension_semantics<parallel>, #tpu.dimension_semantics<arbitrary>], iteration_bounds = array<i64: 1, 1>, scalar_prefetch = 0 : i64, scratch_operands = 1 : i64, tpu.core_type = #tpu.core_type<tc>, window_params = [{transform_indices = @transform_0, window_bounds = array<i64: 1344, 1>}, {transform_indices = @transform_1, window_bounds = array<i64: 1344, 196>}, {transform_indices = @transform_2, window_bounds = array<i64: 1344, 196>}]} {
    %c0_i32 = arith.constant 0 : i32
    %0 = arith.cmpi eq, %arg1, %c0_i32 : i32
    %1 = arith.extui %0 : i1 to i32
    %c0_i32_0 = arith.constant 0 : i32
    %2 = arith.cmpi ne, %1, %c0_i32_0 : i32
    scf.if %2 {
      %c0_6 = arith.constant 0 : index
      %c0_7 = arith.constant 0 : index
      %8 = vector.load %arg2[%c0_6, %c0_7] : memref<1344x1xf32, #tpu.memory_space<vmem>>, vector<1344x1xf32>
      %9 = arith.negf %8 : vector<1344x1xf32>
      %10 = math.exp %9 : vector<1344x1xf32>
      %cst = arith.constant 1.000000e+00 : f32
      %11 = vector.broadcast %cst : f32 to vector<1344x1xf32>
      %12 = arith.addf %11, %10 : vector<1344x1xf32>
      %13 = arith.divf %11, %12 : vector<1344x1xf32>
      %c0_8 = arith.constant 0 : index
      %c0_9 = arith.constant 0 : index
      %14 = vector.load %arg5[%c0_8, %c0_9] : memref<1344x1xf32, #tpu.memory_space<vmem>>, vector<1344x1xf32>
      tpu.vector_store %arg5[%c0_8, %c0_9], %13 {strides = array<i32>} : memref<1344x1xf32, #tpu.memory_space<vmem>>, vector<1344x1xf32>,
    } else {
    }
    %c0 = arith.constant 0 : index
    %c0_1 = arith.constant 0 : index
    %3 = vector.load %arg5[%c0, %c0_1] : memref<1344x1xf32, #tpu.memory_space<vmem>>, vector<1344x1xf32>
    %c0_2 = arith.constant 0 : index
    %c0_3 = arith.constant 0 : index
    %4 = vector.load %arg3[%c0_2, %c0_3] : memref<1344x196xf32, #tpu.memory_space<vmem>>, vector<1344x196xf32>
    %5 = vector.broadcast %3 : vector<1344x1xf32> to vector<1344x196xf32>
    %6 = arith.mulf %5, %4 : vector<1344x196xf32>
    %c0_4 = arith.constant 0 : index
    %c0_5 = arith.constant 0 : index
    %7 = vector.load %arg4[%c0_4, %c0_5] : memref<1344x196xf32, #tpu.memory_space<vmem>>, vector<1344x196xf32>
    tpu.vector_store %arg4[%c0_4, %c0_5], %6 {strides = array<i32>} : memref<1344x196xf32, #tpu.memory_space<vmem>>, vector<1344x196xf32>,
    return
  }
  func.func @transform_0(%arg0: i32, %arg1: i32) -> (i32, i32) {
    %c0_i32 = arith.constant 0 : i32
    %c0_i32_0 = arith.constant 0 : i32
    return %arg0, %c0_i32 : i32, i32
  }
  func.func @transform_1(%arg0: i32, %arg1: i32) -> (i32, i32) {
    %c0_i32 = arith.constant 0 : i32
    return %arg0, %arg1 : i32, i32
  }
  func.func @transform_2(%arg0: i32, %arg1: i32) -> (i32, i32) {
    %c0_i32 = arith.constant 0 : i32
    return %arg0, %arg1 : i32, i32
  }
}

</mosaic_0001>

<llo_original>
// kernel: tpu_custom_call.1
$region0: #{tpu_custom_call.1}
  #allocation0 [shape = 'u32[]', space=smem, size = 0x4, offset = 0x4, fixed_abs, tag = 'smem constant byte address 0x4 - core index']
  #allocation1 [shape = 'u32[144,128]{1,0:T(1,128)}', space=vmem, size = 0x12000, scoped, tag = 'internal scratch']
  #allocation2 [shape = 'f32[1344,1]{1,0:T(8,128)}', space=vmem, size = 0xa8000, scoped, tag = 'scratch operand']
  %s0 = inlined_call_operand.vmem [shape: f32[1344,1], index: 0, kind: input, shape index: {}]
  %s1 = inlined_call_operand.vmem [shape: f32[1344,196], index: 1, kind: input, shape index: {}]
  %s2 = inlined_call_operand.vmem [shape: f32[1344,196], index: 2, kind: output, shape index: {}]
  %s3 = sld [smem:[#allocation0]]
  $region22: #{tpu_custom_call.1} parent=0
    _
  %s5 = ssub.s32 1, %s3
  %s6 = scalar_select 0, %s5, %s3
  // Predicated region
  $region2: #{tpu_custom_call.1} parent=0 // pred_check
    _
  $region3: #{tpu_custom_call.1} parent=0 // pred_check_branch
    %8 = sbr.rel (0) target = $region5
  $region4: #{tpu_custom_call.1} parent=0 // pred_region
    _
  $region5: #{tpu_custom_call.1} parent=0 // pred_fallthru
    _
  // Predicated region
  $region6: #{tpu_custom_call.1} parent=0 // pred_check
    _
  $region7: #{tpu_custom_call.1} parent=0 // pred_check_branch
    %10 = sbr.rel (0) target = $region9
  $region8: #{tpu_custom_call.1} parent=0 // pred_region
    _
  $region9: #{tpu_custom_call.1} parent=0 // pred_fallthru
    _
  %p11 = scmp.eq.s32.totalorder 0, 0
  // Predicated region
  $region10: #{tpu_custom_call.1} parent=0 // pred_check
    %p12 = pneg %p11
  $region11: #{tpu_custom_call.1} parent=0 // pred_check_branch
    %14 = sbr.rel (%p12) target = $region13
  $region12: #{tpu_custom_call.1} parent=0 // pred_region
    %v15 = vld [vmem:[%s0] sm:$0xff]
    %v16 = vld [vmem:[%s0 + $0x8] sm:$0xff]
    %v17 = vld [vmem:[%s0 + $0x10] sm:$0xff]
    %v18 = vld [vmem:[%s0 + $0x18] sm:$0xff]
    %v19 = vld [vmem:[%s0 + $0x20] sm:$0xff]
    %v20 = vld [vmem:[%s0 + $0x28] sm:$0xff]
    %v21 = vld [vmem:[%s0 + $0x30] sm:$0xff]
    %v22 = vld [vmem:[%s0 + $0x38] sm:$0xff]
    %v23 = vld [vmem:[%s0 + $0x40] sm:$0xff]
    %v24 = vld [vmem:[%s0 + $0x48] sm:$0xff]
    %v25 = vld [vmem:[%s0 + $0x50] sm:$0xff]
    %v26 = vld [vmem:[%s0 + $0x58] sm:$0xff]
    %v27 = vld [vmem:[%s0 + $0x60] sm:$0xff]
    %v28 = vld [vmem:[%s0 + $0x68] sm:$0xff]
    %v29 = vld [vmem:[%s0 + $0x70] sm:$0xff]
    %v30 = vld [vmem:[%s0 + $0x78] sm:$0xff]
    %v31 = vld [vmem:[%s0 + $0x80] sm:$0xff]
    %v32 = vld [vmem:[%s0 + $0x88] sm:$0xff]
    %v33 = vld [vmem:[%s0 + $0x90] sm:$0xff]
    %v34 = vld [vmem:[%s0 + $0x98] sm:$0xff]
    %v35 = vld [vmem:[%s0 + $0xa0] sm:$0xff]
    %v36 = vld [vmem:[%s0 + $0xa8] sm:$0xff]
    %v37 = vld [vmem:[%s0 + $0xb0] sm:$0xff]
    %v38 = vld [vmem:[%s0 + $0xb8] sm:$0xff]
    %v39 = vld [vmem:[%s0 + $0xc0] sm:$0xff]
    %v40 = vld [vmem:[%s0 + $0xc8] sm:$0xff]
    %v41 = vld [vmem:[%s0 + $0xd0] sm:$0xff]
    %v42 = vld [vmem:[%s0 + $0xd8] sm:$0xff]
    %v43 = vld [vmem:[%s0 + $0xe0] sm:$0xff]
    %v44 = vld [vmem:[%s0 + $0xe8] sm:$0xff]
    %v45 = vld [vmem:[%s0 + $0xf0] sm:$0xff]
    %v46 = vld [vmem:[%s0 + $0xf8] sm:$0xff]
    %v47 = vld [vmem:[%s0 + $0x100] sm:$0xff]
    %v48 = vld [vmem:[%s0 + $0x108] sm:$0xff]
    %v49 = vld [vmem:[%s0 + $0x110] sm:$0xff]
    %v50 = vld [vmem:[%s0 + $0x118] sm:$0xff]
    %v51 = vld [vmem:[%s0 + $0x120] sm:$0xff]
    %v52 = vld [vmem:[%s0 + $0x128] sm:$0xff]
    %v53 = vld [vmem:[%s0 + $0x130] sm:$0xff]
    %v54 = vld [vmem:[%s0 + $0x138] sm:$0xff]
    %v55 = vld [vmem:[%s0 + $0x140] sm:$0xff]
    %v56 = vld [vmem:[%s0 + $0x148] sm:$0xff]
    %v57 = vld [vmem:[%s0 + $0x150] sm:$0xff]
    %v58 = vld [vmem:[%s0 + $0x158] sm:$0xff]
    %v59 = vld [vmem:[%s0 + $0x160] sm:$0xff]
    %v60 = vld [vmem:[%s0 + $0x168] sm:$0xff]
    %v61 = vld [vmem:[%s0 + $0x170] sm:$0xff]
    %v62 = vld [vmem:[%s0 + $0x178] sm:$0xff]
    %v63 = vld [vmem:[%s0 + $0x180] sm:$0xff]
    %v64 = vld [vmem:[%s0 + $0x188] sm:$0xff]
    %v65 = vld [vmem:[%s0 + $0x190] sm:$0xff]
    %v66 = vld [vmem:[%s0 + $0x198] sm:$0xff]
    %v67 = vld [vmem:[%s0 + $0x1a0] sm:$0xff]
    %v68 = vld [vmem:[%s0 + $0x1a8] sm:$0xff]
    %v69 = vld [vmem:[%s0 + $0x1b0] sm:$0xff]
    %v70 = vld [vmem:[%s0 + $0x1b8] sm:$0xff]
    %v71 = vld [vmem:[%s0 + $0x1c0] sm:$0xff]
    %v72 = vld [vmem:[%s0 + $0x1c8] sm:$0xff]
    %v73 = vld [vmem:[%s0 + $0x1d0] sm:$0xff]
    %v74 = vld [vmem:[%s0 + $0x1d8] sm:$0xff]
    %v75 = vld [vmem:[%s0 + $0x1e0] sm:$0xff]
    %v76 = vld [vmem:[%s0 + $0x1e8] sm:$0xff]
    %v77 = vld [vmem:[%s0 + $0x1f0] sm:$0xff]
    %v78 = vld [vmem:[%s0 + $0x1f8] sm:$0xff]
    %v79 = vld [vmem:[%s0 + $0x200] sm:$0xff]
    %v80 = vld [vmem:[%s0 + $0x208] sm:$0xff]
    %v81 = vld [vmem:[%s0 + $0x210] sm:$0xff]
    %v82 = vld [vmem:[%s0 + $0x218] sm:$0xff]
    %v83 = vld [vmem:[%s0 + $0x220] sm:$0xff]
    %v84 = vld [vmem:[%s0 + $0x228] sm:$0xff]
    %v85 = vld [vmem:[%s0 + $0x230] sm:$0xff]
    %v86 = vld [vmem:[%s0 + $0x238] sm:$0xff]
    %v87 = vld [vmem:[%s0 + $0x240] sm:$0xff]
    %v88 = vld [vmem:[%s0 + $0x248] sm:$0xff]
    %v89 = vld [vmem:[%s0 + $0x250] sm:$0xff]
    %v90 = vld [vmem:[%s0 + $0x258] sm:$0xff]
    %v91 = vld [vmem:[%s0 + $0x260] sm:$0xff]
    %v92 = vld [vmem:[%s0 + $0x268] sm:$0xff]
    %v93 = vld [vmem:[%s0 + $0x270] sm:$0xff]
    %v94 = vld [vmem:[%s0 + $0x278] sm:$0xff]
    %v95 = vld [vmem:[%s0 + $0x280] sm:$0xff]
    %v96 = vld [vmem:[%s0 + $0x288] sm:$0xff]
    %v97 = vld [vmem:[%s0 + $0x290] sm:$0xff]
    %v98 = vld [vmem:[%s0 + $0x298] sm:$0xff]
    %v99 = vld [vmem:[%s0 + $0x2a0] sm:$0xff]
    %v100 = vld [vmem:[%s0 + $0x2a8] sm:$0xff]
    %v101 = vld [vmem:[%s0 + $0x2b0] sm:$0xff]
    %v102 = vld [vmem:[%s0 + $0x2b8] sm:$0xff]
    %v103 = vld [vmem:[%s0 + $0x2c0] sm:$0xff]
    %v104 = vld [vmem:[%s0 + $0x2c8] sm:$0xff]
    %v105 = vld [vmem:[%s0 + $0x2d0] sm:$0xff]
    %v106 = vld [vmem:[%s0 + $0x2d8] sm:$0xff]
    %v107 = vld [vmem:[%s0 + $0x2e0] sm:$0xff]
    %v108 = vld [vmem:[%s0 + $0x2e8] sm:$0xff]
    %v109 = vld [vmem:[%s0 + $0x2f0] sm:$0xff]
    %v110 = vld [vmem:[%s0 + $0x2f8] sm:$0xff]
    %v111 = vld [vmem:[%s0 + $0x300] sm:$0xff]
    %v112 = vld [vmem:[%s0 + $0x308] sm:$0xff]
    %v113 = vld [vmem:[%s0 + $0x310] sm:$0xff]
    %v114 = vld [vmem:[%s0 + $0x318] sm:$0xff]
    %v115 = vld [vmem:[%s0 + $0x320] sm:$0xff]
    %v116 = vld [vmem:[%s0 + $0x328] sm:$0xff]
    %v117 = vld [vmem:[%s0 + $0x330] sm:$0xff]
    %v118 = vld [vmem:[%s0 + $0x338] sm:$0xff]
    %v119 = vld [vmem:[%s0 + $0x340] sm:$0xff]
    %v120 = vld [vmem:[%s0 + $0x348] sm:$0xff]
    %v121 = vld [vmem:[%s0 + $0x350] sm:$0xff]
    %v122 = vld [vmem:[%s0 + $0x358] sm:$0xff]
    %v123 = vld [vmem:[%s0 + $0x360] sm:$0xff]
    %v124 = vld [vmem:[%s0 + $0x368] sm:$0xff]
    %v125 = vld [vmem:[%s0 + $0x370] sm:$0xff]
    %v126 = vld [vmem:[%s0 + $0x378] sm:$0xff]
    %v127 = vld [vmem:[%s0 + $0x380] sm:$0xff]
    %v128 = vld [vmem:[%s0 + $0x388] sm:$0xff]
    %v129 = vld [vmem:[%s0 + $0x390] sm:$0xff]
    %v130 = vld [vmem:[%s0 + $0x398] sm:$0xff]
    %v131 = vld [vmem:[%s0 + $0x3a0] sm:$0xff]
    %v132 = vld [vmem:[%s0 + $0x3a8] sm:$0xff]
    %v133 = vld [vmem:[%s0 + $0x3b0] sm:$0xff]
    %v134 = vld [vmem:[%s0 + $0x3b8] sm:$0xff]
    %v135 = vld [vmem:[%s0 + $0x3c0] sm:$0xff]
    %v136 = vld [vmem:[%s0 + $0x3c8] sm:$0xff]
    %v137 = vld [vmem:[%s0 + $0x3d0] sm:$0xff]
    %v138 = vld [vmem:[%s0 + $0x3d8] sm:$0xff]
    %v139 = vld [vmem:[%s0 + $0x3e0] sm:$0xff]
    %v140 = vld [vmem:[%s0 + $0x3e8] sm:$0xff]
    %v141 = vld [vmem:[%s0 + $0x3f0] sm:$0xff]
    %v142 = vld [vmem:[%s0 + $0x3f8] sm:$0xff]
    %v143 = vld [vmem:[%s0 + $0x400] sm:$0xff]
    %v144 = vld [vmem:[%s0 + $0x408] sm:$0xff]
    %v145 = vld [vmem:[%s0 + $0x410] sm:$0xff]
    %v146 = vld [vmem:[%s0 + $0x418] sm:$0xff]
    %v147 = vld [vmem:[%s0 + $0x420] sm:$0xff]
    %v148 = vld [vmem:[%s0 + $0x428] sm:$0xff]
    %v149 = vld [vmem:[%s0 + $0x430] sm:$0xff]
    %v150 = vld [vmem:[%s0 + $0x438] sm:$0xff]
    %v151 = vld [vmem:[%s0 + $0x440] sm:$0xff]
    %v152 = vld [vmem:[%s0 + $0x448] sm:$0xff]
    %v153 = vld [vmem:[%s0 + $0x450] sm:$0xff]
    %v154 = vld [vmem:[%s0 + $0x458] sm:$0xff]
    %v155 = vld [vmem:[%s0 + $0x460] sm:$0xff]
    %v156 = vld [vmem:[%s0 + $0x468] sm:$0xff]
    %v157 = vld [vmem:[%s0 + $0x470] sm:$0xff]
    %v158 = vld [vmem:[%s0 + $0x478] sm:$0xff]
    %v159 = vld [vmem:[%s0 + $0x480] sm:$0xff]
    %v160 = vld [vmem:[%s0 + $0x488] sm:$0xff]
    %v161 = vld [vmem:[%s0 + $0x490] sm:$0xff]
    %v162 = vld [vmem:[%s0 + $0x498] sm:$0xff]
    %v163 = vld [vmem:[%s0 + $0x4a0] sm:$0xff]
    %v164 = vld [vmem:[%s0 + $0x4a8] sm:$0xff]
    %v165 = vld [vmem:[%s0 + $0x4b0] sm:$0xff]
    %v166 = vld [vmem:[%s0 + $0x4b8] sm:$0xff]
    %v167 = vld [vmem:[%s0 + $0x4c0] sm:$0xff]
    %v168 = vld [vmem:[%s0 + $0x4c8] sm:$0xff]
    %v169 = vld [vmem:[%s0 + $0x4d0] sm:$0xff]
    %v170 = vld [vmem:[%s0 + $0x4d8] sm:$0xff]
    %v171 = vld [vmem:[%s0 + $0x4e0] sm:$0xff]
    %v172 = vld [vmem:[%s0 + $0x4e8] sm:$0xff]
    %v173 = vld [vmem:[%s0 + $0x4f0] sm:$0xff]
    %v174 = vld [vmem:[%s0 + $0x4f8] sm:$0xff]
    %v175 = vld [vmem:[%s0 + $0x500] sm:$0xff]
    %v176 = vld [vmem:[%s0 + $0x508] sm:$0xff]
    %v177 = vld [vmem:[%s0 + $0x510] sm:$0xff]
    %v178 = vld [vmem:[%s0 + $0x518] sm:$0xff]
    %v179 = vld [vmem:[%s0 + $0x520] sm:$0xff]
    %v180 = vld [vmem:[%s0 + $0x528] sm:$0xff]
    %v181 = vld [vmem:[%s0 + $0x530] sm:$0xff]
    %v182 = vld [vmem:[%s0 + $0x538] sm:$0xff]
    %v183 = vxor.u32 %v15, 2147483648
    %v184 = vxor.u32 %v16, 2147483648
    %v185 = vxor.u32 %v17, 2147483648
    %v186 = vxor.u32 %v18, 2147483648
    %v187 = vxor.u32 %v19, 2147483648
    %v188 = vxor.u32 %v20, 2147483648
    %v189 = vxor.u32 %v21, 2147483648
    %v190 = vxor.u32 %v22, 2147483648
    %v191 = vxor.u32 %v23, 2147483648
    %v192 = vxor.u32 %v24, 2147483648
    %v193 = vxor.u32 %v25, 2147483648
    %v194 = vxor.u32 %v26, 2147483648
    %v195 = vxor.u32 %v27, 2147483648
    %v196 = vxor.u32 %v28, 2147483648
    %v197 = vxor.u32 %v29, 2147483648
    %v198 = vxor.u32 %v30, 2147483648
    %v199 = vxor.u32 %v31, 2147483648
    %v200 = vxor.u32 %v32, 2147483648
    %v201 = vxor.u32 %v33, 2147483648
    %v202 = vxor.u32 %v34, 2147483648
    %v203 = vxor.u32 %v35, 2147483648
    %v204 = vxor.u32 %v36, 2147483648
    %v205 = vxor.u32 %v37, 2147483648
    %v206 = vxor.u32 %v38, 2147483648
    %v207 = vxor.u32 %v39, 2147483648
    %v208 = vxor.u32 %v40, 2147483648
    %v209 = vxor.u32 %v41, 2147483648
    %v210 = vxor.u32 %v42, 2147483648
    %v211 = vxor.u32 %v43, 2147483648
    %v212 = vxor.u32 %v44, 2147483648
    %v213 = vxor.u32 %v45, 2147483648
    %v214 = vxor.u32 %v46, 2147483648
    %v215 = vxor.u32 %v47, 2147483648
    %v216 = vxor.u32 %v48, 2147483648
    %v217 = vxor.u32 %v49, 2147483648
    %v218 = vxor.u32 %v50, 2147483648
    %v219 = vxor.u32 %v51, 2147483648
    %v220 = vxor.u32 %v52, 2147483648
    %v221 = vxor.u32 %v53, 2147483648
    %v222 = vxor.u32 %v54, 2147483648
    %v223 = vxor.u32 %v55, 2147483648
    %v224 = vxor.u32 %v56, 2147483648
    %v225 = vxor.u32 %v57, 2147483648
    %v226 = vxor.u32 %v58, 2147483648
    %v227 = vxor.u32 %v59, 2147483648
    %v228 = vxor.u32 %v60, 2147483648
    %v229 = vxor.u32 %v61, 2147483648
    %v230 = vxor.u32 %v62, 2147483648
    %v231 = vxor.u32 %v63, 2147483648
    %v232 = vxor.u32 %v64, 2147483648
    %v233 = vxor.u32 %v65, 2147483648
    %v234 = vxor.u32 %v66, 2147483648
    %v235 = vxor.u32 %v67, 2147483648
    %v236 = vxor.u32 %v68, 2147483648
    %v237 = vxor.u32 %v69, 2147483648
    %v238 = vxor.u32 %v70, 2147483648
    %v239 = vxor.u32 %v71, 2147483648
    %v240 = vxor.u32 %v72, 2147483648
    %v241 = vxor.u32 %v73, 2147483648
    %v242 = vxor.u32 %v74, 2147483648
    %v243 = vxor.u32 %v75, 2147483648
    %v244 = vxor.u32 %v76, 2147483648
    %v245 = vxor.u32 %v77, 2147483648
    %v246 = vxor.u32 %v78, 2147483648
    %v247 = vxor.u32 %v79, 2147483648
    %v248 = vxor.u32 %v80, 2147483648
    %v249 = vxor.u32 %v81, 2147483648
    %v250 = vxor.u32 %v82, 2147483648
    %v251 = vxor.u32 %v83, 2147483648
    %v252 = vxor.u32 %v84, 2147483648
    %v253 = vxor.u32 %v85, 2147483648
    %v254 = vxor.u32 %v86, 2147483648
    %v255 = vxor.u32 %v87, 2147483648
    %v256 = vxor.u32 %v88, 2147483648
    %v257 = vxor.u32 %v89, 2147483648
    %v258 = vxor.u32 %v90, 2147483648
    %v259 = vxor.u32 %v91, 2147483648
    %v260 = vxor.u32 %v92, 2147483648
    %v261 = vxor.u32 %v93, 2147483648
    %v262 = vxor.u32 %v94, 2147483648
    %v263 = vxor.u32 %v95, 2147483648
    %v264 = vxor.u32 %v96, 2147483648
    %v265 = vxor.u32 %v97, 2147483648
    %v266 = vxor.u32 %v98, 2147483648
    %v267 = vxor.u32 %v99, 2147483648
    %v268 = vxor.u32 %v100, 2147483648
    %v269 = vxor.u32 %v101, 2147483648
    %v270 = vxor.u32 %v102, 2147483648
    %v271 = vxor.u32 %v103, 2147483648
    %v272 = vxor.u32 %v104, 2147483648
    %v273 = vxor.u32 %v105, 2147483648
    %v274 = vxor.u32 %v106, 2147483648
    %v275 = vxor.u32 %v107, 2147483648
    %v276 = vxor.u32 %v108, 2147483648
    %v277 = vxor.u32 %v109, 2147483648
    %v278 = vxor.u32 %v110, 2147483648
    %v279 = vxor.u32 %v111, 2147483648
    %v280 = vxor.u32 %v112, 2147483648
    %v281 = vxor.u32 %v113, 2147483648
    %v282 = vxor.u32 %v114, 2147483648
    %v283 = vxor.u32 %v115, 2147483648
    %v284 = vxor.u32 %v116, 2147483648
    %v285 = vxor.u32 %v117, 2147483648
    %v286 = vxor.u32 %v118, 2147483648
    %v287 = vxor.u32 %v119, 2147483648
    %v288 = vxor.u32 %v120, 2147483648
    %v289 = vxor.u32 %v121, 2147483648
    %v290 = vxor.u32 %v122, 2147483648
    %v291 = vxor.u32 %v123, 2147483648
    %v292 = vxor.u32 %v124, 2147483648
    %v293 = vxor.u32 %v125, 2147483648
    %v294 = vxor.u32 %v126, 2147483648
    %v295 = vxor.u32 %v127, 2147483648
    %v296 = vxor.u32 %v128, 2147483648
    %v297 = vxor.u32 %v129, 2147483648
    %v298 = vxor.u32 %v130, 2147483648
    %v299 = vxor.u32 %v131, 2147483648
    %v300 = vxor.u32 %v132, 2147483648
    %v301 = vxor.u32 %v133, 2147483648
    %v302 = vxor.u32 %v134, 2147483648
    %v303 = vxor.u32 %v135, 2147483648
    %v304 = vxor.u32 %v136, 2147483648
    %v305 = vxor.u32 %v137, 2147483648
    %v306 = vxor.u32 %v138, 2147483648
    %v307 = vxor.u32 %v139, 2147483648
    %v308 = vxor.u32 %v140, 2147483648
    %v309 = vxor.u32 %v141, 2147483648
    %v310 = vxor.u32 %v142, 2147483648
    %v311 = vxor.u32 %v143, 2147483648
    %v312 = vxor.u32 %v144, 2147483648
    %v313 = vxor.u32 %v145, 2147483648
    %v314 = vxor.u32 %v146, 2147483648
    %v315 = vxor.u32 %v147, 2147483648
    %v316 = vxor.u32 %v148, 2147483648
    %v317 = vxor.u32 %v149, 2147483648
    %v318 = vxor.u32 %v150, 2147483648
    %v319 = vxor.u32 %v151, 2147483648
    %v320 = vxor.u32 %v152, 2147483648
    %v321 = vxor.u32 %v153, 2147483648
    %v322 = vxor.u32 %v154, 2147483648
    %v323 = vxor.u32 %v155, 2147483648
    %v324 = vxor.u32 %v156, 2147483648
    %v325 = vxor.u32 %v157, 2147483648
    %v326 = vxor.u32 %v158, 2147483648
    %v327 = vxor.u32 %v159, 2147483648
    %v328 = vxor.u32 %v160, 2147483648
    %v329 = vxor.u32 %v161, 2147483648
    %v330 = vxor.u32 %v162, 2147483648
    %v331 = vxor.u32 %v163, 2147483648
    %v332 = vxor.u32 %v164, 2147483648
    %v333 = vxor.u32 %v165, 2147483648
    %v334 = vxor.u32 %v166, 2147483648
    %v335 = vxor.u32 %v167, 2147483648
    %v336 = vxor.u32 %v168, 2147483648
    %v337 = vxor.u32 %v169, 2147483648
    %v338 = vxor.u32 %v170, 2147483648
    %v339 = vxor.u32 %v171, 2147483648
    %v340 = vxor.u32 %v172, 2147483648
    %v341 = vxor.u32 %v173, 2147483648
    %v342 = vxor.u32 %v174, 2147483648
    %v343 = vxor.u32 %v175, 2147483648
    %v344 = vxor.u32 %v176, 2147483648
    %v345 = vxor.u32 %v177, 2147483648
    %v346 = vxor.u32 %v178, 2147483648
    %v347 = vxor.u32 %v179, 2147483648
    %v348 = vxor.u32 %v180, 2147483648
    %v349 = vxor.u32 %v181, 2147483648
    %v350 = vxor.u32 %v182, 2147483648
    %v351 = vmul.f32 %v183, 1.442695
    %v352 = vpow.pop %v351
    %v353 = vmul.f32 %v184, 1.442695
    %v354 = vpow.pop %v353
    %v355 = vmul.f32 %v185, 1.442695
    %v356 = vpow.pop %v355
    %v357 = vmul.f32 %v186, 1.442695
    %v358 = vpow.pop %v357
    %v359 = vmul.f32 %v187, 1.442695
    %v360 = vpow.pop %v359
    %v361 = vmul.f32 %v188, 1.442695
    %v362 = vpow.pop %v361
    %v363 = vmul.f32 %v189, 1.442695
    %v364 = vpow.pop %v363
    %v365 = vmul.f32 %v190, 1.442695
    %v366 = vpow.pop %v365
    %v367 = vmul.f32 %v191, 1.442695
    %v368 = vpow.pop %v367
    %v369 = vmul.f32 %v192, 1.442695
    %v370 = vpow.pop %v369
    %v371 = vmul.f32 %v193, 1.442695
    %v372 = vpow.pop %v371
    %v373 = vmul.f32 %v194, 1.442695
    %v374 = vpow.pop %v373
    %v375 = vmul.f32 %v195, 1.442695
    %v376 = vpow.pop %v375
    %v377 = vmul.f32 %v196, 1.442695
    %v378 = vpow.pop %v377
    %v379 = vmul.f32 %v197, 1.442695
    %v380 = vpow.pop %v379
    %v381 = vmul.f32 %v198, 1.442695
    %v382 = vpow.pop %v381
    %v383 = vmul.f32 %v199, 1.442695
    %v384 = vpow.pop %v383
    %v385 = vmul.f32 %v200, 1.442695
    %v386 = vpow.pop %v385
    %v387 = vmul.f32 %v201, 1.442695
    %v388 = vpow.pop %v387
    %v389 = vmul.f32 %v202, 1.442695
    %v390 = vpow.pop %v389
    %v391 = vmul.f32 %v203, 1.442695
    %v392 = vpow.pop %v391
    %v393 = vmul.f32 %v204, 1.442695
    %v394 = vpow.pop %v393
    %v395 = vmul.f32 %v205, 1.442695
    %v396 = vpow.pop %v395
    %v397 = vmul.f32 %v206, 1.442695
    %v398 = vpow.pop %v397
    %v399 = vmul.f32 %v207, 1.442695
    %v400 = vpow.pop %v399
    %v401 = vmul.f32 %v208, 1.442695
    %v402 = vpow.pop %v401
    %v403 = vmul.f32 %v209, 1.442695
    %v404 = vpow.pop %v403
    %v405 = vmul.f32 %v210, 1.442695
    %v406 = vpow.pop %v405
    %v407 = vmul.f32 %v211, 1.442695
    %v408 = vpow.pop %v407
    %v409 = vmul.f32 %v212, 1.442695
    %v410 = vpow.pop %v409
    %v411 = vmul.f32 %v213, 1.442695
    %v412 = vpow.pop %v411
    %v413 = vmul.f32 %v214, 1.442695
    %v414 = vpow.pop %v413
    %v415 = vmul.f32 %v215, 1.442695
    %v416 = vpow.pop %v415
    %v417 = vmul.f32 %v216, 1.442695
    %v418 = vpow.pop %v417
    %v419 = vmul.f32 %v217, 1.442695
    %v420 = vpow.pop %v419
    %v421 = vmul.f32 %v218, 1.442695
    %v422 = vpow.pop %v421
    %v423 = vmul.f32 %v219, 1.442695
    %v424 = vpow.pop %v423
    %v425 = vmul.f32 %v220, 1.442695
    %v426 = vpow.pop %v425
    %v427 = vmul.f32 %v221, 1.442695
    %v428 = vpow.pop %v427
    %v429 = vmul.f32 %v222, 1.442695
    %v430 = vpow.pop %v429
    %v431 = vmul.f32 %v223, 1.442695
    %v432 = vpow.pop %v431
    %v433 = vmul.f32 %v224, 1.442695
    %v434 = vpow.pop %v433
    %v435 = vmul.f32 %v225, 1.442695
    %v436 = vpow.pop %v435
    %v437 = vmul.f32 %v226, 1.442695
    %v438 = vpow.pop %v437
    %v439 = vmul.f32 %v227, 1.442695
    %v440 = vpow.pop %v439
    %v441 = vmul.f32 %v228, 1.442695
    %v442 = vpow.pop %v441
    %v443 = vmul.f32 %v229, 1.442695
    %v444 = vpow.pop %v443
    %v445 = vmul.f32 %v230, 1.442695
    %v446 = vpow.pop %v445
    %v447 = vmul.f32 %v231, 1.442695
    %v448 = vpow.pop %v447
    %v449 = vmul.f32 %v232, 1.442695
    %v450 = vpow.pop %v449
    %v451 = vmul.f32 %v233, 1.442695
    %v452 = vpow.pop %v451
    %v453 = vmul.f32 %v234, 1.442695
    %v454 = vpow.pop %v453
    %v455 = vmul.f32 %v235, 1.442695
    %v456 = vpow.pop %v455
    %v457 = vmul.f32 %v236, 1.442695
    %v458 = vpow.pop %v457
    %v459 = vmul.f32 %v237, 1.442695
    %v460 = vpow.pop %v459
    %v461 = vmul.f32 %v238, 1.442695
    %v462 = vpow.pop %v461
    %v463 = vmul.f32 %v239, 1.442695
    %v464 = vpow.pop %v463
    %v465 = vmul.f32 %v240, 1.442695
    %v466 = vpow.pop %v465
    %v467 = vmul.f32 %v241, 1.442695
    %v468 = vpow.pop %v467
    %v469 = vmul.f32 %v242, 1.442695
    %v470 = vpow.pop %v469
    %v471 = vmul.f32 %v243, 1.442695
    %v472 = vpow.pop %v471
    %v473 = vmul.f32 %v244, 1.442695
    %v474 = vpow.pop %v473
    %v475 = vmul.f32 %v245, 1.442695
    %v476 = vpow.pop %v475
    %v477 = vmul.f32 %v246, 1.442695
    %v478 = vpow.pop %v477
    %v479 = vmul.f32 %v247, 1.442695
    %v480 = vpow.pop %v479
    %v481 = vmul.f32 %v248, 1.442695
    %v482 = vpow.pop %v481
    %v483 = vmul.f32 %v249, 1.442695
    %v484 = vpow.pop %v483
    %v485 = vmul.f32 %v250, 1.442695
    %v486 = vpow.pop %v485
    %v487 = vmul.f32 %v251, 1.442695
    %v488 = vpow.pop %v487
    %v489 = vmul.f32 %v252, 1.442695
    %v490 = vpow.pop %v489
    %v491 = vmul.f32 %v253, 1.442695
    %v492 = vpow.pop %v491
    %v493 = vmul.f32 %v254, 1.442695
    %v494 = vpow.pop %v493
    %v495 = vmul.f32 %v255, 1.442695
    %v496 = vpow.pop %v495
    %v497 = vmul.f32 %v256, 1.442695
    %v498 = vpow.pop %v497
    %v499 = vmul.f32 %v257, 1.442695
    %v500 = vpow.pop %v499
    %v501 = vmul.f32 %v258, 1.442695
    %v502 = vpow.pop %v501
    %v503 = vmul.f32 %v259, 1.442695
    %v504 = vpow.pop %v503
    %v505 = vmul.f32 %v260, 1.442695
    %v506 = vpow.pop %v505
    %v507 = vmul.f32 %v261, 1.442695
    %v508 = vpow.pop %v507
    %v509 = vmul.f32 %v262, 1.442695
    %v510 = vpow.pop %v509
    %v511 = vmul.f32 %v263, 1.442695
    %v512 = vpow.pop %v511
    %v513 = vmul.f32 %v264, 1.442695
    %v514 = vpow.pop %v513
    %v515 = vmul.f32 %v265, 1.442695
    %v516 = vpow.pop %v515
    %v517 = vmul.f32 %v266, 1.442695
    %v518 = vpow.pop %v517
    %v519 = vmul.f32 %v267, 1.442695
    %v520 = vpow.pop %v519
    %v521 = vmul.f32 %v268, 1.442695
    %v522 = vpow.pop %v521
    %v523 = vmul.f32 %v269, 1.442695
    %v524 = vpow.pop %v523
    %v525 = vmul.f32 %v270, 1.442695
    %v526 = vpow.pop %v525
    %v527 = vmul.f32 %v271, 1.442695
    %v528 = vpow.pop %v527
    %v529 = vmul.f32 %v272, 1.442695
    %v530 = vpow.pop %v529
    %v531 = vmul.f32 %v273, 1.442695
    %v532 = vpow.pop %v531
    %v533 = vmul.f32 %v274, 1.442695
    %v534 = vpow.pop %v533
    %v535 = vmul.f32 %v275, 1.442695
    %v536 = vpow.pop %v535
    %v537 = vmul.f32 %v276, 1.442695
    %v538 = vpow.pop %v537
    %v539 = vmul.f32 %v277, 1.442695
    %v540 = vpow.pop %v539
    %v541 = vmul.f32 %v278, 1.442695
    %v542 = vpow.pop %v541
    %v543 = vmul.f32 %v279, 1.442695
    %v544 = vpow.pop %v543
    %v545 = vmul.f32 %v280, 1.442695
    %v546 = vpow.pop %v545
    %v547 = vmul.f32 %v281, 1.442695
    %v548 = vpow.pop %v547
    %v549 = vmul.f32 %v282, 1.442695
    %v550 = vpow.pop %v549
    %v551 = vmul.f32 %v283, 1.442695
    %v552 = vpow.pop %v551
    %v553 = vmul.f32 %v284, 1.442695
    %v554 = vpow.pop %v553
    %v555 = vmul.f32 %v285, 1.442695
    %v556 = vpow.pop %v555
    %v557 = vmul.f32 %v286, 1.442695
    %v558 = vpow.pop %v557
    %v559 = vmul.f32 %v287, 1.442695
    %v560 = vpow.pop %v559
    %v561 = vmul.f32 %v288, 1.442695
    %v562 = vpow.pop %v561
    %v563 = vmul.f32 %v289, 1.442695
    %v564 = vpow.pop %v563
    %v565 = vmul.f32 %v290, 1.442695
    %v566 = vpow.pop %v565
    %v567 = vmul.f32 %v291, 1.442695
    %v568 = vpow.pop %v567
    %v569 = vmul.f32 %v292, 1.442695
    %v570 = vpow.pop %v569
    %v571 = vmul.f32 %v293, 1.442695
    %v572 = vpow.pop %v571
    %v573 = vmul.f32 %v294, 1.442695
    %v574 = vpow.pop %v573
    %v575 = vmul.f32 %v295, 1.442695
    %v576 = vpow.pop %v575
    %v577 = vmul.f32 %v296, 1.442695
    %v578 = vpow.pop %v577
    %v579 = vmul.f32 %v297, 1.442695
    %v580 = vpow.pop %v579
    %v581 = vmul.f32 %v298, 1.442695
    %v582 = vpow.pop %v581
    %v583 = vmul.f32 %v299, 1.442695
    %v584 = vpow.pop %v583
    %v585 = vmul.f32 %v300, 1.442695
    %v586 = vpow.pop %v585
    %v587 = vmul.f32 %v301, 1.442695
    %v588 = vpow.pop %v587
    %v589 = vmul.f32 %v302, 1.442695
    %v590 = vpow.pop %v589
    %v591 = vmul.f32 %v303, 1.442695
    %v592 = vpow.pop %v591
    %v593 = vmul.f32 %v304, 1.442695
    %v594 = vpow.pop %v593
    %v595 = vmul.f32 %v305, 1.442695
    %v596 = vpow.pop %v595
    %v597 = vmul.f32 %v306, 1.442695
    %v598 = vpow.pop %v597
    %v599 = vmul.f32 %v307, 1.442695
    %v600 = vpow.pop %v599
    %v601 = vmul.f32 %v308, 1.442695
    %v602 = vpow.pop %v601
    %v603 = vmul.f32 %v309, 1.442695
    %v604 = vpow.pop %v603
    %v605 = vmul.f32 %v310, 1.442695
    %v606 = vpow.pop %v605
    %v607 = vmul.f32 %v311, 1.442695
    %v608 = vpow.pop %v607
    %v609 = vmul.f32 %v312, 1.442695
    %v610 = vpow.pop %v609
    %v611 = vmul.f32 %v313, 1.442695
    %v612 = vpow.pop %v611
    %v613 = vmul.f32 %v314, 1.442695
    %v614 = vpow.pop %v613
    %v615 = vmul.f32 %v315, 1.442695
    %v616 = vpow.pop %v615
    %v617 = vmul.f32 %v316, 1.442695
    %v618 = vpow.pop %v617
    %v619 = vmul.f32 %v317, 1.442695
    %v620 = vpow.pop %v619
    %v621 = vmul.f32 %v318, 1.442695
    %v622 = vpow.pop %v621
    %v623 = vmul.f32 %v319, 1.442695
    %v624 = vpow.pop %v623
    %v625 = vmul.f32 %v320, 1.442695
    %v626 = vpow.pop %v625
    %v627 = vmul.f32 %v321, 1.442695
    %v628 = vpow.pop %v627
    %v629 = vmul.f32 %v322, 1.442695
    %v630 = vpow.pop %v629
    %v631 = vmul.f32 %v323, 1.442695
    %v632 = vpow.pop %v631
    %v633 = vmul.f32 %v324, 1.442695
    %v634 = vpow.pop %v633
    %v635 = vmul.f32 %v325, 1.442695
    %v636 = vpow.pop %v635
    %v637 = vmul.f32 %v326, 1.442695
    %v638 = vpow.pop %v637
    %v639 = vmul.f32 %v327, 1.442695
    %v640 = vpow.pop %v639
    %v641 = vmul.f32 %v328, 1.442695
    %v642 = vpow.pop %v641
    %v643 = vmul.f32 %v329, 1.442695
    %v644 = vpow.pop %v643
    %v645 = vmul.f32 %v330, 1.442695
    %v646 = vpow.pop %v645
    %v647 = vmul.f32 %v331, 1.442695
    %v648 = vpow.pop %v647
    %v649 = vmul.f32 %v332, 1.442695
    %v650 = vpow.pop %v649
    %v651 = vmul.f32 %v333, 1.442695
    %v652 = vpow.pop %v651
    %v653 = vmul.f32 %v334, 1.442695
    %v654 = vpow.pop %v653
    %v655 = vmul.f32 %v335, 1.442695
    %v656 = vpow.pop %v655
    %v657 = vmul.f32 %v336, 1.442695
    %v658 = vpow.pop %v657
    %v659 = vmul.f32 %v337, 1.442695
    %v660 = vpow.pop %v659
    %v661 = vmul.f32 %v338, 1.442695
    %v662 = vpow.pop %v661
    %v663 = vmul.f32 %v339, 1.442695
    %v664 = vpow.pop %v663
    %v665 = vmul.f32 %v340, 1.442695
    %v666 = vpow.pop %v665
    %v667 = vmul.f32 %v341, 1.442695
    %v668 = vpow.pop %v667
    %v669 = vmul.f32 %v342, 1.442695
    %v670 = vpow.pop %v669
    %v671 = vmul.f32 %v343, 1.442695
    %v672 = vpow.pop %v671
    %v673 = vmul.f32 %v344, 1.442695
    %v674 = vpow.pop %v673
    %v675 = vmul.f32 %v345, 1.442695
    %v676 = vpow.pop %v675
    %v677 = vmul.f32 %v346, 1.442695
    %v678 = vpow.pop %v677
    %v679 = vmul.f32 %v347, 1.442695
    %v680 = vpow.pop %v679
    %v681 = vmul.f32 %v348, 1.442695
    %v682 = vpow.pop %v681
    %v683 = vmul.f32 %v349, 1.442695
    %v684 = vpow.pop %v683
    %v685 = vmul.f32 %v350, 1.442695
    %v686 = vpow.pop %v685
    %v687 = vadd.f32 %v352, 1.0
    %v688 = vadd.f32 %v354, 1.0
    %v689 = vadd.f32 %v356, 1.0
    %v690 = vadd.f32 %v358, 1.0
    %v691 = vadd.f32 %v360, 1.0
    %v692 = vadd.f32 %v362, 1.0
    %v693 = vadd.f32 %v364, 1.0
    %v694 = vadd.f32 %v366, 1.0
    %v695 = vadd.f32 %v368, 1.0
    %v696 = vadd.f32 %v370, 1.0
    %v697 = vadd.f32 %v372, 1.0
    %v698 = vadd.f32 %v374, 1.0
    %v699 = vadd.f32 %v376, 1.0
    %v700 = vadd.f32 %v378, 1.0
    %v701 = vadd.f32 %v380, 1.0
    %v702 = vadd.f32 %v382, 1.0
    %v703 = vadd.f32 %v384, 1.0
    %v704 = vadd.f32 %v386, 1.0
    %v705 = vadd.f32 %v388, 1.0
    %v706 = vadd.f32 %v390, 1.0
    %v707 = vadd.f32 %v392, 1.0
    %v708 = vadd.f32 %v394, 1.0
    %v709 = vadd.f32 %v396, 1.0
    %v710 = vadd.f32 %v398, 1.0
    %v711 = vadd.f32 %v400, 1.0
    %v712 = vadd.f32 %v402, 1.0
    %v713 = vadd.f32 %v404, 1.0
    %v714 = vadd.f32 %v406, 1.0
    %v715 = vadd.f32 %v408, 1.0
    %v716 = vadd.f32 %v410, 1.0
    %v717 = vadd.f32 %v412, 1.0
    %v718 = vadd.f32 %v414, 1.0
    %v719 = vadd.f32 %v416, 1.0
    %v720 = vadd.f32 %v418, 1.0
    %v721 = vadd.f32 %v420, 1.0
    %v722 = vadd.f32 %v422, 1.0
    %v723 = vadd.f32 %v424, 1.0
    %v724 = vadd.f32 %v426, 1.0
    %v725 = vadd.f32 %v428, 1.0
    %v726 = vadd.f32 %v430, 1.0
    %v727 = vadd.f32 %v432, 1.0
    %v728 = vadd.f32 %v434, 1.0
    %v729 = vadd.f32 %v436, 1.0
    %v730 = vadd.f32 %v438, 1.0
    %v731 = vadd.f32 %v440, 1.0
    %v732 = vadd.f32 %v442, 1.0
    %v733 = vadd.f32 %v444, 1.0
    %v734 = vadd.f32 %v446, 1.0
    %v735 = vadd.f32 %v448, 1.0
    %v736 = vadd.f32 %v450, 1.0
    %v737 = vadd.f32 %v452, 1.0
    %v738 = vadd.f32 %v454, 1.0
    %v739 = vadd.f32 %v456, 1.0
    %v740 = vadd.f32 %v458, 1.0
    %v741 = vadd.f32 %v460, 1.0
    %v742 = vadd.f32 %v462, 1.0
    %v743 = vadd.f32 %v464, 1.0
    %v744 = vadd.f32 %v466, 1.0
    %v745 = vadd.f32 %v468, 1.0
    %v746 = vadd.f32 %v470, 1.0
    %v747 = vadd.f32 %v472, 1.0
    %v748 = vadd.f32 %v474, 1.0
    %v749 = vadd.f32 %v476, 1.0
    %v750 = vadd.f32 %v478, 1.0
    %v751 = vadd.f32 %v480, 1.0
    %v752 = vadd.f32 %v482, 1.0
    %v753 = vadd.f32 %v484, 1.0
    %v754 = vadd.f32 %v486, 1.0
    %v755 = vadd.f32 %v488, 1.0
    %v756 = vadd.f32 %v490, 1.0
    %v757 = vadd.f32 %v492, 1.0
    %v758 = vadd.f32 %v494, 1.0
    %v759 = vadd.f32 %v496, 1.0
    %v760 = vadd.f32 %v498, 1.0
    %v761 = vadd.f32 %v500, 1.0
    %v762 = vadd.f32 %v502, 1.0
    %v763 = vadd.f32 %v504, 1.0
    %v764 = vadd.f32 %v506, 1.0
    %v765 = vadd.f32 %v508, 1.0
    %v766 = vadd.f32 %v510, 1.0
    %v767 = vadd.f32 %v512, 1.0
    %v768 = vadd.f32 %v514, 1.0
    %v769 = vadd.f32 %v516, 1.0
    %v770 = vadd.f32 %v518, 1.0
    %v771 = vadd.f32 %v520, 1.0
    %v772 = vadd.f32 %v522, 1.0
    %v773 = vadd.f32 %v524, 1.0
    %v774 = vadd.f32 %v526, 1.0
    %v775 = vadd.f32 %v528, 1.0
    %v776 = vadd.f32 %v530, 1.0
    %v777 = vadd.f32 %v532, 1.0
    %v778 = vadd.f32 %v534, 1.0
    %v779 = vadd.f32 %v536, 1.0
    %v780 = vadd.f32 %v538, 1.0
    %v781 = vadd.f32 %v540, 1.0
    %v782 = vadd.f32 %v542, 1.0
    %v783 = vadd.f32 %v544, 1.0
    %v784 = vadd.f32 %v546, 1.0
    %v785 = vadd.f32 %v548, 1.0
    %v786 = vadd.f32 %v550, 1.0
    %v787 = vadd.f32 %v552, 1.0
    %v788 = vadd.f32 %v554, 1.0
    %v789 = vadd.f32 %v556, 1.0
    %v790 = vadd.f32 %v558, 1.0
    %v791 = vadd.f32 %v560, 1.0
    %v792 = vadd.f32 %v562, 1.0
    %v793 = vadd.f32 %v564, 1.0
    %v794 = vadd.f32 %v566, 1.0
    %v795 = vadd.f32 %v568, 1.0
    %v796 = vadd.f32 %v570, 1.0
    %v797 = vadd.f32 %v572, 1.0
    %v798 = vadd.f32 %v574, 1.0
    %v799 = vadd.f32 %v576, 1.0
    %v800 = vadd.f32 %v578, 1.0
    %v801 = vadd.f32 %v580, 1.0
    %v802 = vadd.f32 %v582, 1.0
    %v803 = vadd.f32 %v584, 1.0
    %v804 = vadd.f32 %v586, 1.0
    %v805 = vadd.f32 %v588, 1.0
    %v806 = vadd.f32 %v590, 1.0
    %v807 = vadd.f32 %v592, 1.0
    %v808 = vadd.f32 %v594, 1.0
    %v809 = vadd.f32 %v596, 1.0
    %v810 = vadd.f32 %v598, 1.0
    %v811 = vadd.f32 %v600, 1.0
    %v812 = vadd.f32 %v602, 1.0
    %v813 = vadd.f32 %v604, 1.0
    %v814 = vadd.f32 %v606, 1.0
    %v815 = vadd.f32 %v608, 1.0
    %v816 = vadd.f32 %v610, 1.0
    %v817 = vadd.f32 %v612, 1.0
    %v818 = vadd.f32 %v614, 1.0
    %v819 = vadd.f32 %v616, 1.0
    %v820 = vadd.f32 %v618, 1.0
    %v821 = vadd.f32 %v620, 1.0
    %v822 = vadd.f32 %v622, 1.0
    %v823 = vadd.f32 %v624, 1.0
    %v824 = vadd.f32 %v626, 1.0
    %v825 = vadd.f32 %v628, 1.0
    %v826 = vadd.f32 %v630, 1.0
    %v827 = vadd.f32 %v632, 1.0
    %v828 = vadd.f32 %v634, 1.0
    %v829 = vadd.f32 %v636, 1.0
    %v830 = vadd.f32 %v638, 1.0
    %v831 = vadd.f32 %v640, 1.0
    %v832 = vadd.f32 %v642, 1.0
    %v833 = vadd.f32 %v644, 1.0
    %v834 = vadd.f32 %v646, 1.0
    %v835 = vadd.f32 %v648, 1.0
    %v836 = vadd.f32 %v650, 1.0
    %v837 = vadd.f32 %v652, 1.0
    %v838 = vadd.f32 %v654, 1.0
    %v839 = vadd.f32 %v656, 1.0
    %v840 = vadd.f32 %v658, 1.0
    %v841 = vadd.f32 %v660, 1.0
    %v842 = vadd.f32 %v662, 1.0
    %v843 = vadd.f32 %v664, 1.0
    %v844 = vadd.f32 %v666, 1.0
    %v845 = vadd.f32 %v668, 1.0
    %v846 = vadd.f32 %v670, 1.0
    %v847 = vadd.f32 %v672, 1.0
    %v848 = vadd.f32 %v674, 1.0
    %v849 = vadd.f32 %v676, 1.0
    %v850 = vadd.f32 %v678, 1.0
    %v851 = vadd.f32 %v680, 1.0
    %v852 = vadd.f32 %v682, 1.0
    %v853 = vadd.f32 %v684, 1.0
    %v854 = vadd.f32 %v686, 1.0
    %v855 = vrcp.pop %v687
    %v856 = vmul.f32 1.0, %v855
    %v857 = vrcp.pop %v688
    %v858 = vmul.f32 1.0, %v857
    %v859 = vrcp.pop %v689
    %v860 = vmul.f32 1.0, %v859
    %v861 = vrcp.pop %v690
    %v862 = vmul.f32 1.0, %v861
    %v863 = vrcp.pop %v691
    %v864 = vmul.f32 1.0, %v863
    %v865 = vrcp.pop %v692
    %v866 = vmul.f32 1.0, %v865
    %v867 = vrcp.pop %v693
    %v868 = vmul.f32 1.0, %v867
    %v869 = vrcp.pop %v694
    %v870 = vmul.f32 1.0, %v869
    %v871 = vrcp.pop %v695
    %v872 = vmul.f32 1.0, %v871
    %v873 = vrcp.pop %v696
    %v874 = vmul.f32 1.0, %v873
    %v875 = vrcp.pop %v697
    %v876 = vmul.f32 1.0, %v875
    %v877 = vrcp.pop %v698
    %v878 = vmul.f32 1.0, %v877
    %v879 = vrcp.pop %v699
    %v880 = vmul.f32 1.0, %v879
    %v881 = vrcp.pop %v700
    %v882 = vmul.f32 1.0, %v881
    %v883 = vrcp.pop %v701
    %v884 = vmul.f32 1.0, %v883
    %v885 = vrcp.pop %v702
    %v886 = vmul.f32 1.0, %v885
    %v887 = vrcp.pop %v703
    %v888 = vmul.f32 1.0, %v887
    %v889 = vrcp.pop %v704
    %v890 = vmul.f32 1.0, %v889
    %v891 = vrcp.pop %v705
    %v892 = vmul.f32 1.0, %v891
    %v893 = vrcp.pop %v706
    %v894 = vmul.f32 1.0, %v893
    %v895 = vrcp.pop %v707
    %v896 = vmul.f32 1.0, %v895
    %v897 = vrcp.pop %v708
    %v898 = vmul.f32 1.0, %v897
    %v899 = vrcp.pop %v709
    %v900 = vmul.f32 1.0, %v899
    %v901 = vrcp.pop %v710
    %v902 = vmul.f32 1.0, %v901
    %v903 = vrcp.pop %v711
    %v904 = vmul.f32 1.0, %v903
    %v905 = vrcp.pop %v712
    %v906 = vmul.f32 1.0, %v905
    %v907 = vrcp.pop %v713
    %v908 = vmul.f32 1.0, %v907
    %v909 = vrcp.pop %v714
    %v910 = vmul.f32 1.0, %v909
    %v911 = vrcp.pop %v715
    %v912 = vmul.f32 1.0, %v911
    %v913 = vrcp.pop %v716
    %v914 = vmul.f32 1.0, %v913
    %v915 = vrcp.pop %v717
    %v916 = vmul.f32 1.0, %v915
    %v917 = vrcp.pop %v718
    %v918 = vmul.f32 1.0, %v917
    %v919 = vrcp.pop %v719
    %v920 = vmul.f32 1.0, %v919
    %v921 = vrcp.pop %v720
    %v922 = vmul.f32 1.0, %v921
    %v923 = vrcp.pop %v721
    %v924 = vmul.f32 1.0, %v923
    %v925 = vrcp.pop %v722
    %v926 = vmul.f32 1.0, %v925
    %v927 = vrcp.pop %v723
    %v928 = vmul.f32 1.0, %v927
    %v929 = vrcp.pop %v724
    %v930 = vmul.f32 1.0, %v929
    %v931 = vrcp.pop %v725
    %v932 = vmul.f32 1.0, %v931
    %v933 = vrcp.pop %v726
    %v934 = vmul.f32 1.0, %v933
    %v935 = vrcp.pop %v727
    %v936 = vmul.f32 1.0, %v935
    %v937 = vrcp.pop %v728
    %v938 = vmul.f32 1.0, %v937
    %v939 = vrcp.pop %v729
    %v940 = vmul.f32 1.0, %v939
    %v941 = vrcp.pop %v730
    %v942 = vmul.f32 1.0, %v941
    %v943 = vrcp.pop %v731
    %v944 = vmul.f32 1.0, %v943
    %v945 = vrcp.pop %v732
    %v946 = vmul.f32 1.0, %v945
    %v947 = vrcp.pop %v733
    %v948 = vmul.f32 1.0, %v947
    %v949 = vrcp.pop %v734
    %v950 = vmul.f32 1.0, %v949
    %v951 = vrcp.pop %v735
    %v952 = vmul.f32 1.0, %v951
    %v953 = vrcp.pop %v736
    %v954 = vmul.f32 1.0, %v953
    %v955 = vrcp.pop %v737
    %v956 = vmul.f32 1.0, %v955
    %v957 = vrcp.pop %v738
    %v958 = vmul.f32 1.0, %v957
    %v959 = vrcp.pop %v739
    %v960 = vmul.f32 1.0, %v959
    %v961 = vrcp.pop %v740
    %v962 = vmul.f32 1.0, %v961
    %v963 = vrcp.pop %v741
    %v964 = vmul.f32 1.0, %v963
    %v965 = vrcp.pop %v742
    %v966 = vmul.f32 1.0, %v965
    %v967 = vrcp.pop %v743
    %v968 = vmul.f32 1.0, %v967
    %v969 = vrcp.pop %v744
    %v970 = vmul.f32 1.0, %v969
    %v971 = vrcp.pop %v745
    %v972 = vmul.f32 1.0, %v971
    %v973 = vrcp.pop %v746
    %v974 = vmul.f32 1.0, %v973
    %v975 = vrcp.pop %v747
    %v976 = vmul.f32 1.0, %v975
    %v977 = vrcp.pop %v748
    %v978 = vmul.f32 1.0, %v977
    %v979 = vrcp.pop %v749
    %v980 = vmul.f32 1.0, %v979
    %v981 = vrcp.pop %v750
    %v982 = vmul.f32 1.0, %v981
    %v983 = vrcp.pop %v751
    %v984 = vmul.f32 1.0, %v983
    %v985 = vrcp.pop %v752
    %v986 = vmul.f32 1.0, %v985
    %v987 = vrcp.pop %v753
    %v988 = vmul.f32 1.0, %v987
    %v989 = vrcp.pop %v754
    %v990 = vmul.f32 1.0, %v989
    %v991 = vrcp.pop %v755
    %v992 = vmul.f32 1.0, %v991
    %v993 = vrcp.pop %v756
    %v994 = vmul.f32 1.0, %v993
    %v995 = vrcp.pop %v757
    %v996 = vmul.f32 1.0, %v995
    %v997 = vrcp.pop %v758
    %v998 = vmul.f32 1.0, %v997
    %v999 = vrcp.pop %v759
    %v1000 = vmul.f32 1.0, %v999
    %v1001 = vrcp.pop %v760
    %v1002 = vmul.f32 1.0, %v1001
    %v1003 = vrcp.pop %v761
    %v1004 = vmul.f32 1.0, %v1003
    %v1005 = vrcp.pop %v762
    %v1006 = vmul.f32 1.0, %v1005
    %v1007 = vrcp.pop %v763
    %v1008 = vmul.f32 1.0, %v1007
    %v1009 = vrcp.pop %v764
    %v1010 = vmul.f32 1.0, %v1009
    %v1011 = vrcp.pop %v765
    %v1012 = vmul.f32 1.0, %v1011
    %v1013 = vrcp.pop %v766
    %v1014 = vmul.f32 1.0, %v1013
    %v1015 = vrcp.pop %v767
    %v1016 = vmul.f32 1.0, %v1015
    %v1017 = vrcp.pop %v768
    %v1018 = vmul.f32 1.0, %v1017
    %v1019 = vrcp.pop %v769
    %v1020 = vmul.f32 1.0, %v1019
    %v1021 = vrcp.pop %v770
    %v1022 = vmul.f32 1.0, %v1021
    %v1023 = vrcp.pop %v771
    %v1024 = vmul.f32 1.0, %v1023
    %v1025 = vrcp.pop %v772
    %v1026 = vmul.f32 1.0, %v1025
    %v1027 = vrcp.pop %v773
    %v1028 = vmul.f32 1.0, %v1027
    %v1029 = vrcp.pop %v774
    %v1030 = vmul.f32 1.0, %v1029
    %v1031 = vrcp.pop %v775
    %v1032 = vmul.f32 1.0, %v1031
    %v1033 = vrcp.pop %v776
    %v1034 = vmul.f32 1.0, %v1033
    %v1035 = vrcp.pop %v777
    %v1036 = vmul.f32 1.0, %v1035
    %v1037 = vrcp.pop %v778
    %v1038 = vmul.f32 1.0, %v1037
    %v1039 = vrcp.pop %v779
    %v1040 = vmul.f32 1.0, %v1039
    %v1041 = vrcp.pop %v780
    %v1042 = vmul.f32 1.0, %v1041
    %v1043 = vrcp.pop %v781
    %v1044 = vmul.f32 1.0, %v1043
    %v1045 = vrcp.pop %v782
    %v1046 = vmul.f32 1.0, %v1045
    %v1047 = vrcp.pop %v783
    %v1048 = vmul.f32 1.0, %v1047
    %v1049 = vrcp.pop %v784
    %v1050 = vmul.f32 1.0, %v1049
    %v1051 = vrcp.pop %v785
    %v1052 = vmul.f32 1.0, %v1051
    %v1053 = vrcp.pop %v786
    %v1054 = vmul.f32 1.0, %v1053
    %v1055 = vrcp.pop %v787
    %v1056 = vmul.f32 1.0, %v1055
    %v1057 = vrcp.pop %v788
    %v1058 = vmul.f32 1.0, %v1057
    %v1059 = vrcp.pop %v789
    %v1060 = vmul.f32 1.0, %v1059
    %v1061 = vrcp.pop %v790
    %v1062 = vmul.f32 1.0, %v1061
    %v1063 = vrcp.pop %v791
    %v1064 = vmul.f32 1.0, %v1063
    %v1065 = vrcp.pop %v792
    %v1066 = vmul.f32 1.0, %v1065
    %v1067 = vrcp.pop %v793
    %v1068 = vmul.f32 1.0, %v1067
    %v1069 = vrcp.pop %v794
    %v1070 = vmul.f32 1.0, %v1069
    %v1071 = vrcp.pop %v795
    %v1072 = vmul.f32 1.0, %v1071
    %v1073 = vrcp.pop %v796
    %v1074 = vmul.f32 1.0, %v1073
    %v1075 = vrcp.pop %v797
    %v1076 = vmul.f32 1.0, %v1075
    %v1077 = vrcp.pop %v798
    %v1078 = vmul.f32 1.0, %v1077
    %v1079 = vrcp.pop %v799
    %v1080 = vmul.f32 1.0, %v1079
    %v1081 = vrcp.pop %v800
    %v1082 = vmul.f32 1.0, %v1081
    %v1083 = vrcp.pop %v801
    %v1084 = vmul.f32 1.0, %v1083
    %v1085 = vrcp.pop %v802
    %v1086 = vmul.f32 1.0, %v1085
    %v1087 = vrcp.pop %v803
    %v1088 = vmul.f32 1.0, %v1087
    %v1089 = vrcp.pop %v804
    %v1090 = vmul.f32 1.0, %v1089
    %v1091 = vrcp.pop %v805
    %v1092 = vmul.f32 1.0, %v1091
    %v1093 = vrcp.pop %v806
    %v1094 = vmul.f32 1.0, %v1093
    %v1095 = vrcp.pop %v807
    %v1096 = vmul.f32 1.0, %v1095
    %v1097 = vrcp.pop %v808
    %v1098 = vmul.f32 1.0, %v1097
    %v1099 = vrcp.pop %v809
    %v1100 = vmul.f32 1.0, %v1099
    %v1101 = vrcp.pop %v810
    %v1102 = vmul.f32 1.0, %v1101
    %v1103 = vrcp.pop %v811
    %v1104 = vmul.f32 1.0, %v1103
    %v1105 = vrcp.pop %v812
    %v1106 = vmul.f32 1.0, %v1105
    %v1107 = vrcp.pop %v813
    %v1108 = vmul.f32 1.0, %v1107
    %v1109 = vrcp.pop %v814
    %v1110 = vmul.f32 1.0, %v1109
    %v1111 = vrcp.pop %v815
    %v1112 = vmul.f32 1.0, %v1111
    %v1113 = vrcp.pop %v816
    %v1114 = vmul.f32 1.0, %v1113
    %v1115 = vrcp.pop %v817
    %v1116 = vmul.f32 1.0, %v1115
    %v1117 = vrcp.pop %v818
    %v1118 = vmul.f32 1.0, %v1117
    %v1119 = vrcp.pop %v819
    %v1120 = vmul.f32 1.0, %v1119
    %v1121 = vrcp.pop %v820
    %v1122 = vmul.f32 1.0, %v1121
    %v1123 = vrcp.pop %v821
    %v1124 = vmul.f32 1.0, %v1123
    %v1125 = vrcp.pop %v822
    %v1126 = vmul.f32 1.0, %v1125
    %v1127 = vrcp.pop %v823
    %v1128 = vmul.f32 1.0, %v1127
    %v1129 = vrcp.pop %v824
    %v1130 = vmul.f32 1.0, %v1129
    %v1131 = vrcp.pop %v825
    %v1132 = vmul.f32 1.0, %v1131
    %v1133 = vrcp.pop %v826
    %v1134 = vmul.f32 1.0, %v1133
    %v1135 = vrcp.pop %v827
    %v1136 = vmul.f32 1.0, %v1135
    %v1137 = vrcp.pop %v828
    %v1138 = vmul.f32 1.0, %v1137
    %v1139 = vrcp.pop %v829
    %v1140 = vmul.f32 1.0, %v1139
    %v1141 = vrcp.pop %v830
    %v1142 = vmul.f32 1.0, %v1141
    %v1143 = vrcp.pop %v831
    %v1144 = vmul.f32 1.0, %v1143
    %v1145 = vrcp.pop %v832
    %v1146 = vmul.f32 1.0, %v1145
    %v1147 = vrcp.pop %v833
    %v1148 = vmul.f32 1.0, %v1147
    %v1149 = vrcp.pop %v834
    %v1150 = vmul.f32 1.0, %v1149
    %v1151 = vrcp.pop %v835
    %v1152 = vmul.f32 1.0, %v1151
    %v1153 = vrcp.pop %v836
    %v1154 = vmul.f32 1.0, %v1153
    %v1155 = vrcp.pop %v837
    %v1156 = vmul.f32 1.0, %v1155
    %v1157 = vrcp.pop %v838
    %v1158 = vmul.f32 1.0, %v1157
    %v1159 = vrcp.pop %v839
    %v1160 = vmul.f32 1.0, %v1159
    %v1161 = vrcp.pop %v840
    %v1162 = vmul.f32 1.0, %v1161
    %v1163 = vrcp.pop %v841
    %v1164 = vmul.f32 1.0, %v1163
    %v1165 = vrcp.pop %v842
    %v1166 = vmul.f32 1.0, %v1165
    %v1167 = vrcp.pop %v843
    %v1168 = vmul.f32 1.0, %v1167
    %v1169 = vrcp.pop %v844
    %v1170 = vmul.f32 1.0, %v1169
    %v1171 = vrcp.pop %v845
    %v1172 = vmul.f32 1.0, %v1171
    %v1173 = vrcp.pop %v846
    %v1174 = vmul.f32 1.0, %v1173
    %v1175 = vrcp.pop %v847
    %v1176 = vmul.f32 1.0, %v1175
    %v1177 = vrcp.pop %v848
    %v1178 = vmul.f32 1.0, %v1177
    %v1179 = vrcp.pop %v849
    %v1180 = vmul.f32 1.0, %v1179
    %v1181 = vrcp.pop %v850
    %v1182 = vmul.f32 1.0, %v1181
    %v1183 = vrcp.pop %v851
    %v1184 = vmul.f32 1.0, %v1183
    %v1185 = vrcp.pop %v852
    %v1186 = vmul.f32 1.0, %v1185
    %v1187 = vrcp.pop %v853
    %v1188 = vmul.f32 1.0, %v1187
    %v1189 = vrcp.pop %v854
    %v1190 = vmul.f32 1.0, %v1189
    %vm1191 = vcmask 7168
    %1192 = vst.msk [vmem:[#allocation2] sm:$0xff] %vm1191, %v856
    %1193 = vst.msk [vmem:[#allocation2 + $0x8] sm:$0xff] %vm1191, %v858
    %1194 = vst.msk [vmem:[#allocation2 + $0x10] sm:$0xff] %vm1191, %v860
    %1195 = vst.msk [vmem:[#allocation2 + $0x18] sm:$0xff] %vm1191, %v862
    %1196 = vst.msk [vmem:[#allocation2 + $0x20] sm:$0xff] %vm1191, %v864
    %1197 = vst.msk [vmem:[#allocation2 + $0x28] sm:$0xff] %vm1191, %v866
    %1198 = vst.msk [vmem:[#allocation2 + $0x30] sm:$0xff] %vm1191, %v868
    %1199 = vst.msk [vmem:[#allocation2 + $0x38] sm:$0xff] %vm1191, %v870
    %1200 = vst.msk [vmem:[#allocation2 + $0x40] sm:$0xff] %vm1191, %v872
    %1201 = vst.msk [vmem:[#allocation2 + $0x48] sm:$0xff] %vm1191, %v874
    %1202 = vst.msk [vmem:[#allocation2 + $0x50] sm:$0xff] %vm1191, %v876
    %1203 = vst.msk [vmem:[#allocation2 + $0x58] sm:$0xff] %vm1191, %v878
    %1204 = vst.msk [vmem:[#allocation2 + $0x60] sm:$0xff] %vm1191, %v880
    %1205 = vst.msk [vmem:[#allocation2 + $0x68] sm:$0xff] %vm1191, %v882
    %1206 = vst.msk [vmem:[#allocation2 + $0x70] sm:$0xff] %vm1191, %v884
    %1207 = vst.msk [vmem:[#allocation2 + $0x78] sm:$0xff] %vm1191, %v886
    %1208 = vst.msk [vmem:[#allocation2 + $0x80] sm:$0xff] %vm1191, %v888
    %1209 = vst.msk [vmem:[#allocation2 + $0x88] sm:$0xff] %vm1191, %v890
    %1210 = vst.msk [vmem:[#allocation2 + $0x90] sm:$0xff] %vm1191, %v892
    %1211 = vst.msk [vmem:[#allocation2 + $0x98] sm:$0xff] %vm1191, %v894
    %1212 = vst.msk [vmem:[#allocation2 + $0xa0] sm:$0xff] %vm1191, %v896
    %1213 = vst.msk [vmem:[#allocation2 + $0xa8] sm:$0xff] %vm1191, %v898
    %1214 = vst.msk [vmem:[#allocation2 + $0xb0] sm:$0xff] %vm1191, %v900
    %1215 = vst.msk [vmem:[#allocation2 + $0xb8] sm:$0xff] %vm1191, %v902
    %1216 = vst.msk [vmem:[#allocation2 + $0xc0] sm:$0xff] %vm1191, %v904
    %1217 = vst.msk [vmem:[#allocation2 + $0xc8] sm:$0xff] %vm1191, %v906
    %1218 = vst.msk [vmem:[#allocation2 + $0xd0] sm:$0xff] %vm1191, %v908
    %1219 = vst.msk [vmem:[#allocation2 + $0xd8] sm:$0xff] %vm1191, %v910
    %1220 = vst.msk [vmem:[#allocation2 + $0xe0] sm:$0xff] %vm1191, %v912
    %1221 = vst.msk [vmem:[#allocation2 + $0xe8] sm:$0xff] %vm1191, %v914
    %1222 = vst.msk [vmem:[#allocation2 + $0xf0] sm:$0xff] %vm1191, %v916
    %1223 = vst.msk [vmem:[#allocation2 + $0xf8] sm:$0xff] %vm1191, %v918
    %1224 = vst.msk [vmem:[#allocation2 + $0x100] sm:$0xff] %vm1191, %v920
    %1225 = vst.msk [vmem:[#allocation2 + $0x108] sm:$0xff] %vm1191, %v922
    %1226 = vst.msk [vmem:[#allocation2 + $0x110] sm:$0xff] %vm1191, %v924
    %1227 = vst.msk [vmem:[#allocation2 + $0x118] sm:$0xff] %vm1191, %v926
    %1228 = vst.msk [vmem:[#allocation2 + $0x120] sm:$0xff] %vm1191, %v928
    %1229 = vst.msk [vmem:[#allocation2 + $0x128] sm:$0xff] %vm1191, %v930
    %1230 = vst.msk [vmem:[#allocation2 + $0x130] sm:$0xff] %vm1191, %v932
    %1231 = vst.msk [vmem:[#allocation2 + $0x138] sm:$0xff] %vm1191, %v934
    %1232 = vst.msk [vmem:[#allocation2 + $0x140] sm:$0xff] %vm1191, %v936
    %1233 = vst.msk [vmem:[#allocation2 + $0x148] sm:$0xff] %vm1191, %v938
    %1234 = vst.msk [vmem:[#allocation2 + $0x150] sm:$0xff] %vm1191, %v940
    %1235 = vst.msk [vmem:[#allocation2 + $0x158] sm:$0xff] %vm1191, %v942
    %1236 = vst.msk [vmem:[#allocation2 + $0x160] sm:$0xff] %vm1191, %v944
    %1237 = vst.msk [vmem:[#allocation2 + $0x168] sm:$0xff] %vm1191, %v946
    %1238 = vst.msk [vmem:[#allocation2 + $0x170] sm:$0xff] %vm1191, %v948
    %1239 = vst.msk [vmem:[#allocation2 + $0x178] sm:$0xff] %vm1191, %v950
    %1240 = vst.msk [vmem:[#allocation2 + $0x180] sm:$0xff] %vm1191, %v952
    %1241 = vst.msk [vmem:[#allocation2 + $0x188] sm:$0xff] %vm1191, %v954
    %1242 = vst.msk [vmem:[#allocation2 + $0x190] sm:$0xff] %vm1191, %v956
    %1243 = vst.msk [vmem:[#allocation2 + $0x198] sm:$0xff] %vm1191, %v958
    %1244 = vst.msk [vmem:[#allocation2 + $0x1a0] sm:$0xff] %vm1191, %v960
    %1245 = vst.msk [vmem:[#allocation2 + $0x1a8] sm:$0xff] %vm1191, %v962
    %1246 = vst.msk [vmem:[#allocation2 + $0x1b0] sm:$0xff] %vm1191, %v964
    %1247 = vst.msk [vmem:[#allocation2 + $0x1b8] sm:$0xff] %vm1191, %v966
    %1248 = vst.msk [vmem:[#allocation2 + $0x1c0] sm:$0xff] %vm1191, %v968
    %1249 = vst.msk [vmem:[#allocation2 + $0x1c8] sm:$0xff] %vm1191, %v970
    %1250 = vst.msk [vmem:[#allocation2 + $0x1d0] sm:$0xff] %vm1191, %v972
    %1251 = vst.msk [vmem:[#allocation2 + $0x1d8] sm:$0xff] %vm1191, %v974
    %1252 = vst.msk [vmem:[#allocation2 + $0x1e0] sm:$0xff] %vm1191, %v976
    %1253 = vst.msk [vmem:[#allocation2 + $0x1e8] sm:$0xff] %vm1191, %v978
    %1254 = vst.msk [vmem:[#allocation2 + $0x1f0] sm:$0xff] %vm1191, %v980
    %1255 = vst.msk [vmem:[#allocation2 + $0x1f8] sm:$0xff] %vm1191, %v982
    %1256 = vst.msk [vmem:[#allocation2 + $0x200] sm:$0xff] %vm1191, %v984
    %1257 = vst.msk [vmem:[#allocation2 + $0x208] sm:$0xff] %vm1191, %v986
    %1258 = vst.msk [vmem:[#allocation2 + $0x210] sm:$0xff] %vm1191, %v988
    %1259 = vst.msk [vmem:[#allocation2 + $0x218] sm:$0xff] %vm1191, %v990
    %1260 = vst.msk [vmem:[#allocation2 + $0x220] sm:$0xff] %vm1191, %v992
    %1261 = vst.msk [vmem:[#allocation2 + $0x228] sm:$0xff] %vm1191, %v994
    %1262 = vst.msk [vmem:[#allocation2 + $0x230] sm:$0xff] %vm1191, %v996
    %1263 = vst.msk [vmem:[#allocation2 + $0x238] sm:$0xff] %vm1191, %v998
    %1264 = vst.msk [vmem:[#allocation2 + $0x240] sm:$0xff] %vm1191, %v1000
    %1265 = vst.msk [vmem:[#allocation2 + $0x248] sm:$0xff] %vm1191, %v1002
    %1266 = vst.msk [vmem:[#allocation2 + $0x250] sm:$0xff] %vm1191, %v1004
    %1267 = vst.msk [vmem:[#allocation2 + $0x258] sm:$0xff] %vm1191, %v1006
    %1268 = vst.msk [vmem:[#allocation2 + $0x260] sm:$0xff] %vm1191, %v1008
    %1269 = vst.msk [vmem:[#allocation2 + $0x268] sm:$0xff] %vm1191, %v1010
    %1270 = vst.msk [vmem:[#allocation2 + $0x270] sm:$0xff] %vm1191, %v1012
    %1271 = vst.msk [vmem:[#allocation2 + $0x278] sm:$0xff] %vm1191, %v1014
    %1272 = vst.msk [vmem:[#allocation2 + $0x280] sm:$0xff] %vm1191, %v1016
    %1273 = vst.msk [vmem:[#allocation2 + $0x288] sm:$0xff] %vm1191, %v1018
    %1274 = vst.msk [vmem:[#allocation2 + $0x290] sm:$0xff] %vm1191, %v1020
    %1275 = vst.msk [vmem:[#allocation2 + $0x298] sm:$0xff] %vm1191, %v1022
    %1276 = vst.msk [vmem:[#allocation2 + $0x2a0] sm:$0xff] %vm1191, %v1024
    %1277 = vst.msk [vmem:[#allocation2 + $0x2a8] sm:$0xff] %vm1191, %v1026
    %1278 = vst.msk [vmem:[#allocation2 + $0x2b0] sm:$0xff] %vm1191, %v1028
    %1279 = vst.msk [vmem:[#allocation2 + $0x2b8] sm:$0xff] %vm1191, %v1030
    %1280 = vst.msk [vmem:[#allocation2 + $0x2c0] sm:$0xff] %vm1191, %v1032
    %1281 = vst.msk [vmem:[#allocation2 + $0x2c8] sm:$0xff] %vm1191, %v1034
    %1282 = vst.msk [vmem:[#allocation2 + $0x2d0] sm:$0xff] %vm1191, %v1036
    %1283 = vst.msk [vmem:[#allocation2 + $0x2d8] sm:$0xff] %vm1191, %v1038
    %1284 = vst.msk [vmem:[#allocation2 + $0x2e0] sm:$0xff] %vm1191, %v1040
    %1285 = vst.msk [vmem:[#allocation2 + $0x2e8] sm:$0xff] %vm1191, %v1042
    %1286 = vst.msk [vmem:[#allocation2 + $0x2f0] sm:$0xff] %vm1191, %v1044
    %1287 = vst.msk [vmem:[#allocation2 + $0x2f8] sm:$0xff] %vm1191, %v1046
    %1288 = vst.msk [vmem:[#allocation2 + $0x300] sm:$0xff] %vm1191, %v1048
    %1289 = vst.msk [vmem:[#allocation2 + $0x308] sm:$0xff] %vm1191, %v1050
    %1290 = vst.msk [vmem:[#allocation2 + $0x310] sm:$0xff] %vm1191, %v1052
    %1291 = vst.msk [vmem:[#allocation2 + $0x318] sm:$0xff] %vm1191, %v1054
    %1292 = vst.msk [vmem:[#allocation2 + $0x320] sm:$0xff] %vm1191, %v1056
    %1293 = vst.msk [vmem:[#allocation2 + $0x328] sm:$0xff] %vm1191, %v1058
    %1294 = vst.msk [vmem:[#allocation2 + $0x330] sm:$0xff] %vm1191, %v1060
    %1295 = vst.msk [vmem:[#allocation2 + $0x338] sm:$0xff] %vm1191, %v1062
    %1296 = vst.msk [vmem:[#allocation2 + $0x340] sm:$0xff] %vm1191, %v1064
    %1297 = vst.msk [vmem:[#allocation2 + $0x348] sm:$0xff] %vm1191, %v1066
    %1298 = vst.msk [vmem:[#allocation2 + $0x350] sm:$0xff] %vm1191, %v1068
    %1299 = vst.msk [vmem:[#allocation2 + $0x358] sm:$0xff] %vm1191, %v1070
    %1300 = vst.msk [vmem:[#allocation2 + $0x360] sm:$0xff] %vm1191, %v1072
    %1301 = vst.msk [vmem:[#allocation2 + $0x368] sm:$0xff] %vm1191, %v1074
    %1302 = vst.msk [vmem:[#allocation2 + $0x370] sm:$0xff] %vm1191, %v1076
    %1303 = vst.msk [vmem:[#allocation2 + $0x378] sm:$0xff] %vm1191, %v1078
    %1304 = vst.msk [vmem:[#allocation2 + $0x380] sm:$0xff] %vm1191, %v1080
    %1305 = vst.msk [vmem:[#allocation2 + $0x388] sm:$0xff] %vm1191, %v1082
    %1306 = vst.msk [vmem:[#allocation2 + $0x390] sm:$0xff] %vm1191, %v1084
    %1307 = vst.msk [vmem:[#allocation2 + $0x398] sm:$0xff] %vm1191, %v1086
    %1308 = vst.msk [vmem:[#allocation2 + $0x3a0] sm:$0xff] %vm1191, %v1088
    %1309 = vst.msk [vmem:[#allocation2 + $0x3a8] sm:$0xff] %vm1191, %v1090
    %1310 = vst.msk [vmem:[#allocation2 + $0x3b0] sm:$0xff] %vm1191, %v1092
    %1311 = vst.msk [vmem:[#allocation2 + $0x3b8] sm:$0xff] %vm1191, %v1094
    %1312 = vst.msk [vmem:[#allocation2 + $0x3c0] sm:$0xff] %vm1191, %v1096
    %1313 = vst.msk [vmem:[#allocation2 + $0x3c8] sm:$0xff] %vm1191, %v1098
    %1314 = vst.msk [vmem:[#allocation2 + $0x3d0] sm:$0xff] %vm1191, %v1100
    %1315 = vst.msk [vmem:[#allocation2 + $0x3d8] sm:$0xff] %vm1191, %v1102
    %1316 = vst.msk [vmem:[#allocation2 + $0x3e0] sm:$0xff] %vm1191, %v1104
    %1317 = vst.msk [vmem:[#allocation2 + $0x3e8] sm:$0xff] %vm1191, %v1106
    %1318 = vst.msk [vmem:[#allocation2 + $0x3f0] sm:$0xff] %vm1191, %v1108
    %1319 = vst.msk [vmem:[#allocation2 + $0x3f8] sm:$0xff] %vm1191, %v1110
    %1320 = vst.msk [vmem:[#allocation2 + $0x400] sm:$0xff] %vm1191, %v1112
    %1321 = vst.msk [vmem:[#allocation2 + $0x408] sm:$0xff] %vm1191, %v1114
    %1322 = vst.msk [vmem:[#allocation2 + $0x410] sm:$0xff] %vm1191, %v1116
    %1323 = vst.msk [vmem:[#allocation2 + $0x418] sm:$0xff] %vm1191, %v1118
    %1324 = vst.msk [vmem:[#allocation2 + $0x420] sm:$0xff] %vm1191, %v1120
    %1325 = vst.msk [vmem:[#allocation2 + $0x428] sm:$0xff] %vm1191, %v1122
    %1326 = vst.msk [vmem:[#allocation2 + $0x430] sm:$0xff] %vm1191, %v1124
    %1327 = vst.msk [vmem:[#allocation2 + $0x438] sm:$0xff] %vm1191, %v1126
    %1328 = vst.msk [vmem:[#allocation2 + $0x440] sm:$0xff] %vm1191, %v1128
    %1329 = vst.msk [vmem:[#allocation2 + $0x448] sm:$0xff] %vm1191, %v1130
    %1330 = vst.msk [vmem:[#allocation2 + $0x450] sm:$0xff] %vm1191, %v1132
    %1331 = vst.msk [vmem:[#allocation2 + $0x458] sm:$0xff] %vm1191, %v1134
    %1332 = vst.msk [vmem:[#allocation2 + $0x460] sm:$0xff] %vm1191, %v1136
    %1333 = vst.msk [vmem:[#allocation2 + $0x468] sm:$0xff] %vm1191, %v1138
    %1334 = vst.msk [vmem:[#allocation2 + $0x470] sm:$0xff] %vm1191, %v1140
    %1335 = vst.msk [vmem:[#allocation2 + $0x478] sm:$0xff] %vm1191, %v1142
    %1336 = vst.msk [vmem:[#allocation2 + $0x480] sm:$0xff] %vm1191, %v1144
    %1337 = vst.msk [vmem:[#allocation2 + $0x488] sm:$0xff] %vm1191, %v1146
    %1338 = vst.msk [vmem:[#allocation2 + $0x490] sm:$0xff] %vm1191, %v1148
    %1339 = vst.msk [vmem:[#allocation2 + $0x498] sm:$0xff] %vm1191, %v1150
    %1340 = vst.msk [vmem:[#allocation2 + $0x4a0] sm:$0xff] %vm1191, %v1152
    %1341 = vst.msk [vmem:[#allocation2 + $0x4a8] sm:$0xff] %vm1191, %v1154
    %1342 = vst.msk [vmem:[#allocation2 + $0x4b0] sm:$0xff] %vm1191, %v1156
    %1343 = vst.msk [vmem:[#allocation2 + $0x4b8] sm:$0xff] %vm1191, %v1158
    %1344 = vst.msk [vmem:[#allocation2 + $0x4c0] sm:$0xff] %vm1191, %v1160
    %1345 = vst.msk [vmem:[#allocation2 + $0x4c8] sm:$0xff] %vm1191, %v1162
    %1346 = vst.msk [vmem:[#allocation2 + $0x4d0] sm:$0xff] %vm1191, %v1164
    %1347 = vst.msk [vmem:[#allocation2 + $0x4d8] sm:$0xff] %vm1191, %v1166
    %1348 = vst.msk [vmem:[#allocation2 + $0x4e0] sm:$0xff] %vm1191, %v1168
    %1349 = vst.msk [vmem:[#allocation2 + $0x4e8] sm:$0xff] %vm1191, %v1170
    %1350 = vst.msk [vmem:[#allocation2 + $0x4f0] sm:$0xff] %vm1191, %v1172
    %1351 = vst.msk [vmem:[#allocation2 + $0x4f8] sm:$0xff] %vm1191, %v1174
    %1352 = vst.msk [vmem:[#allocation2 + $0x500] sm:$0xff] %vm1191, %v1176
    %1353 = vst.msk [vmem:[#allocation2 + $0x508] sm:$0xff] %vm1191, %v1178
    %1354 = vst.msk [vmem:[#allocation2 + $0x510] sm:$0xff] %vm1191, %v1180
    %1355 = vst.msk [vmem:[#allocation2 + $0x518] sm:$0xff] %vm1191, %v1182
    %1356 = vst.msk [vmem:[#allocation2 + $0x520] sm:$0xff] %vm1191, %v1184
    %1357 = vst.msk [vmem:[#allocation2 + $0x528] sm:$0xff] %vm1191, %v1186
    %1358 = vst.msk [vmem:[#allocation2 + $0x530] sm:$0xff] %vm1191, %v1188
    %1359 = vst.msk [vmem:[#allocation2 + $0x538] sm:$0xff] %vm1191, %v1190
  $region13: #{tpu_custom_call.1} parent=0 // pred_fallthru
    _
  %v1360 = vld [vmem:[#allocation2] sm:$0xff]
  %v1361 = vld [vmem:[#allocation2 + $0x8] sm:$0xff]
  %v1362 = vld [vmem:[#allocation2 + $0x10] sm:$0xff]
  %v1363 = vld [vmem:[#allocation2 + $0x18] sm:$0xff]
  %v1364 = vld [vmem:[#allocation2 + $0x20] sm:$0xff]
  %v1365 = vld [vmem:[#allocation2 + $0x28] sm:$0xff]
  %v1366 = vld [vmem:[#allocation2 + $0x30] sm:$0xff]
  %v1367 = vld [vmem:[#allocation2 + $0x38] sm:$0xff]
  %v1368 = vld [vmem:[#allocation2 + $0x40] sm:$0xff]
  %v1369 = vld [vmem:[#allocation2 + $0x48] sm:$0xff]
  %v1370 = vld [vmem:[#allocation2 + $0x50] sm:$0xff]
  %v1371 = vld [vmem:[#allocation2 + $0x58] sm:$0xff]
  %v1372 = vld [vmem:[#allocation2 + $0x60] sm:$0xff]
  %v1373 = vld [vmem:[#allocation2 + $0x68] sm:$0xff]
  %v1374 = vld [vmem:[#allocation2 + $0x70] sm:$0xff]
  %v1375 = vld [vmem:[#allocation2 + $0x78] sm:$0xff]
  %v1376 = vld [vmem:[#allocation2 + $0x80] sm:$0xff]
  %v1377 = vld [vmem:[#allocation2 + $0x88] sm:$0xff]
  %v1378 = vld [vmem:[#allocation2 + $0x90] sm:$0xff]
  %v1379 = vld [vmem:[#allocation2 + $0x98] sm:$0xff]
  %v1380 = vld [vmem:[#allocation2 + $0xa0] sm:$0xff]
  %v1381 = vld [vmem:[#allocation2 + $0xa8] sm:$0xff]
  %v1382 = vld [vmem:[#allocation2 + $0xb0] sm:$0xff]
  %v1383 = vld [vmem:[#allocation2 + $0xb8] sm:$0xff]
  %v1384 = vld [vmem:[#allocation2 + $0xc0] sm:$0xff]
  %v1385 = vld [vmem:[#allocation2 + $0xc8] sm:$0xff]
  %v1386 = vld [vmem:[#allocation2 + $0xd0] sm:$0xff]
  %v1387 = vld [vmem:[#allocation2 + $0xd8] sm:$0xff]
  %v1388 = vld [vmem:[#allocation2 + $0xe0] sm:$0xff]
  %v1389 = vld [vmem:[#allocation2 + $0xe8] sm:$0xff]
  %v1390 = vld [vmem:[#allocation2 + $0xf0] sm:$0xff]
  %v1391 = vld [vmem:[#allocation2 + $0xf8] sm:$0xff]
  %v1392 = vld [vmem:[#allocation2 + $0x100] sm:$0xff]
  %v1393 = vld [vmem:[#allocation2 + $0x108] sm:$0xff]
  %v1394 = vld [vmem:[#allocation2 + $0x110] sm:$0xff]
  %v1395 = vld [vmem:[#allocation2 + $0x118] sm:$0xff]
  %v1396 = vld [vmem:[#allocation2 + $0x120] sm:$0xff]
  %v1397 = vld [vmem:[#allocation2 + $0x128] sm:$0xff]
  %v1398 = vld [vmem:[#allocation2 + $0x130] sm:$0xff]
  %v1399 = vld [vmem:[#allocation2 + $0x138] sm:$0xff]
  %v1400 = vld [vmem:[#allocation2 + $0x140] sm:$0xff]
  %v1401 = vld [vmem:[#allocation2 + $0x148] sm:$0xff]
  %v1402 = vld [vmem:[#allocation2 + $0x150] sm:$0xff]
  %v1403 = vld [vmem:[#allocation2 + $0x158] sm:$0xff]
  %v1404 = vld [vmem:[#allocation2 + $0x160] sm:$0xff]
  %v1405 = vld [vmem:[#allocation2 + $0x168] sm:$0xff]
  %v1406 = vld [vmem:[#allocation2 + $0x170] sm:$0xff]
  %v1407 = vld [vmem:[#allocation2 + $0x178] sm:$0xff]
  %v1408 = vld [vmem:[#allocation2 + $0x180] sm:$0xff]
  %v1409 = vld [vmem:[#allocation2 + $0x188] sm:$0xff]
  %v1410 = vld [vmem:[#allocation2 + $0x190] sm:$0xff]
  %v1411 = vld [vmem:[#allocation2 + $0x198] sm:$0xff]
  %v1412 = vld [vmem:[#allocation2 + $0x1a0] sm:$0xff]
  %v1413 = vld [vmem:[#allocation2 + $0x1a8] sm:$0xff]
  %v1414 = vld [vmem:[#allocation2 + $0x1b0] sm:$0xff]
  %v1415 = vld [vmem:[#allocation2 + $0x1b8] sm:$0xff]
  %v1416 = vld [vmem:[#allocation2 + $0x1c0] sm:$0xff]
  %v1417 = vld [vmem:[#allocation2 + $0x1c8] sm:$0xff]
  %v1418 = vld [vmem:[#allocation2 + $0x1d0] sm:$0xff]
  %v1419 = vld [vmem:[#allocation2 + $0x1d8] sm:$0xff]
  %v1420 = vld [vmem:[#allocation2 + $0x1e0] sm:$0xff]
  %v1421 = vld [vmem:[#allocation2 + $0x1e8] sm:$0xff]
  %v1422 = vld [vmem:[#allocation2 + $0x1f0] sm:$0xff]
  %v1423 = vld [vmem:[#allocation2 + $0x1f8] sm:$0xff]
  %v1424 = vld [vmem:[#allocation2 + $0x200] sm:$0xff]
  %v1425 = vld [vmem:[#allocation2 + $0x208] sm:$0xff]
  %v1426 = vld [vmem:[#allocation2 + $0x210] sm:$0xff]
  %v1427 = vld [vmem:[#allocation2 + $0x218] sm:$0xff]
  %v1428 = vld [vmem:[#allocation2 + $0x220] sm:$0xff]
  %v1429 = vld [vmem:[#allocation2 + $0x228] sm:$0xff]
  %v1430 = vld [vmem:[#allocation2 + $0x230] sm:$0xff]
  %v1431 = vld [vmem:[#allocation2 + $0x238] sm:$0xff]
  %v1432 = vld [vmem:[#allocation2 + $0x240] sm:$0xff]
  %v1433 = vld [vmem:[#allocation2 + $0x248] sm:$0xff]
  %v1434 = vld [vmem:[#allocation2 + $0x250] sm:$0xff]
  %v1435 = vld [vmem:[#allocation2 + $0x258] sm:$0xff]
  %v1436 = vld [vmem:[#allocation2 + $0x260] sm:$0xff]
  %v1437 = vld [vmem:[#allocation2 + $0x268] sm:$0xff]
  %v1438 = vld [vmem:[#allocation2 + $0x270] sm:$0xff]
  %v1439 = vld [vmem:[#allocation2 + $0x278] sm:$0xff]
  %v1440 = vld [vmem:[#allocation2 + $0x280] sm:$0xff]
  %v1441 = vld [vmem:[#allocation2 + $0x288] sm:$0xff]
  %v1442 = vld [vmem:[#allocation2 + $0x290] sm:$0xff]
  %v1443 = vld [vmem:[#allocation2 + $0x298] sm:$0xff]
  %v1444 = vld [vmem:[#allocation2 + $0x2a0] sm:$0xff]
  %v1445 = vld [vmem:[#allocation2 + $0x2a8] sm:$0xff]
  %v1446 = vld [vmem:[#allocation2 + $0x2b0] sm:$0xff]
  %v1447 = vld [vmem:[#allocation2 + $0x2b8] sm:$0xff]
  %v1448 = vld [vmem:[#allocation2 + $0x2c0] sm:$0xff]
  %v1449 = vld [vmem:[#allocation2 + $0x2c8] sm:$0xff]
  %v1450 = vld [vmem:[#allocation2 + $0x2d0] sm:$0xff]
  %v1451 = vld [vmem:[#allocation2 + $0x2d8] sm:$0xff]
  %v1452 = vld [vmem:[#allocation2 + $0x2e0] sm:$0xff]
  %v1453 = vld [vmem:[#allocation2 + $0x2e8] sm:$0xff]
  %v1454 = vld [vmem:[#allocation2 + $0x2f0] sm:$0xff]
  %v1455 = vld [vmem:[#allocation2 + $0x2f8] sm:$0xff]
  %v1456 = vld [vmem:[#allocation2 + $0x300] sm:$0xff]
  %v1457 = vld [vmem:[#allocation2 + $0x308] sm:$0xff]
  %v1458 = vld [vmem:[#allocation2 + $0x310] sm:$0xff]
  %v1459 = vld [vmem:[#allocation2 + $0x318] sm:$0xff]
  %v1460 = vld [vmem:[#allocation2 + $0x320] sm:$0xff]
  %v1461 = vld [vmem:[#allocation2 + $0x328] sm:$0xff]
  %v1462 = vld [vmem:[#allocation2 + $0x330] sm:$0xff]
  %v1463 = vld [vmem:[#allocation2 + $0x338] sm:$0xff]
  %v1464 = vld [vmem:[#allocation2 + $0x340] sm:$0xff]
  %v1465 = vld [vmem:[#allocation2 + $0x348] sm:$0xff]
  %v1466 = vld [vmem:[#allocation2 + $0x350] sm:$0xff]
  %v1467 = vld [vmem:[#allocation2 + $0x358] sm:$0xff]
  %v1468 = vld [vmem:[#allocation2 + $0x360] sm:$0xff]
  %v1469 = vld [vmem:[#allocation2 + $0x368] sm:$0xff]
  %v1470 = vld [vmem:[#allocation2 + $0x370] sm:$0xff]
  %v1471 = vld [vmem:[#allocation2 + $0x378] sm:$0xff]
  %v1472 = vld [vmem:[#allocation2 + $0x380] sm:$0xff]
  %v1473 = vld [vmem:[#allocation2 + $0x388] sm:$0xff]
  %v1474 = vld [vmem:[#allocation2 + $0x390] sm:$0xff]
  %v1475 = vld [vmem:[#allocation2 + $0x398] sm:$0xff]
  %v1476 = vld [vmem:[#allocation2 + $0x3a0] sm:$0xff]
  %v1477 = vld [vmem:[#allocation2 + $0x3a8] sm:$0xff]
  %v1478 = vld [vmem:[#allocation2 + $0x3b0] sm:$0xff]
  %v1479 = vld [vmem:[#allocation2 + $0x3b8] sm:$0xff]
  %v1480 = vld [vmem:[#allocation2 + $0x3c0] sm:$0xff]
  %v1481 = vld [vmem:[#allocation2 + $0x3c8] sm:$0xff]
  %v1482 = vld [vmem:[#allocation2 + $0x3d0] sm:$0xff]
  %v1483 = vld [vmem:[#allocation2 + $0x3d8] sm:$0xff]
  %v1484 = vld [vmem:[#allocation2 + $0x3e0] sm:$0xff]
  %v1485 = vld [vmem:[#allocation2 + $0x3e8] sm:$0xff]
  %v1486 = vld [vmem:[#allocation2 + $0x3f0] sm:$0xff]
  %v1487 = vld [vmem:[#allocation2 + $0x3f8] sm:$0xff]
  %v1488 = vld [vmem:[#allocation2 + $0x400] sm:$0xff]
  %v1489 = vld [vmem:[#allocation2 + $0x408] sm:$0xff]
  %v1490 = vld [vmem:[#allocation2 + $0x410] sm:$0xff]
  %v1491 = vld [vmem:[#allocation2 + $0x418] sm:$0xff]
  %v1492 = vld [vmem:[#allocation2 + $0x420] sm:$0xff]
  %v1493 = vld [vmem:[#allocation2 + $0x428] sm:$0xff]
  %v1494 = vld [vmem:[#allocation2 + $0x430] sm:$0xff]
  %v1495 = vld [vmem:[#allocation2 + $0x438] sm:$0xff]
  %v1496 = vld [vmem:[#allocation2 + $0x440] sm:$0xff]
  %v1497 = vld [vmem:[#allocation2 + $0x448] sm:$0xff]
  %v1498 = vld [vmem:[#allocation2 + $0x450] sm:$0xff]
  %v1499 = vld [vmem:[#allocation2 + $0x458] sm:$0xff]
  %v1500 = vld [vmem:[#allocation2 + $0x460] sm:$0xff]
  %v1501 = vld [vmem:[#allocation2 + $0x468] sm:$0xff]
  %v1502 = vld [vmem:[#allocation2 + $0x470] sm:$0xff]
  %v1503 = vld [vmem:[#allocation2 + $0x478] sm:$0xff]
  %v1504 = vld [vmem:[#allocation2 + $0x480] sm:$0xff]
  %v1505 = vld [vmem:[#allocation2 + $0x488] sm:$0xff]
  %v1506 = vld [vmem:[#allocation2 + $0x490] sm:$0xff]
  %v1507 = vld [vmem:[#allocation2 + $0x498] sm:$0xff]
  %v1508 = vld [vmem:[#allocation2 + $0x4a0] sm:$0xff]
  %v1509 = vld [vmem:[#allocation2 + $0x4a8] sm:$0xff]
  %v1510 = vld [vmem:[#allocation2 + $0x4b0] sm:$0xff]
  %v1511 = vld [vmem:[#allocation2 + $0x4b8] sm:$0xff]
  %v1512 = vld [vmem:[#allocation2 + $0x4c0] sm:$0xff]
  %v1513 = vld [vmem:[#allocation2 + $0x4c8] sm:$0xff]
  %v1514 = vld [vmem:[#allocation2 + $0x4d0] sm:$0xff]
  %v1515 = vld [vmem:[#allocation2 + $0x4d8] sm:$0xff]
  %v1516 = vld [vmem:[#allocation2 + $0x4e0] sm:$0xff]
  %v1517 = vld [vmem:[#allocation2 + $0x4e8] sm:$0xff]
  %v1518 = vld [vmem:[#allocation2 + $0x4f0] sm:$0xff]
  %v1519 = vld [vmem:[#allocation2 + $0x4f8] sm:$0xff]
  %v1520 = vld [vmem:[#allocation2 + $0x500] sm:$0xff]
  %v1521 = vld [vmem:[#allocation2 + $0x508] sm:$0xff]
  %v1522 = vld [vmem:[#allocation2 + $0x510] sm:$0xff]
  %v1523 = vld [vmem:[#allocation2 + $0x518] sm:$0xff]
  %v1524 = vld [vmem:[#allocation2 + $0x520] sm:$0xff]
  %v1525 = vld [vmem:[#allocation2 + $0x528] sm:$0xff]
  %v1526 = vld [vmem:[#allocation2 + $0x530] sm:$0xff]
  %v1527 = vld [vmem:[#allocation2 + $0x538] sm:$0xff]
  %v1528 = vld [vmem:[%s1] sm:$0xff]
  %v1529 = vld [vmem:[%s1 + $0x8] sm:$0xff]
  %v1530 = vld [vmem:[%s1 + $0x10] sm:$0xff]
  %v1531 = vld [vmem:[%s1 + $0x18] sm:$0xff]
  %v1532 = vld [vmem:[%s1 + $0x20] sm:$0xff]
  %v1533 = vld [vmem:[%s1 + $0x28] sm:$0xff]
  %v1534 = vld [vmem:[%s1 + $0x30] sm:$0xff]
  %v1535 = vld [vmem:[%s1 + $0x38] sm:$0xff]
  %v1536 = vld [vmem:[%s1 + $0x40] sm:$0xff]
  %v1537 = vld [vmem:[%s1 + $0x48] sm:$0xff]
  %v1538 = vld [vmem:[%s1 + $0x50] sm:$0xff]
  %v1539 = vld [vmem:[%s1 + $0x58] sm:$0xff]
  %v1540 = vld [vmem:[%s1 + $0x60] sm:$0xff]
  %v1541 = vld [vmem:[%s1 + $0x68] sm:$0xff]
  %v1542 = vld [vmem:[%s1 + $0x70] sm:$0xff]
  %v1543 = vld [vmem:[%s1 + $0x78] sm:$0xff]
  %v1544 = vld [vmem:[%s1 + $0x80] sm:$0xff]
  %v1545 = vld [vmem:[%s1 + $0x88] sm:$0xff]
  %v1546 = vld [vmem:[%s1 + $0x90] sm:$0xff]
  %v1547 = vld [vmem:[%s1 + $0x98] sm:$0xff]
  %v1548 = vld [vmem:[%s1 + $0xa0] sm:$0xff]
  %v1549 = vld [vmem:[%s1 + $0xa8] sm:$0xff]
  %v1550 = vld [vmem:[%s1 + $0xb0] sm:$0xff]
  %v1551 = vld [vmem:[%s1 + $0xb8] sm:$0xff]
  %v1552 = vld [vmem:[%s1 + $0xc0] sm:$0xff]
  %v1553 = vld [vmem:[%s1 + $0xc8] sm:$0xff]
  %v1554 = vld [vmem:[%s1 + $0xd0] sm:$0xff]
  %v1555 = vld [vmem:[%s1 + $0xd8] sm:$0xff]
  %v1556 = vld [vmem:[%s1 + $0xe0] sm:$0xff]
  %v1557 = vld [vmem:[%s1 + $0xe8] sm:$0xff]
  %v1558 = vld [vmem:[%s1 + $0xf0] sm:$0xff]
  %v1559 = vld [vmem:[%s1 + $0xf8] sm:$0xff]
  %v1560 = vld [vmem:[%s1 + $0x100] sm:$0xff]
  %v1561 = vld [vmem:[%s1 + $0x108] sm:$0xff]
  %v1562 = vld [vmem:[%s1 + $0x110] sm:$0xff]
  %v1563 = vld [vmem:[%s1 + $0x118] sm:$0xff]
  %v1564 = vld [vmem:[%s1 + $0x120] sm:$0xff]
  %v1565 = vld [vmem:[%s1 + $0x128] sm:$0xff]
  %v1566 = vld [vmem:[%s1 + $0x130] sm:$0xff]
  %v1567 = vld [vmem:[%s1 + $0x138] sm:$0xff]
  %v1568 = vld [vmem:[%s1 + $0x140] sm:$0xff]
  %v1569 = vld [vmem:[%s1 + $0x148] sm:$0xff]
  %v1570 = vld [vmem:[%s1 + $0x150] sm:$0xff]
  %v1571 = vld [vmem:[%s1 + $0x158] sm:$0xff]
  %v1572 = vld [vmem:[%s1 + $0x160] sm:$0xff]
  %v1573 = vld [vmem:[%s1 + $0x168] sm:$0xff]
  %v1574 = vld [vmem:[%s1 + $0x170] sm:$0xff]
  %v1575 = vld [vmem:[%s1 + $0x178] sm:$0xff]
  %v1576 = vld [vmem:[%s1 + $0x180] sm:$0xff]
  %v1577 = vld [vmem:[%s1 + $0x188] sm:$0xff]
  %v1578 = vld [vmem:[%s1 + $0x190] sm:$0xff]
  %v1579 = vld [vmem:[%s1 + $0x198] sm:$0xff]
  %v1580 = vld [vmem:[%s1 + $0x1a0] sm:$0xff]
  %v1581 = vld [vmem:[%s1 + $0x1a8] sm:$0xff]
  %v1582 = vld [vmem:[%s1 + $0x1b0] sm:$0xff]
  %v1583 = vld [vmem:[%s1 + $0x1b8] sm:$0xff]
  %v1584 = vld [vmem:[%s1 + $0x1c0] sm:$0xff]
  %v1585 = vld [vmem:[%s1 + $0x1c8] sm:$0xff]
  %v1586 = vld [vmem:[%s1 + $0x1d0] sm:$0xff]
  %v1587 = vld [vmem:[%s1 + $0x1d8] sm:$0xff]
  %v1588 = vld [vmem:[%s1 + $0x1e0] sm:$0xff]
  %v1589 = vld [vmem:[%s1 + $0x1e8] sm:$0xff]
  %v1590 = vld [vmem:[%s1 + $0x1f0] sm:$0xff]
  %v1591 = vld [vmem:[%s1 + $0x1f8] sm:$0xff]
  %v1592 = vld [vmem:[%s1 + $0x200] sm:$0xff]
  %v1593 = vld [vmem:[%s1 + $0x208] sm:$0xff]
  %v1594 = vld [vmem:[%s1 + $0x210] sm:$0xff]
  %v1595 = vld [vmem:[%s1 + $0x218] sm:$0xff]
  %v1596 = vld [vmem:[%s1 + $0x220] sm:$0xff]
  %v1597 = vld [vmem:[%s1 + $0x228] sm:$0xff]
  %v1598 = vld [vmem:[%s1 + $0x230] sm:$0xff]
  %v1599 = vld [vmem:[%s1 + $0x238] sm:$0xff]
  %v1600 = vld [vmem:[%s1 + $0x240] sm:$0xff]
  %v1601 = vld [vmem:[%s1 + $0x248] sm:$0xff]
  %v1602 = vld [vmem:[%s1 + $0x250] sm:$0xff]
  %v1603 = vld [vmem:[%s1 + $0x258] sm:$0xff]
  %v1604 = vld [vmem:[%s1 + $0x260] sm:$0xff]
  %v1605 = vld [vmem:[%s1 + $0x268] sm:$0xff]
  %v1606 = vld [vmem:[%s1 + $0x270] sm:$0xff]
  %v1607 = vld [vmem:[%s1 + $0x278] sm:$0xff]
  %v1608 = vld [vmem:[%s1 + $0x280] sm:$0xff]
  %v1609 = vld [vmem:[%s1 + $0x288] sm:$0xff]
  %v1610 = vld [vmem:[%s1 + $0x290] sm:$0xff]
  %v1611 = vld [vmem:[%s1 + $0x298] sm:$0xff]
  %v1612 = vld [vmem:[%s1 + $0x2a0] sm:$0xff]
  %v1613 = vld [vmem:[%s1 + $0x2a8] sm:$0xff]
  %v1614 = vld [vmem:[%s1 + $0x2b0] sm:$0xff]
  %v1615 = vld [vmem:[%s1 + $0x2b8] sm:$0xff]
  %v1616 = vld [vmem:[%s1 + $0x2c0] sm:$0xff]
  %v1617 = vld [vmem:[%s1 + $0x2c8] sm:$0xff]
  %v1618 = vld [vmem:[%s1 + $0x2d0] sm:$0xff]
  %v1619 = vld [vmem:[%s1 + $0x2d8] sm:$0xff]
  %v1620 = vld [vmem:[%s1 + $0x2e0] sm:$0xff]
  %v1621 = vld [vmem:[%s1 + $0x2e8] sm:$0xff]
  %v1622 = vld [vmem:[%s1 + $0x2f0] sm:$0xff]
  %v1623 = vld [vmem:[%s1 + $0x2f8] sm:$0xff]
  %v1624 = vld [vmem:[%s1 + $0x300] sm:$0xff]
  %v1625 = vld [vmem:[%s1 + $0x308] sm:$0xff]
  %v1626 = vld [vmem:[%s1 + $0x310] sm:$0xff]
  %v1627 = vld [vmem:[%s1 + $0x318] sm:$0xff]
  %v1628 = vld [vmem:[%s1 + $0x320] sm:$0xff]
  %v1629 = vld [vmem:[%s1 + $0x328] sm:$0xff]
  %v1630 = vld [vmem:[%s1 + $0x330] sm:$0xff]
  %v1631 = vld [vmem:[%s1 + $0x338] sm:$0xff]
  %v1632 = vld [vmem:[%s1 + $0x340] sm:$0xff]
  %v1633 = vld [vmem:[%s1 + $0x348] sm:$0xff]
  %v1634 = vld [vmem:[%s1 + $0x350] sm:$0xff]
  %v1635 = vld [vmem:[%s1 + $0x358] sm:$0xff]
  %v1636 = vld [vmem:[%s1 + $0x360] sm:$0xff]
  %v1637 = vld [vmem:[%s1 + $0x368] sm:$0xff]
  %v1638 = vld [vmem:[%s1 + $0x370] sm:$0xff]
  %v1639 = vld [vmem:[%s1 + $0x378] sm:$0xff]
  %v1640 = vld [vmem:[%s1 + $0x380] sm:$0xff]
  %v1641 = vld [vmem:[%s1 + $0x388] sm:$0xff]
  %v1642 = vld [vmem:[%s1 + $0x390] sm:$0xff]
  %v1643 = vld [vmem:[%s1 + $0x398] sm:$0xff]
  %v1644 = vld [vmem:[%s1 + $0x3a0] sm:$0xff]
  %v1645 = vld [vmem:[%s1 + $0x3a8] sm:$0xff]
  %v1646 = vld [vmem:[%s1 + $0x3b0] sm:$0xff]
  %v1647 = vld [vmem:[%s1 + $0x3b8] sm:$0xff]
  %v1648 = vld [vmem:[%s1 + $0x3c0] sm:$0xff]
  %v1649 = vld [vmem:[%s1 + $0x3c8] sm:$0xff]
  %v1650 = vld [vmem:[%s1 + $0x3d0] sm:$0xff]
  %v1651 = vld [vmem:[%s1 + $0x3d8] sm:$0xff]
  %v1652 = vld [vmem:[%s1 + $0x3e0] sm:$0xff]
  %v1653 = vld [vmem:[%s1 + $0x3e8] sm:$0xff]
  %v1654 = vld [vmem:[%s1 + $0x3f0] sm:$0xff]
  %v1655 = vld [vmem:[%s1 + $0x3f8] sm:$0xff]
  %v1656 = vld [vmem:[%s1 + $0x400] sm:$0xff]
  %v1657 = vld [vmem:[%s1 + $0x408] sm:$0xff]
  %v1658 = vld [vmem:[%s1 + $0x410] sm:$0xff]
  %v1659 = vld [vmem:[%s1 + $0x418] sm:$0xff]
  %v1660 = vld [vmem:[%s1 + $0x420] sm:$0xff]
  %v1661 = vld [vmem:[%s1 + $0x428] sm:$0xff]
  %v1662 = vld [vmem:[%s1 + $0x430] sm:$0xff]
  %v1663 = vld [vmem:[%s1 + $0x438] sm:$0xff]
  %v1664 = vld [vmem:[%s1 + $0x440] sm:$0xff]
  %v1665 = vld [vmem:[%s1 + $0x448] sm:$0xff]
  %v1666 = vld [vmem:[%s1 + $0x450] sm:$0xff]
  %v1667 = vld [vmem:[%s1 + $0x458] sm:$0xff]
  %v1668 = vld [vmem:[%s1 + $0x460] sm:$0xff]
  %v1669 = vld [vmem:[%s1 + $0x468] sm:$0xff]
  %v1670 = vld [vmem:[%s1 + $0x470] sm:$0xff]
  %v1671 = vld [vmem:[%s1 + $0x478] sm:$0xff]
  %v1672 = vld [vmem:[%s1 + $0x480] sm:$0xff]
  %v1673 = vld [vmem:[%s1 + $0x488] sm:$0xff]
  %v1674 = vld [vmem:[%s1 + $0x490] sm:$0xff]
  %v1675 = vld [vmem:[%s1 + $0x498] sm:$0xff]
  %v1676 = vld [vmem:[%s1 + $0x4a0] sm:$0xff]
  %v1677 = vld [vmem:[%s1 + $0x4a8] sm:$0xff]
  %v1678 = vld [vmem:[%s1 + $0x4b0] sm:$0xff]
  %v1679 = vld [vmem:[%s1 + $0x4b8] sm:$0xff]
  %v1680 = vld [vmem:[%s1 + $0x4c0] sm:$0xff]
  %v1681 = vld [vmem:[%s1 + $0x4c8] sm:$0xff]
  %v1682 = vld [vmem:[%s1 + $0x4d0] sm:$0xff]
  %v1683 = vld [vmem:[%s1 + $0x4d8] sm:$0xff]
  %v1684 = vld [vmem:[%s1 + $0x4e0] sm:$0xff]
  %v1685 = vld [vmem:[%s1 + $0x4e8] sm:$0xff]
  %v1686 = vld [vmem:[%s1 + $0x4f0] sm:$0xff]
  %v1687 = vld [vmem:[%s1 + $0x4f8] sm:$0xff]
  %v1688 = vld [vmem:[%s1 + $0x500] sm:$0xff]
  %v1689 = vld [vmem:[%s1 + $0x508] sm:$0xff]
  %v1690 = vld [vmem:[%s1 + $0x510] sm:$0xff]
  %v1691 = vld [vmem:[%s1 + $0x518] sm:$0xff]
  %v1692 = vld [vmem:[%s1 + $0x520] sm:$0xff]
  %v1693 = vld [vmem:[%s1 + $0x528] sm:$0xff]
  %v1694 = vld [vmem:[%s1 + $0x530] sm:$0xff]
  %v1695 = vld [vmem:[%s1 + $0x538] sm:$0xff]
  %v1696 = vld [vmem:[%s1 + $0x540] sm:$0xff]
  %v1697 = vld [vmem:[%s1 + $0x548] sm:$0xff]
  %v1698 = vld [vmem:[%s1 + $0x550] sm:$0xff]
  %v1699 = vld [vmem:[%s1 + $0x558] sm:$0xff]
  %v1700 = vld [vmem:[%s1 + $0x560] sm:$0xff]
  %v1701 = vld [vmem:[%s1 + $0x568] sm:$0xff]
  %v1702 = vld [vmem:[%s1 + $0x570] sm:$0xff]
  %v1703 = vld [vmem:[%s1 + $0x578] sm:$0xff]
  %v1704 = vld [vmem:[%s1 + $0x580] sm:$0xff]
  %v1705 = vld [vmem:[%s1 + $0x588] sm:$0xff]
  %v1706 = vld [vmem:[%s1 + $0x590] sm:$0xff]
  %v1707 = vld [vmem:[%s1 + $0x598] sm:$0xff]
  %v1708 = vld [vmem:[%s1 + $0x5a0] sm:$0xff]
  %v1709 = vld [vmem:[%s1 + $0x5a8] sm:$0xff]
  %v1710 = vld [vmem:[%s1 + $0x5b0] sm:$0xff]
  %v1711 = vld [vmem:[%s1 + $0x5b8] sm:$0xff]
  %v1712 = vld [vmem:[%s1 + $0x5c0] sm:$0xff]
  %v1713 = vld [vmem:[%s1 + $0x5c8] sm:$0xff]
  %v1714 = vld [vmem:[%s1 + $0x5d0] sm:$0xff]
  %v1715 = vld [vmem:[%s1 + $0x5d8] sm:$0xff]
  %v1716 = vld [vmem:[%s1 + $0x5e0] sm:$0xff]
  %v1717 = vld [vmem:[%s1 + $0x5e8] sm:$0xff]
  %v1718 = vld [vmem:[%s1 + $0x5f0] sm:$0xff]
  %v1719 = vld [vmem:[%s1 + $0x5f8] sm:$0xff]
  %v1720 = vld [vmem:[%s1 + $0x600] sm:$0xff]
  %v1721 = vld [vmem:[%s1 + $0x608] sm:$0xff]
  %v1722 = vld [vmem:[%s1 + $0x610] sm:$0xff]
  %v1723 = vld [vmem:[%s1 + $0x618] sm:$0xff]
  %v1724 = vld [vmem:[%s1 + $0x620] sm:$0xff]
  %v1725 = vld [vmem:[%s1 + $0x628] sm:$0xff]
  %v1726 = vld [vmem:[%s1 + $0x630] sm:$0xff]
  %v1727 = vld [vmem:[%s1 + $0x638] sm:$0xff]
  %v1728 = vld [vmem:[%s1 + $0x640] sm:$0xff]
  %v1729 = vld [vmem:[%s1 + $0x648] sm:$0xff]
  %v1730 = vld [vmem:[%s1 + $0x650] sm:$0xff]
  %v1731 = vld [vmem:[%s1 + $0x658] sm:$0xff]
  %v1732 = vld [vmem:[%s1 + $0x660] sm:$0xff]
  %v1733 = vld [vmem:[%s1 + $0x668] sm:$0xff]
  %v1734 = vld [vmem:[%s1 + $0x670] sm:$0xff]
  %v1735 = vld [vmem:[%s1 + $0x678] sm:$0xff]
  %v1736 = vld [vmem:[%s1 + $0x680] sm:$0xff]
  %v1737 = vld [vmem:[%s1 + $0x688] sm:$0xff]
  %v1738 = vld [vmem:[%s1 + $0x690] sm:$0xff]
  %v1739 = vld [vmem:[%s1 + $0x698] sm:$0xff]
  %v1740 = vld [vmem:[%s1 + $0x6a0] sm:$0xff]
  %v1741 = vld [vmem:[%s1 + $0x6a8] sm:$0xff]
  %v1742 = vld [vmem:[%s1 + $0x6b0] sm:$0xff]
  %v1743 = vld [vmem:[%s1 + $0x6b8] sm:$0xff]
  %v1744 = vld [vmem:[%s1 + $0x6c0] sm:$0xff]
  %v1745 = vld [vmem:[%s1 + $0x6c8] sm:$0xff]
  %v1746 = vld [vmem:[%s1 + $0x6d0] sm:$0xff]
  %v1747 = vld [vmem:[%s1 + $0x6d8] sm:$0xff]
  %v1748 = vld [vmem:[%s1 + $0x6e0] sm:$0xff]
  %v1749 = vld [vmem:[%s1 + $0x6e8] sm:$0xff]
  %v1750 = vld [vmem:[%s1 + $0x6f0] sm:$0xff]
  %v1751 = vld [vmem:[%s1 + $0x6f8] sm:$0xff]
  %v1752 = vld [vmem:[%s1 + $0x700] sm:$0xff]
  %v1753 = vld [vmem:[%s1 + $0x708] sm:$0xff]
  %v1754 = vld [vmem:[%s1 + $0x710] sm:$0xff]
  %v1755 = vld [vmem:[%s1 + $0x718] sm:$0xff]
  %v1756 = vld [vmem:[%s1 + $0x720] sm:$0xff]
  %v1757 = vld [vmem:[%s1 + $0x728] sm:$0xff]
  %v1758 = vld [vmem:[%s1 + $0x730] sm:$0xff]
  %v1759 = vld [vmem:[%s1 + $0x738] sm:$0xff]
  %v1760 = vld [vmem:[%s1 + $0x740] sm:$0xff]
  %v1761 = vld [vmem:[%s1 + $0x748] sm:$0xff]
  %v1762 = vld [vmem:[%s1 + $0x750] sm:$0xff]
  %v1763 = vld [vmem:[%s1 + $0x758] sm:$0xff]
  %v1764 = vld [vmem:[%s1 + $0x760] sm:$0xff]
  %v1765 = vld [vmem:[%s1 + $0x768] sm:$0xff]
  %v1766 = vld [vmem:[%s1 + $0x770] sm:$0xff]
  %v1767 = vld [vmem:[%s1 + $0x778] sm:$0xff]
  %v1768 = vld [vmem:[%s1 + $0x780] sm:$0xff]
  %v1769 = vld [vmem:[%s1 + $0x788] sm:$0xff]
  %v1770 = vld [vmem:[%s1 + $0x790] sm:$0xff]
  %v1771 = vld [vmem:[%s1 + $0x798] sm:$0xff]
  %v1772 = vld [vmem:[%s1 + $0x7a0] sm:$0xff]
  %v1773 = vld [vmem:[%s1 + $0x7a8] sm:$0xff]
  %v1774 = vld [vmem:[%s1 + $0x7b0] sm:$0xff]
  %v1775 = vld [vmem:[%s1 + $0x7b8] sm:$0xff]
  %v1776 = vld [vmem:[%s1 + $0x7c0] sm:$0xff]
  %v1777 = vld [vmem:[%s1 + $0x7c8] sm:$0xff]
  %v1778 = vld [vmem:[%s1 + $0x7d0] sm:$0xff]
  %v1779 = vld [vmem:[%s1 + $0x7d8] sm:$0xff]
  %v1780 = vld [vmem:[%s1 + $0x7e0] sm:$0xff]
  %v1781 = vld [vmem:[%s1 + $0x7e8] sm:$0xff]
  %v1782 = vld [vmem:[%s1 + $0x7f0] sm:$0xff]
  %v1783 = vld [vmem:[%s1 + $0x7f8] sm:$0xff]
  %v1784 = vld [vmem:[%s1 + $0x800] sm:$0xff]
  %v1785 = vld [vmem:[%s1 + $0x808] sm:$0xff]
  %v1786 = vld [vmem:[%s1 + $0x810] sm:$0xff]
  %v1787 = vld [vmem:[%s1 + $0x818] sm:$0xff]
  %v1788 = vld [vmem:[%s1 + $0x820] sm:$0xff]
  %v1789 = vld [vmem:[%s1 + $0x828] sm:$0xff]
  %v1790 = vld [vmem:[%s1 + $0x830] sm:$0xff]
  %v1791 = vld [vmem:[%s1 + $0x838] sm:$0xff]
  %v1792 = vld [vmem:[%s1 + $0x840] sm:$0xff]
  %v1793 = vld [vmem:[%s1 + $0x848] sm:$0xff]
  %v1794 = vld [vmem:[%s1 + $0x850] sm:$0xff]
  %v1795 = vld [vmem:[%s1 + $0x858] sm:$0xff]
  %v1796 = vld [vmem:[%s1 + $0x860] sm:$0xff]
  %v1797 = vld [vmem:[%s1 + $0x868] sm:$0xff]
  %v1798 = vld [vmem:[%s1 + $0x870] sm:$0xff]
  %v1799 = vld [vmem:[%s1 + $0x878] sm:$0xff]
  %v1800 = vld [vmem:[%s1 + $0x880] sm:$0xff]
  %v1801 = vld [vmem:[%s1 + $0x888] sm:$0xff]
  %v1802 = vld [vmem:[%s1 + $0x890] sm:$0xff]
  %v1803 = vld [vmem:[%s1 + $0x898] sm:$0xff]
  %v1804 = vld [vmem:[%s1 + $0x8a0] sm:$0xff]
  %v1805 = vld [vmem:[%s1 + $0x8a8] sm:$0xff]
  %v1806 = vld [vmem:[%s1 + $0x8b0] sm:$0xff]
  %v1807 = vld [vmem:[%s1 + $0x8b8] sm:$0xff]
  %v1808 = vld [vmem:[%s1 + $0x8c0] sm:$0xff]
  %v1809 = vld [vmem:[%s1 + $0x8c8] sm:$0xff]
  %v1810 = vld [vmem:[%s1 + $0x8d0] sm:$0xff]
  %v1811 = vld [vmem:[%s1 + $0x8d8] sm:$0xff]
  %v1812 = vld [vmem:[%s1 + $0x8e0] sm:$0xff]
  %v1813 = vld [vmem:[%s1 + $0x8e8] sm:$0xff]
  %v1814 = vld [vmem:[%s1 + $0x8f0] sm:$0xff]
  %v1815 = vld [vmem:[%s1 + $0x8f8] sm:$0xff]
  %v1816 = vld [vmem:[%s1 + $0x900] sm:$0xff]
  %v1817 = vld [vmem:[%s1 + $0x908] sm:$0xff]
  %v1818 = vld [vmem:[%s1 + $0x910] sm:$0xff]
  %v1819 = vld [vmem:[%s1 + $0x918] sm:$0xff]
  %v1820 = vld [vmem:[%s1 + $0x920] sm:$0xff]
  %v1821 = vld [vmem:[%s1 + $0x928] sm:$0xff]
  %v1822 = vld [vmem:[%s1 + $0x930] sm:$0xff]
  %v1823 = vld [vmem:[%s1 + $0x938] sm:$0xff]
  %v1824 = vld [vmem:[%s1 + $0x940] sm:$0xff]
  %v1825 = vld [vmem:[%s1 + $0x948] sm:$0xff]
  %v1826 = vld [vmem:[%s1 + $0x950] sm:$0xff]
  %v1827 = vld [vmem:[%s1 + $0x958] sm:$0xff]
  %v1828 = vld [vmem:[%s1 + $0x960] sm:$0xff]
  %v1829 = vld [vmem:[%s1 + $0x968] sm:$0xff]
  %v1830 = vld [vmem:[%s1 + $0x970] sm:$0xff]
  %v1831 = vld [vmem:[%s1 + $0x978] sm:$0xff]
  %v1832 = vld [vmem:[%s1 + $0x980] sm:$0xff]
  %v1833 = vld [vmem:[%s1 + $0x988] sm:$0xff]
  %v1834 = vld [vmem:[%s1 + $0x990] sm:$0xff]
  %v1835 = vld [vmem:[%s1 + $0x998] sm:$0xff]
  %v1836 = vld [vmem:[%s1 + $0x9a0] sm:$0xff]
  %v1837 = vld [vmem:[%s1 + $0x9a8] sm:$0xff]
  %v1838 = vld [vmem:[%s1 + $0x9b0] sm:$0xff]
  %v1839 = vld [vmem:[%s1 + $0x9b8] sm:$0xff]
  %v1840 = vld [vmem:[%s1 + $0x9c0] sm:$0xff]
  %v1841 = vld [vmem:[%s1 + $0x9c8] sm:$0xff]
  %v1842 = vld [vmem:[%s1 + $0x9d0] sm:$0xff]
  %v1843 = vld [vmem:[%s1 + $0x9d8] sm:$0xff]
  %v1844 = vld [vmem:[%s1 + $0x9e0] sm:$0xff]
  %v1845 = vld [vmem:[%s1 + $0x9e8] sm:$0xff]
  %v1846 = vld [vmem:[%s1 + $0x9f0] sm:$0xff]
  %v1847 = vld [vmem:[%s1 + $0x9f8] sm:$0xff]
  %v1848 = vld [vmem:[%s1 + $0xa00] sm:$0xff]
  %v1849 = vld [vmem:[%s1 + $0xa08] sm:$0xff]
  %v1850 = vld [vmem:[%s1 + $0xa10] sm:$0xff]
  %v1851 = vld [vmem:[%s1 + $0xa18] sm:$0xff]
  %v1852 = vld [vmem:[%s1 + $0xa20] sm:$0xff]
  %v1853 = vld [vmem:[%s1 + $0xa28] sm:$0xff]
  %v1854 = vld [vmem:[%s1 + $0xa30] sm:$0xff]
  %v1855 = vld [vmem:[%s1 + $0xa38] sm:$0xff]
  %v1856 = vld [vmem:[%s1 + $0xa40] sm:$0xff]
  %v1857 = vld [vmem:[%s1 + $0xa48] sm:$0xff]
  %v1858 = vld [vmem:[%s1 + $0xa50] sm:$0xff]
  %v1859 = vld [vmem:[%s1 + $0xa58] sm:$0xff]
  %v1860 = vld [vmem:[%s1 + $0xa60] sm:$0xff]
  %v1861 = vld [vmem:[%s1 + $0xa68] sm:$0xff]
  %v1862 = vld [vmem:[%s1 + $0xa70] sm:$0xff]
  %v1863 = vld [vmem:[%s1 + $0xa78] sm:$0xff]
  %1865 = vset.pattern.permute.xlu0 0
  %1866 = vperm.xlu0 %1865, %v1360
  %v1867 = vpop.permute.xlu0 %1866
  %1870 = vset.pattern.permute.xlu0 0
  %1871 = vperm.xlu0 %1870, %v1361
  %v1872 = vpop.permute.xlu0 %1871
  %1875 = vset.pattern.permute.xlu0 0
  %1876 = vperm.xlu0 %1875, %v1362
  %v1877 = vpop.permute.xlu0 %1876
  %1880 = vset.pattern.permute.xlu0 0
  %1881 = vperm.xlu0 %1880, %v1363
  %v1882 = vpop.permute.xlu0 %1881
  %1885 = vset.pattern.permute.xlu0 0
  %1886 = vperm.xlu0 %1885, %v1364
  %v1887 = vpop.permute.xlu0 %1886
  %1890 = vset.pattern.permute.xlu0 0
  %1891 = vperm.xlu0 %1890, %v1365
  %v1892 = vpop.permute.xlu0 %1891
  %1895 = vset.pattern.permute.xlu0 0
  %1896 = vperm.xlu0 %1895, %v1366
  %v1897 = vpop.permute.xlu0 %1896
  %1900 = vset.pattern.permute.xlu0 0
  %1901 = vperm.xlu0 %1900, %v1367
  %v1902 = vpop.permute.xlu0 %1901
  %1905 = vset.pattern.permute.xlu0 0
  %1906 = vperm.xlu0 %1905, %v1368
  %v1907 = vpop.permute.xlu0 %1906
  %1910 = vset.pattern.permute.xlu0 0
  %1911 = vperm.xlu0 %1910, %v1369
  %v1912 = vpop.permute.xlu0 %1911
  %1915 = vset.pattern.permute.xlu0 0
  %1916 = vperm.xlu0 %1915, %v1370
  %v1917 = vpop.permute.xlu0 %1916
  %1920 = vset.pattern.permute.xlu0 0
  %1921 = vperm.xlu0 %1920, %v1371
  %v1922 = vpop.permute.xlu0 %1921
  %1925 = vset.pattern.permute.xlu0 0
  %1926 = vperm.xlu0 %1925, %v1372
  %v1927 = vpop.permute.xlu0 %1926
  %1930 = vset.pattern.permute.xlu0 0
  %1931 = vperm.xlu0 %1930, %v1373
  %v1932 = vpop.permute.xlu0 %1931
  %1935 = vset.pattern.permute.xlu0 0
  %1936 = vperm.xlu0 %1935, %v1374
  %v1937 = vpop.permute.xlu0 %1936
  %1940 = vset.pattern.permute.xlu0 0
  %1941 = vperm.xlu0 %1940, %v1375
  %v1942 = vpop.permute.xlu0 %1941
  %1945 = vset.pattern.permute.xlu0 0
  %1946 = vperm.xlu0 %1945, %v1376
  %v1947 = vpop.permute.xlu0 %1946
  %1950 = vset.pattern.permute.xlu0 0
  %1951 = vperm.xlu0 %1950, %v1377
  %v1952 = vpop.permute.xlu0 %1951
  %1955 = vset.pattern.permute.xlu0 0
  %1956 = vperm.xlu0 %1955, %v1378
  %v1957 = vpop.permute.xlu0 %1956
  %1960 = vset.pattern.permute.xlu0 0
  %1961 = vperm.xlu0 %1960, %v1379
  %v1962 = vpop.permute.xlu0 %1961
  %1965 = vset.pattern.permute.xlu0 0
  %1966 = vperm.xlu0 %1965, %v1380
  %v1967 = vpop.permute.xlu0 %1966
  %1970 = vset.pattern.permute.xlu0 0
  %1971 = vperm.xlu0 %1970, %v1381
  %v1972 = vpop.permute.xlu0 %1971
  %1975 = vset.pattern.permute.xlu0 0
  %1976 = vperm.xlu0 %1975, %v1382
  %v1977 = vpop.permute.xlu0 %1976
  %1980 = vset.pattern.permute.xlu0 0
  %1981 = vperm.xlu0 %1980, %v1383
  %v1982 = vpop.permute.xlu0 %1981
  %1985 = vset.pattern.permute.xlu0 0
  %1986 = vperm.xlu0 %1985, %v1384
  %v1987 = vpop.permute.xlu0 %1986
  %1990 = vset.pattern.permute.xlu0 0
  %1991 = vperm.xlu0 %1990, %v1385
  %v1992 = vpop.permute.xlu0 %1991
  %1995 = vset.pattern.permute.xlu0 0
  %1996 = vperm.xlu0 %1995, %v1386
  %v1997 = vpop.permute.xlu0 %1996
  %2000 = vset.pattern.permute.xlu0 0
  %2001 = vperm.xlu0 %2000, %v1387
  %v2002 = vpop.permute.xlu0 %2001
  %2005 = vset.pattern.permute.xlu0 0
  %2006 = vperm.xlu0 %2005, %v1388
  %v2007 = vpop.permute.xlu0 %2006
  %2010 = vset.pattern.permute.xlu0 0
  %2011 = vperm.xlu0 %2010, %v1389
  %v2012 = vpop.permute.xlu0 %2011
  %2015 = vset.pattern.permute.xlu0 0
  %2016 = vperm.xlu0 %2015, %v1390
  %v2017 = vpop.permute.xlu0 %2016
  %2020 = vset.pattern.permute.xlu0 0
  %2021 = vperm.xlu0 %2020, %v1391
  %v2022 = vpop.permute.xlu0 %2021
  %2025 = vset.pattern.permute.xlu0 0
  %2026 = vperm.xlu0 %2025, %v1392
  %v2027 = vpop.permute.xlu0 %2026
  %2030 = vset.pattern.permute.xlu0 0
  %2031 = vperm.xlu0 %2030, %v1393
  %v2032 = vpop.permute.xlu0 %2031
  %2035 = vset.pattern.permute.xlu0 0
  %2036 = vperm.xlu0 %2035, %v1394
  %v2037 = vpop.permute.xlu0 %2036
  %2040 = vset.pattern.permute.xlu0 0
  %2041 = vperm.xlu0 %2040, %v1395
  %v2042 = vpop.permute.xlu0 %2041
  %2045 = vset.pattern.permute.xlu0 0
  %2046 = vperm.xlu0 %2045, %v1396
  %v2047 = vpop.permute.xlu0 %2046
  %2050 = vset.pattern.permute.xlu0 0
  %2051 = vperm.xlu0 %2050, %v1397
  %v2052 = vpop.permute.xlu0 %2051
  %2055 = vset.pattern.permute.xlu0 0
  %2056 = vperm.xlu0 %2055, %v1398
  %v2057 = vpop.permute.xlu0 %2056
  %2060 = vset.pattern.permute.xlu0 0
  %2061 = vperm.xlu0 %2060, %v1399
  %v2062 = vpop.permute.xlu0 %2061
  %2065 = vset.pattern.permute.xlu0 0
  %2066 = vperm.xlu0 %2065, %v1400
  %v2067 = vpop.permute.xlu0 %2066
  %2070 = vset.pattern.permute.xlu0 0
  %2071 = vperm.xlu0 %2070, %v1401
  %v2072 = vpop.permute.xlu0 %2071
  %2075 = vset.pattern.permute.xlu0 0
  %2076 = vperm.xlu0 %2075, %v1402
  %v2077 = vpop.permute.xlu0 %2076
  %2080 = vset.pattern.permute.xlu0 0
  %2081 = vperm.xlu0 %2080, %v1403
  %v2082 = vpop.permute.xlu0 %2081
  %2085 = vset.pattern.permute.xlu0 0
  %2086 = vperm.xlu0 %2085, %v1404
  %v2087 = vpop.permute.xlu0 %2086
  %2090 = vset.pattern.permute.xlu0 0
  %2091 = vperm.xlu0 %2090, %v1405
  %v2092 = vpop.permute.xlu0 %2091
  %2095 = vset.pattern.permute.xlu0 0
  %2096 = vperm.xlu0 %2095, %v1406
  %v2097 = vpop.permute.xlu0 %2096
  %2100 = vset.pattern.permute.xlu0 0
  %2101 = vperm.xlu0 %2100, %v1407
  %v2102 = vpop.permute.xlu0 %2101
  %2105 = vset.pattern.permute.xlu0 0
  %2106 = vperm.xlu0 %2105, %v1408
  %v2107 = vpop.permute.xlu0 %2106
  %2110 = vset.pattern.permute.xlu0 0
  %2111 = vperm.xlu0 %2110, %v1409
  %v2112 = vpop.permute.xlu0 %2111
  %2115 = vset.pattern.permute.xlu0 0
  %2116 = vperm.xlu0 %2115, %v1410
  %v2117 = vpop.permute.xlu0 %2116
  %2120 = vset.pattern.permute.xlu0 0
  %2121 = vperm.xlu0 %2120, %v1411
  %v2122 = vpop.permute.xlu0 %2121
  %2125 = vset.pattern.permute.xlu0 0
  %2126 = vperm.xlu0 %2125, %v1412
  %v2127 = vpop.permute.xlu0 %2126
  %2130 = vset.pattern.permute.xlu0 0
  %2131 = vperm.xlu0 %2130, %v1413
  %v2132 = vpop.permute.xlu0 %2131
  %2135 = vset.pattern.permute.xlu0 0
  %2136 = vperm.xlu0 %2135, %v1414
  %v2137 = vpop.permute.xlu0 %2136
  %2140 = vset.pattern.permute.xlu0 0
  %2141 = vperm.xlu0 %2140, %v1415
  %v2142 = vpop.permute.xlu0 %2141
  %2145 = vset.pattern.permute.xlu0 0
  %2146 = vperm.xlu0 %2145, %v1416
  %v2147 = vpop.permute.xlu0 %2146
  %2150 = vset.pattern.permute.xlu0 0
  %2151 = vperm.xlu0 %2150, %v1417
  %v2152 = vpop.permute.xlu0 %2151
  %2155 = vset.pattern.permute.xlu0 0
  %2156 = vperm.xlu0 %2155, %v1418
  %v2157 = vpop.permute.xlu0 %2156
  %2160 = vset.pattern.permute.xlu0 0
  %2161 = vperm.xlu0 %2160, %v1419
  %v2162 = vpop.permute.xlu0 %2161
  %2165 = vset.pattern.permute.xlu0 0
  %2166 = vperm.xlu0 %2165, %v1420
  %v2167 = vpop.permute.xlu0 %2166
  %2170 = vset.pattern.permute.xlu0 0
  %2171 = vperm.xlu0 %2170, %v1421
  %v2172 = vpop.permute.xlu0 %2171
  %2175 = vset.pattern.permute.xlu0 0
  %2176 = vperm.xlu0 %2175, %v1422
  %v2177 = vpop.permute.xlu0 %2176
  %2180 = vset.pattern.permute.xlu0 0
  %2181 = vperm.xlu0 %2180, %v1423
  %v2182 = vpop.permute.xlu0 %2181
  %2185 = vset.pattern.permute.xlu0 0
  %2186 = vperm.xlu0 %2185, %v1424
  %v2187 = vpop.permute.xlu0 %2186
  %2190 = vset.pattern.permute.xlu0 0
  %2191 = vperm.xlu0 %2190, %v1425
  %v2192 = vpop.permute.xlu0 %2191
  %2195 = vset.pattern.permute.xlu0 0
  %2196 = vperm.xlu0 %2195, %v1426
  %v2197 = vpop.permute.xlu0 %2196
  %2200 = vset.pattern.permute.xlu0 0
  %2201 = vperm.xlu0 %2200, %v1427
  %v2202 = vpop.permute.xlu0 %2201
  %2205 = vset.pattern.permute.xlu0 0
  %2206 = vperm.xlu0 %2205, %v1428
  %v2207 = vpop.permute.xlu0 %2206
  %2210 = vset.pattern.permute.xlu0 0
  %2211 = vperm.xlu0 %2210, %v1429
  %v2212 = vpop.permute.xlu0 %2211
  %2215 = vset.pattern.permute.xlu0 0
  %2216 = vperm.xlu0 %2215, %v1430
  %v2217 = vpop.permute.xlu0 %2216
  %2220 = vset.pattern.permute.xlu0 0
  %2221 = vperm.xlu0 %2220, %v1431
  %v2222 = vpop.permute.xlu0 %2221
  %2225 = vset.pattern.permute.xlu0 0
  %2226 = vperm.xlu0 %2225, %v1432
  %v2227 = vpop.permute.xlu0 %2226
  %2230 = vset.pattern.permute.xlu0 0
  %2231 = vperm.xlu0 %2230, %v1433
  %v2232 = vpop.permute.xlu0 %2231
  %2235 = vset.pattern.permute.xlu0 0
  %2236 = vperm.xlu0 %2235, %v1434
  %v2237 = vpop.permute.xlu0 %2236
  %2240 = vset.pattern.permute.xlu0 0
  %2241 = vperm.xlu0 %2240, %v1435
  %v2242 = vpop.permute.xlu0 %2241
  %2245 = vset.pattern.permute.xlu0 0
  %2246 = vperm.xlu0 %2245, %v1436
  %v2247 = vpop.permute.xlu0 %2246
  %2250 = vset.pattern.permute.xlu0 0
  %2251 = vperm.xlu0 %2250, %v1437
  %v2252 = vpop.permute.xlu0 %2251
  %2255 = vset.pattern.permute.xlu0 0
  %2256 = vperm.xlu0 %2255, %v1438
  %v2257 = vpop.permute.xlu0 %2256
  %2260 = vset.pattern.permute.xlu0 0
  %2261 = vperm.xlu0 %2260, %v1439
  %v2262 = vpop.permute.xlu0 %2261
  %2265 = vset.pattern.permute.xlu0 0
  %2266 = vperm.xlu0 %2265, %v1440
  %v2267 = vpop.permute.xlu0 %2266
  %2270 = vset.pattern.permute.xlu0 0
  %2271 = vperm.xlu0 %2270, %v1441
  %v2272 = vpop.permute.xlu0 %2271
  %2275 = vset.pattern.permute.xlu0 0
  %2276 = vperm.xlu0 %2275, %v1442
  %v2277 = vpop.permute.xlu0 %2276
  %2280 = vset.pattern.permute.xlu0 0
  %2281 = vperm.xlu0 %2280, %v1443
  %v2282 = vpop.permute.xlu0 %2281
  %2285 = vset.pattern.permute.xlu0 0
  %2286 = vperm.xlu0 %2285, %v1444
  %v2287 = vpop.permute.xlu0 %2286
  %2290 = vset.pattern.permute.xlu0 0
  %2291 = vperm.xlu0 %2290, %v1445
  %v2292 = vpop.permute.xlu0 %2291
  %2295 = vset.pattern.permute.xlu0 0
  %2296 = vperm.xlu0 %2295, %v1446
  %v2297 = vpop.permute.xlu0 %2296
  %2300 = vset.pattern.permute.xlu0 0
  %2301 = vperm.xlu0 %2300, %v1447
  %v2302 = vpop.permute.xlu0 %2301
  %2305 = vset.pattern.permute.xlu0 0
  %2306 = vperm.xlu0 %2305, %v1448
  %v2307 = vpop.permute.xlu0 %2306
  %2310 = vset.pattern.permute.xlu0 0
  %2311 = vperm.xlu0 %2310, %v1449
  %v2312 = vpop.permute.xlu0 %2311
  %2315 = vset.pattern.permute.xlu0 0
  %2316 = vperm.xlu0 %2315, %v1450
  %v2317 = vpop.permute.xlu0 %2316
  %2320 = vset.pattern.permute.xlu0 0
  %2321 = vperm.xlu0 %2320, %v1451
  %v2322 = vpop.permute.xlu0 %2321
  %2325 = vset.pattern.permute.xlu0 0
  %2326 = vperm.xlu0 %2325, %v1452
  %v2327 = vpop.permute.xlu0 %2326
  %2330 = vset.pattern.permute.xlu0 0
  %2331 = vperm.xlu0 %2330, %v1453
  %v2332 = vpop.permute.xlu0 %2331
  %2335 = vset.pattern.permute.xlu0 0
  %2336 = vperm.xlu0 %2335, %v1454
  %v2337 = vpop.permute.xlu0 %2336
  %2340 = vset.pattern.permute.xlu0 0
  %2341 = vperm.xlu0 %2340, %v1455
  %v2342 = vpop.permute.xlu0 %2341
  %2345 = vset.pattern.permute.xlu0 0
  %2346 = vperm.xlu0 %2345, %v1456
  %v2347 = vpop.permute.xlu0 %2346
  %2350 = vset.pattern.permute.xlu0 0
  %2351 = vperm.xlu0 %2350, %v1457
  %v2352 = vpop.permute.xlu0 %2351
  %2355 = vset.pattern.permute.xlu0 0
  %2356 = vperm.xlu0 %2355, %v1458
  %v2357 = vpop.permute.xlu0 %2356
  %2360 = vset.pattern.permute.xlu0 0
  %2361 = vperm.xlu0 %2360, %v1459
  %v2362 = vpop.permute.xlu0 %2361
  %2365 = vset.pattern.permute.xlu0 0
  %2366 = vperm.xlu0 %2365, %v1460
  %v2367 = vpop.permute.xlu0 %2366
  %2370 = vset.pattern.permute.xlu0 0
  %2371 = vperm.xlu0 %2370, %v1461
  %v2372 = vpop.permute.xlu0 %2371
  %2375 = vset.pattern.permute.xlu0 0
  %2376 = vperm.xlu0 %2375, %v1462
  %v2377 = vpop.permute.xlu0 %2376
  %2380 = vset.pattern.permute.xlu0 0
  %2381 = vperm.xlu0 %2380, %v1463
  %v2382 = vpop.permute.xlu0 %2381
  %2385 = vset.pattern.permute.xlu0 0
  %2386 = vperm.xlu0 %2385, %v1464
  %v2387 = vpop.permute.xlu0 %2386
  %2390 = vset.pattern.permute.xlu0 0
  %2391 = vperm.xlu0 %2390, %v1465
  %v2392 = vpop.permute.xlu0 %2391
  %2395 = vset.pattern.permute.xlu0 0
  %2396 = vperm.xlu0 %2395, %v1466
  %v2397 = vpop.permute.xlu0 %2396
  %2400 = vset.pattern.permute.xlu0 0
  %2401 = vperm.xlu0 %2400, %v1467
  %v2402 = vpop.permute.xlu0 %2401
  %2405 = vset.pattern.permute.xlu0 0
  %2406 = vperm.xlu0 %2405, %v1468
  %v2407 = vpop.permute.xlu0 %2406
  %2410 = vset.pattern.permute.xlu0 0
  %2411 = vperm.xlu0 %2410, %v1469
  %v2412 = vpop.permute.xlu0 %2411
  %2415 = vset.pattern.permute.xlu0 0
  %2416 = vperm.xlu0 %2415, %v1470
  %v2417 = vpop.permute.xlu0 %2416
  %2420 = vset.pattern.permute.xlu0 0
  %2421 = vperm.xlu0 %2420, %v1471
  %v2422 = vpop.permute.xlu0 %2421
  %2425 = vset.pattern.permute.xlu0 0
  %2426 = vperm.xlu0 %2425, %v1472
  %v2427 = vpop.permute.xlu0 %2426
  %2430 = vset.pattern.permute.xlu0 0
  %2431 = vperm.xlu0 %2430, %v1473
  %v2432 = vpop.permute.xlu0 %2431
  %2435 = vset.pattern.permute.xlu0 0
  %2436 = vperm.xlu0 %2435, %v1474
  %v2437 = vpop.permute.xlu0 %2436
  %2440 = vset.pattern.permute.xlu0 0
  %2441 = vperm.xlu0 %2440, %v1475
  %v2442 = vpop.permute.xlu0 %2441
  %2445 = vset.pattern.permute.xlu0 0
  %2446 = vperm.xlu0 %2445, %v1476
  %v2447 = vpop.permute.xlu0 %2446
  %2450 = vset.pattern.permute.xlu0 0
  %2451 = vperm.xlu0 %2450, %v1477
  %v2452 = vpop.permute.xlu0 %2451
  %2455 = vset.pattern.permute.xlu0 0
  %2456 = vperm.xlu0 %2455, %v1478
  %v2457 = vpop.permute.xlu0 %2456
  %2460 = vset.pattern.permute.xlu0 0
  %2461 = vperm.xlu0 %2460, %v1479
  %v2462 = vpop.permute.xlu0 %2461
  %2465 = vset.pattern.permute.xlu0 0
  %2466 = vperm.xlu0 %2465, %v1480
  %v2467 = vpop.permute.xlu0 %2466
  %2470 = vset.pattern.permute.xlu0 0
  %2471 = vperm.xlu0 %2470, %v1481
  %v2472 = vpop.permute.xlu0 %2471
  %2475 = vset.pattern.permute.xlu0 0
  %2476 = vperm.xlu0 %2475, %v1482
  %v2477 = vpop.permute.xlu0 %2476
  %2480 = vset.pattern.permute.xlu0 0
  %2481 = vperm.xlu0 %2480, %v1483
  %v2482 = vpop.permute.xlu0 %2481
  %2485 = vset.pattern.permute.xlu0 0
  %2486 = vperm.xlu0 %2485, %v1484
  %v2487 = vpop.permute.xlu0 %2486
  %2490 = vset.pattern.permute.xlu0 0
  %2491 = vperm.xlu0 %2490, %v1485
  %v2492 = vpop.permute.xlu0 %2491
  %2495 = vset.pattern.permute.xlu0 0
  %2496 = vperm.xlu0 %2495, %v1486
  %v2497 = vpop.permute.xlu0 %2496
  %2500 = vset.pattern.permute.xlu0 0
  %2501 = vperm.xlu0 %2500, %v1487
  %v2502 = vpop.permute.xlu0 %2501
  %2505 = vset.pattern.permute.xlu0 0
  %2506 = vperm.xlu0 %2505, %v1488
  %v2507 = vpop.permute.xlu0 %2506
  %2510 = vset.pattern.permute.xlu0 0
  %2511 = vperm.xlu0 %2510, %v1489
  %v2512 = vpop.permute.xlu0 %2511
  %2515 = vset.pattern.permute.xlu0 0
  %2516 = vperm.xlu0 %2515, %v1490
  %v2517 = vpop.permute.xlu0 %2516
  %2520 = vset.pattern.permute.xlu0 0
  %2521 = vperm.xlu0 %2520, %v1491
  %v2522 = vpop.permute.xlu0 %2521
  %2525 = vset.pattern.permute.xlu0 0
  %2526 = vperm.xlu0 %2525, %v1492
  %v2527 = vpop.permute.xlu0 %2526
  %2530 = vset.pattern.permute.xlu0 0
  %2531 = vperm.xlu0 %2530, %v1493
  %v2532 = vpop.permute.xlu0 %2531
  %2535 = vset.pattern.permute.xlu0 0
  %2536 = vperm.xlu0 %2535, %v1494
  %v2537 = vpop.permute.xlu0 %2536
  %2540 = vset.pattern.permute.xlu0 0
  %2541 = vperm.xlu0 %2540, %v1495
  %v2542 = vpop.permute.xlu0 %2541
  %2545 = vset.pattern.permute.xlu0 0
  %2546 = vperm.xlu0 %2545, %v1496
  %v2547 = vpop.permute.xlu0 %2546
  %2550 = vset.pattern.permute.xlu0 0
  %2551 = vperm.xlu0 %2550, %v1497
  %v2552 = vpop.permute.xlu0 %2551
  %2555 = vset.pattern.permute.xlu0 0
  %2556 = vperm.xlu0 %2555, %v1498
  %v2557 = vpop.permute.xlu0 %2556
  %2560 = vset.pattern.permute.xlu0 0
  %2561 = vperm.xlu0 %2560, %v1499
  %v2562 = vpop.permute.xlu0 %2561
  %2565 = vset.pattern.permute.xlu0 0
  %2566 = vperm.xlu0 %2565, %v1500
  %v2567 = vpop.permute.xlu0 %2566
  %2570 = vset.pattern.permute.xlu0 0
  %2571 = vperm.xlu0 %2570, %v1501
  %v2572 = vpop.permute.xlu0 %2571
  %2575 = vset.pattern.permute.xlu0 0
  %2576 = vperm.xlu0 %2575, %v1502
  %v2577 = vpop.permute.xlu0 %2576
  %2580 = vset.pattern.permute.xlu0 0
  %2581 = vperm.xlu0 %2580, %v1503
  %v2582 = vpop.permute.xlu0 %2581
  %2585 = vset.pattern.permute.xlu0 0
  %2586 = vperm.xlu0 %2585, %v1504
  %v2587 = vpop.permute.xlu0 %2586
  %2590 = vset.pattern.permute.xlu0 0
  %2591 = vperm.xlu0 %2590, %v1505
  %v2592 = vpop.permute.xlu0 %2591
  %2595 = vset.pattern.permute.xlu0 0
  %2596 = vperm.xlu0 %2595, %v1506
  %v2597 = vpop.permute.xlu0 %2596
  %2600 = vset.pattern.permute.xlu0 0
  %2601 = vperm.xlu0 %2600, %v1507
  %v2602 = vpop.permute.xlu0 %2601
  %2605 = vset.pattern.permute.xlu0 0
  %2606 = vperm.xlu0 %2605, %v1508
  %v2607 = vpop.permute.xlu0 %2606
  %2610 = vset.pattern.permute.xlu0 0
  %2611 = vperm.xlu0 %2610, %v1509
  %v2612 = vpop.permute.xlu0 %2611
  %2615 = vset.pattern.permute.xlu0 0
  %2616 = vperm.xlu0 %2615, %v1510
  %v2617 = vpop.permute.xlu0 %2616
  %2620 = vset.pattern.permute.xlu0 0
  %2621 = vperm.xlu0 %2620, %v1511
  %v2622 = vpop.permute.xlu0 %2621
  %2625 = vset.pattern.permute.xlu0 0
  %2626 = vperm.xlu0 %2625, %v1512
  %v2627 = vpop.permute.xlu0 %2626
  %2630 = vset.pattern.permute.xlu0 0
  %2631 = vperm.xlu0 %2630, %v1513
  %v2632 = vpop.permute.xlu0 %2631
  %2635 = vset.pattern.permute.xlu0 0
  %2636 = vperm.xlu0 %2635, %v1514
  %v2637 = vpop.permute.xlu0 %2636
  %2640 = vset.pattern.permute.xlu0 0
  %2641 = vperm.xlu0 %2640, %v1515
  %v2642 = vpop.permute.xlu0 %2641
  %2645 = vset.pattern.permute.xlu0 0
  %2646 = vperm.xlu0 %2645, %v1516
  %v2647 = vpop.permute.xlu0 %2646
  %2650 = vset.pattern.permute.xlu0 0
  %2651 = vperm.xlu0 %2650, %v1517
  %v2652 = vpop.permute.xlu0 %2651
  %2655 = vset.pattern.permute.xlu0 0
  %2656 = vperm.xlu0 %2655, %v1518
  %v2657 = vpop.permute.xlu0 %2656
  %2660 = vset.pattern.permute.xlu0 0
  %2661 = vperm.xlu0 %2660, %v1519
  %v2662 = vpop.permute.xlu0 %2661
  %2665 = vset.pattern.permute.xlu0 0
  %2666 = vperm.xlu0 %2665, %v1520
  %v2667 = vpop.permute.xlu0 %2666
  %2670 = vset.pattern.permute.xlu0 0
  %2671 = vperm.xlu0 %2670, %v1521
  %v2672 = vpop.permute.xlu0 %2671
  %2675 = vset.pattern.permute.xlu0 0
  %2676 = vperm.xlu0 %2675, %v1522
  %v2677 = vpop.permute.xlu0 %2676
  %2680 = vset.pattern.permute.xlu0 0
  %2681 = vperm.xlu0 %2680, %v1523
  %v2682 = vpop.permute.xlu0 %2681
  %2685 = vset.pattern.permute.xlu0 0
  %2686 = vperm.xlu0 %2685, %v1524
  %v2687 = vpop.permute.xlu0 %2686
  %2690 = vset.pattern.permute.xlu0 0
  %2691 = vperm.xlu0 %2690, %v1525
  %v2692 = vpop.permute.xlu0 %2691
  %2695 = vset.pattern.permute.xlu0 0
  %2696 = vperm.xlu0 %2695, %v1526
  %v2697 = vpop.permute.xlu0 %2696
  %2700 = vset.pattern.permute.xlu0 0
  %2701 = vperm.xlu0 %2700, %v1527
  %v2702 = vpop.permute.xlu0 %2701
  %v2704 = vmul.f32 %v1867, %v1528
  %v2705 = vmul.f32 %v1867, %v1529
  %v2706 = vmul.f32 %v1872, %v1530
  %v2707 = vmul.f32 %v1872, %v1531
  %v2708 = vmul.f32 %v1877, %v1532
  %v2709 = vmul.f32 %v1877, %v1533
  %v2710 = vmul.f32 %v1882, %v1534
  %v2711 = vmul.f32 %v1882, %v1535
  %v2712 = vmul.f32 %v1887, %v1536
  %v2713 = vmul.f32 %v1887, %v1537
  %v2714 = vmul.f32 %v1892, %v1538
  %v2715 = vmul.f32 %v1892, %v1539
  %v2716 = vmul.f32 %v1897, %v1540
  %v2717 = vmul.f32 %v1897, %v1541
  %v2718 = vmul.f32 %v1902, %v1542
  %v2719 = vmul.f32 %v1902, %v1543
  %v2720 = vmul.f32 %v1907, %v1544
  %v2721 = vmul.f32 %v1907, %v1545
  %v2722 = vmul.f32 %v1912, %v1546
  %v2723 = vmul.f32 %v1912, %v1547
  %v2724 = vmul.f32 %v1917, %v1548
  %v2725 = vmul.f32 %v1917, %v1549
  %v2726 = vmul.f32 %v1922, %v1550
  %v2727 = vmul.f32 %v1922, %v1551
  %v2728 = vmul.f32 %v1927, %v1552
  %v2729 = vmul.f32 %v1927, %v1553
  %v2730 = vmul.f32 %v1932, %v1554
  %v2731 = vmul.f32 %v1932, %v1555
  %v2732 = vmul.f32 %v1937, %v1556
  %v2733 = vmul.f32 %v1937, %v1557
  %v2734 = vmul.f32 %v1942, %v1558
  %v2735 = vmul.f32 %v1942, %v1559
  %v2736 = vmul.f32 %v1947, %v1560
  %v2737 = vmul.f32 %v1947, %v1561
  %v2738 = vmul.f32 %v1952, %v1562
  %v2739 = vmul.f32 %v1952, %v1563
  %v2740 = vmul.f32 %v1957, %v1564
  %v2741 = vmul.f32 %v1957, %v1565
  %v2742 = vmul.f32 %v1962, %v1566
  %v2743 = vmul.f32 %v1962, %v1567
  %v2744 = vmul.f32 %v1967, %v1568
  %v2745 = vmul.f32 %v1967, %v1569
  %v2746 = vmul.f32 %v1972, %v1570
  %v2747 = vmul.f32 %v1972, %v1571
  %v2748 = vmul.f32 %v1977, %v1572
  %v2749 = vmul.f32 %v1977, %v1573
  %v2750 = vmul.f32 %v1982, %v1574
  %v2751 = vmul.f32 %v1982, %v1575
  %v2752 = vmul.f32 %v1987, %v1576
  %v2753 = vmul.f32 %v1987, %v1577
  %v2754 = vmul.f32 %v1992, %v1578
  %v2755 = vmul.f32 %v1992, %v1579
  %v2756 = vmul.f32 %v1997, %v1580
  %v2757 = vmul.f32 %v1997, %v1581
  %v2758 = vmul.f32 %v2002, %v1582
  %v2759 = vmul.f32 %v2002, %v1583
  %v2760 = vmul.f32 %v2007, %v1584
  %v2761 = vmul.f32 %v2007, %v1585
  %v2762 = vmul.f32 %v2012, %v1586
  %v2763 = vmul.f32 %v2012, %v1587
  %v2764 = vmul.f32 %v2017, %v1588
  %v2765 = vmul.f32 %v2017, %v1589
  %v2766 = vmul.f32 %v2022, %v1590
  %v2767 = vmul.f32 %v2022, %v1591
  %v2768 = vmul.f32 %v2027, %v1592
  %v2769 = vmul.f32 %v2027, %v1593
  %v2770 = vmul.f32 %v2032, %v1594
  %v2771 = vmul.f32 %v2032, %v1595
  %v2772 = vmul.f32 %v2037, %v1596
  %v2773 = vmul.f32 %v2037, %v1597
  %v2774 = vmul.f32 %v2042, %v1598
  %v2775 = vmul.f32 %v2042, %v1599
  %v2776 = vmul.f32 %v2047, %v1600
  %v2777 = vmul.f32 %v2047, %v1601
  %v2778 = vmul.f32 %v2052, %v1602
  %v2779 = vmul.f32 %v2052, %v1603
  %v2780 = vmul.f32 %v2057, %v1604
  %v2781 = vmul.f32 %v2057, %v1605
  %v2782 = vmul.f32 %v2062, %v1606
  %v2783 = vmul.f32 %v2062, %v1607
  %v2784 = vmul.f32 %v2067, %v1608
  %v2785 = vmul.f32 %v2067, %v1609
  %v2786 = vmul.f32 %v2072, %v1610
  %v2787 = vmul.f32 %v2072, %v1611
  %v2788 = vmul.f32 %v2077, %v1612
  %v2789 = vmul.f32 %v2077, %v1613
  %v2790 = vmul.f32 %v2082, %v1614
  %v2791 = vmul.f32 %v2082, %v1615
  %v2792 = vmul.f32 %v2087, %v1616
  %v2793 = vmul.f32 %v2087, %v1617
  %v2794 = vmul.f32 %v2092, %v1618
  %v2795 = vmul.f32 %v2092, %v1619
  %v2796 = vmul.f32 %v2097, %v1620
  %v2797 = vmul.f32 %v2097, %v1621
  %v2798 = vmul.f32 %v2102, %v1622
  %v2799 = vmul.f32 %v2102, %v1623
  %v2800 = vmul.f32 %v2107, %v1624
  %v2801 = vmul.f32 %v2107, %v1625
  %v2802 = vmul.f32 %v2112, %v1626
  %v2803 = vmul.f32 %v2112, %v1627
  %v2804 = vmul.f32 %v2117, %v1628
  %v2805 = vmul.f32 %v2117, %v1629
  %v2806 = vmul.f32 %v2122, %v1630
  %v2807 = vmul.f32 %v2122, %v1631
  %v2808 = vmul.f32 %v2127, %v1632
  %v2809 = vmul.f32 %v2127, %v1633
  %v2810 = vmul.f32 %v2132, %v1634
  %v2811 = vmul.f32 %v2132, %v1635
  %v2812 = vmul.f32 %v2137, %v1636
  %v2813 = vmul.f32 %v2137, %v1637
  %v2814 = vmul.f32 %v2142, %v1638
  %v2815 = vmul.f32 %v2142, %v1639
  %v2816 = vmul.f32 %v2147, %v1640
  %v2817 = vmul.f32 %v2147, %v1641
  %v2818 = vmul.f32 %v2152, %v1642
  %v2819 = vmul.f32 %v2152, %v1643
  %v2820 = vmul.f32 %v2157, %v1644
  %v2821 = vmul.f32 %v2157, %v1645
  %v2822 = vmul.f32 %v2162, %v1646
  %v2823 = vmul.f32 %v2162, %v1647
  %v2824 = vmul.f32 %v2167, %v1648
  %v2825 = vmul.f32 %v2167, %v1649
  %v2826 = vmul.f32 %v2172, %v1650
  %v2827 = vmul.f32 %v2172, %v1651
  %v2828 = vmul.f32 %v2177, %v1652
  %v2829 = vmul.f32 %v2177, %v1653
  %v2830 = vmul.f32 %v2182, %v1654
  %v2831 = vmul.f32 %v2182, %v1655
  %v2832 = vmul.f32 %v2187, %v1656
  %v2833 = vmul.f32 %v2187, %v1657
  %v2834 = vmul.f32 %v2192, %v1658
  %v2835 = vmul.f32 %v2192, %v1659
  %v2836 = vmul.f32 %v2197, %v1660
  %v2837 = vmul.f32 %v2197, %v1661
  %v2838 = vmul.f32 %v2202, %v1662
  %v2839 = vmul.f32 %v2202, %v1663
  %v2840 = vmul.f32 %v2207, %v1664
  %v2841 = vmul.f32 %v2207, %v1665
  %v2842 = vmul.f32 %v2212, %v1666
  %v2843 = vmul.f32 %v2212, %v1667
  %v2844 = vmul.f32 %v2217, %v1668
  %v2845 = vmul.f32 %v2217, %v1669
  %v2846 = vmul.f32 %v2222, %v1670
  %v2847 = vmul.f32 %v2222, %v1671
  %v2848 = vmul.f32 %v2227, %v1672
  %v2849 = vmul.f32 %v2227, %v1673
  %v2850 = vmul.f32 %v2232, %v1674
  %v2851 = vmul.f32 %v2232, %v1675
  %v2852 = vmul.f32 %v2237, %v1676
  %v2853 = vmul.f32 %v2237, %v1677
  %v2854 = vmul.f32 %v2242, %v1678
  %v2855 = vmul.f32 %v2242, %v1679
  %v2856 = vmul.f32 %v2247, %v1680
  %v2857 = vmul.f32 %v2247, %v1681
  %v2858 = vmul.f32 %v2252, %v1682
  %v2859 = vmul.f32 %v2252, %v1683
  %v2860 = vmul.f32 %v2257, %v1684
  %v2861 = vmul.f32 %v2257, %v1685
  %v2862 = vmul.f32 %v2262, %v1686
  %v2863 = vmul.f32 %v2262, %v1687
  %v2864 = vmul.f32 %v2267, %v1688
  %v2865 = vmul.f32 %v2267, %v1689
  %v2866 = vmul.f32 %v2272, %v1690
  %v2867 = vmul.f32 %v2272, %v1691
  %v2868 = vmul.f32 %v2277, %v1692
  %v2869 = vmul.f32 %v2277, %v1693
  %v2870 = vmul.f32 %v2282, %v1694
  %v2871 = vmul.f32 %v2282, %v1695
  %v2872 = vmul.f32 %v2287, %v1696
  %v2873 = vmul.f32 %v2287, %v1697
  %v2874 = vmul.f32 %v2292, %v1698
  %v2875 = vmul.f32 %v2292, %v1699
  %v2876 = vmul.f32 %v2297, %v1700
  %v2877 = vmul.f32 %v2297, %v1701
  %v2878 = vmul.f32 %v2302, %v1702
  %v2879 = vmul.f32 %v2302, %v1703
  %v2880 = vmul.f32 %v2307, %v1704
  %v2881 = vmul.f32 %v2307, %v1705
  %v2882 = vmul.f32 %v2312, %v1706
  %v2883 = vmul.f32 %v2312, %v1707
  %v2884 = vmul.f32 %v2317, %v1708
  %v2885 = vmul.f32 %v2317, %v1709
  %v2886 = vmul.f32 %v2322, %v1710
  %v2887 = vmul.f32 %v2322, %v1711
  %v2888 = vmul.f32 %v2327, %v1712
  %v2889 = vmul.f32 %v2327, %v1713
  %v2890 = vmul.f32 %v2332, %v1714
  %v2891 = vmul.f32 %v2332, %v1715
  %v2892 = vmul.f32 %v2337, %v1716
  %v2893 = vmul.f32 %v2337, %v1717
  %v2894 = vmul.f32 %v2342, %v1718
  %v2895 = vmul.f32 %v2342, %v1719
  %v2896 = vmul.f32 %v2347, %v1720
  %v2897 = vmul.f32 %v2347, %v1721
  %v2898 = vmul.f32 %v2352, %v1722
  %v2899 = vmul.f32 %v2352, %v1723
  %v2900 = vmul.f32 %v2357, %v1724
  %v2901 = vmul.f32 %v2357, %v1725
  %v2902 = vmul.f32 %v2362, %v1726
  %v2903 = vmul.f32 %v2362, %v1727
  %v2904 = vmul.f32 %v2367, %v1728
  %v2905 = vmul.f32 %v2367, %v1729
  %v2906 = vmul.f32 %v2372, %v1730
  %v2907 = vmul.f32 %v2372, %v1731
  %v2908 = vmul.f32 %v2377, %v1732
  %v2909 = vmul.f32 %v2377, %v1733
  %v2910 = vmul.f32 %v2382, %v1734
  %v2911 = vmul.f32 %v2382, %v1735
  %v2912 = vmul.f32 %v2387, %v1736
  %v2913 = vmul.f32 %v2387, %v1737
  %v2914 = vmul.f32 %v2392, %v1738
  %v2915 = vmul.f32 %v2392, %v1739
  %v2916 = vmul.f32 %v2397, %v1740
  %v2917 = vmul.f32 %v2397, %v1741
  %v2918 = vmul.f32 %v2402, %v1742
  %v2919 = vmul.f32 %v2402, %v1743
  %v2920 = vmul.f32 %v2407, %v1744
  %v2921 = vmul.f32 %v2407, %v1745
  %v2922 = vmul.f32 %v2412, %v1746
  %v2923 = vmul.f32 %v2412, %v1747
  %v2924 = vmul.f32 %v2417, %v1748
  %v2925 = vmul.f32 %v2417, %v1749
  %v2926 = vmul.f32 %v2422, %v1750
  %v2927 = vmul.f32 %v2422, %v1751
  %v2928 = vmul.f32 %v2427, %v1752
  %v2929 = vmul.f32 %v2427, %v1753
  %v2930 = vmul.f32 %v2432, %v1754
  %v2931 = vmul.f32 %v2432, %v1755
  %v2932 = vmul.f32 %v2437, %v1756
  %v2933 = vmul.f32 %v2437, %v1757
  %v2934 = vmul.f32 %v2442, %v1758
  %v2935 = vmul.f32 %v2442, %v1759
  %v2936 = vmul.f32 %v2447, %v1760
  %v2937 = vmul.f32 %v2447, %v1761
  %v2938 = vmul.f32 %v2452, %v1762
  %v2939 = vmul.f32 %v2452, %v1763
  %v2940 = vmul.f32 %v2457, %v1764
  %v2941 = vmul.f32 %v2457, %v1765
  %v2942 = vmul.f32 %v2462, %v1766
  %v2943 = vmul.f32 %v2462, %v1767
  %v2944 = vmul.f32 %v2467, %v1768
  %v2945 = vmul.f32 %v2467, %v1769
  %v2946 = vmul.f32 %v2472, %v1770
  %v2947 = vmul.f32 %v2472, %v1771
  %v2948 = vmul.f32 %v2477, %v1772
  %v2949 = vmul.f32 %v2477, %v1773
  %v2950 = vmul.f32 %v2482, %v1774
  %v2951 = vmul.f32 %v2482, %v1775
  %v2952 = vmul.f32 %v2487, %v1776
  %v2953 = vmul.f32 %v2487, %v1777
  %v2954 = vmul.f32 %v2492, %v1778
  %v2955 = vmul.f32 %v2492, %v1779
  %v2956 = vmul.f32 %v2497, %v1780
  %v2957 = vmul.f32 %v2497, %v1781
  %v2958 = vmul.f32 %v2502, %v1782
  %v2959 = vmul.f32 %v2502, %v1783
  %v2960 = vmul.f32 %v2507, %v1784
  %v2961 = vmul.f32 %v2507, %v1785
  %v2962 = vmul.f32 %v2512, %v1786
  %v2963 = vmul.f32 %v2512, %v1787
  %v2964 = vmul.f32 %v2517, %v1788
  %v2965 = vmul.f32 %v2517, %v1789
  %v2966 = vmul.f32 %v2522, %v1790
  %v2967 = vmul.f32 %v2522, %v1791
  %v2968 = vmul.f32 %v2527, %v1792
  %v2969 = vmul.f32 %v2527, %v1793
  %v2970 = vmul.f32 %v2532, %v1794
  %v2971 = vmul.f32 %v2532, %v1795
  %v2972 = vmul.f32 %v2537, %v1796
  %v2973 = vmul.f32 %v2537, %v1797
  %v2974 = vmul.f32 %v2542, %v1798
  %v2975 = vmul.f32 %v2542, %v1799
  %v2976 = vmul.f32 %v2547, %v1800
  %v2977 = vmul.f32 %v2547, %v1801
  %v2978 = vmul.f32 %v2552, %v1802
  %v2979 = vmul.f32 %v2552, %v1803
  %v2980 = vmul.f32 %v2557, %v1804
  %v2981 = vmul.f32 %v2557, %v1805
  %v2982 = vmul.f32 %v2562, %v1806
  %v2983 = vmul.f32 %v2562, %v1807
  %v2984 = vmul.f32 %v2567, %v1808
  %v2985 = vmul.f32 %v2567, %v1809
  %v2986 = vmul.f32 %v2572, %v1810
  %v2987 = vmul.f32 %v2572, %v1811
  %v2988 = vmul.f32 %v2577, %v1812
  %v2989 = vmul.f32 %v2577, %v1813
  %v2990 = vmul.f32 %v2582, %v1814
  %v2991 = vmul.f32 %v2582, %v1815
  %v2992 = vmul.f32 %v2587, %v1816
  %v2993 = vmul.f32 %v2587, %v1817
  %v2994 = vmul.f32 %v2592, %v1818
  %v2995 = vmul.f32 %v2592, %v1819
  %v2996 = vmul.f32 %v2597, %v1820
  %v2997 = vmul.f32 %v2597, %v1821
  %v2998 = vmul.f32 %v2602, %v1822
  %v2999 = vmul.f32 %v2602, %v1823
  %v3000 = vmul.f32 %v2607, %v1824
  %v3001 = vmul.f32 %v2607, %v1825
  %v3002 = vmul.f32 %v2612, %v1826
  %v3003 = vmul.f32 %v2612, %v1827
  %v3004 = vmul.f32 %v2617, %v1828
  %v3005 = vmul.f32 %v2617, %v1829
  %v3006 = vmul.f32 %v2622, %v1830
  %v3007 = vmul.f32 %v2622, %v1831
  %v3008 = vmul.f32 %v2627, %v1832
  %v3009 = vmul.f32 %v2627, %v1833
  %v3010 = vmul.f32 %v2632, %v1834
  %v3011 = vmul.f32 %v2632, %v1835
  %v3012 = vmul.f32 %v2637, %v1836
  %v3013 = vmul.f32 %v2637, %v1837
  %v3014 = vmul.f32 %v2642, %v1838
  %v3015 = vmul.f32 %v2642, %v1839
  %v3016 = vmul.f32 %v2647, %v1840
  %v3017 = vmul.f32 %v2647, %v1841
  %v3018 = vmul.f32 %v2652, %v1842
  %v3019 = vmul.f32 %v2652, %v1843
  %v3020 = vmul.f32 %v2657, %v1844
  %v3021 = vmul.f32 %v2657, %v1845
  %v3022 = vmul.f32 %v2662, %v1846
  %v3023 = vmul.f32 %v2662, %v1847
  %v3024 = vmul.f32 %v2667, %v1848
  %v3025 = vmul.f32 %v2667, %v1849
  %v3026 = vmul.f32 %v2672, %v1850
  %v3027 = vmul.f32 %v2672, %v1851
  %v3028 = vmul.f32 %v2677, %v1852
  %v3029 = vmul.f32 %v2677, %v1853
  %v3030 = vmul.f32 %v2682, %v1854
  %v3031 = vmul.f32 %v2682, %v1855
  %v3032 = vmul.f32 %v2687, %v1856
  %v3033 = vmul.f32 %v2687, %v1857
  %v3034 = vmul.f32 %v2692, %v1858
  %v3035 = vmul.f32 %v2692, %v1859
  %v3036 = vmul.f32 %v2697, %v1860
  %v3037 = vmul.f32 %v2697, %v1861
  %v3038 = vmul.f32 %v2702, %v1862
  %v3039 = vmul.f32 %v2702, %v1863
  %3040 = vst [vmem:[%s2] sm:$0xff] %v2704
  %vm3041 = vcmask 556032
  %3042 = vst.msk [vmem:[%s2 + $0x8] sm:$0xff] %vm3041, %v2705
  %3043 = vst [vmem:[%s2 + $0x10] sm:$0xff] %v2706
  %3044 = vst.msk [vmem:[%s2 + $0x18] sm:$0xff] %vm3041, %v2707
  %3045 = vst [vmem:[%s2 + $0x20] sm:$0xff] %v2708
  %3046 = vst.msk [vmem:[%s2 + $0x28] sm:$0xff] %vm3041, %v2709
  %3047 = vst [vmem:[%s2 + $0x30] sm:$0xff] %v2710
  %3048 = vst.msk [vmem:[%s2 + $0x38] sm:$0xff] %vm3041, %v2711
  %3049 = vst [vmem:[%s2 + $0x40] sm:$0xff] %v2712
  %3050 = vst.msk [vmem:[%s2 + $0x48] sm:$0xff] %vm3041, %v2713
  %3051 = vst [vmem:[%s2 + $0x50] sm:$0xff] %v2714
  %3052 = vst.msk [vmem:[%s2 + $0x58] sm:$0xff] %vm3041, %v2715
  %3053 = vst [vmem:[%s2 + $0x60] sm:$0xff] %v2716
  %3054 = vst.msk [vmem:[%s2 + $0x68] sm:$0xff] %vm3041, %v2717
  %3055 = vst [vmem:[%s2 + $0x70] sm:$0xff] %v2718
  %3056 = vst.msk [vmem:[%s2 + $0x78] sm:$0xff] %vm3041, %v2719
  %3057 = vst [vmem:[%s2 + $0x80] sm:$0xff] %v2720
  %3058 = vst.msk [vmem:[%s2 + $0x88] sm:$0xff] %vm3041, %v2721
  %3059 = vst [vmem:[%s2 + $0x90] sm:$0xff] %v2722
  %3060 = vst.msk [vmem:[%s2 + $0x98] sm:$0xff] %vm3041, %v2723
  %3061 = vst [vmem:[%s2 + $0xa0] sm:$0xff] %v2724
  %3062 = vst.msk [vmem:[%s2 + $0xa8] sm:$0xff] %vm3041, %v2725
  %3063 = vst [vmem:[%s2 + $0xb0] sm:$0xff] %v2726
  %3064 = vst.msk [vmem:[%s2 + $0xb8] sm:$0xff] %vm3041, %v2727
  %3065 = vst [vmem:[%s2 + $0xc0] sm:$0xff] %v2728
  %3066 = vst.msk [vmem:[%s2 + $0xc8] sm:$0xff] %vm3041, %v2729
  %3067 = vst [vmem:[%s2 + $0xd0] sm:$0xff] %v2730
  %3068 = vst.msk [vmem:[%s2 + $0xd8] sm:$0xff] %vm3041, %v2731
  %3069 = vst [vmem:[%s2 + $0xe0] sm:$0xff] %v2732
  %3070 = vst.msk [vmem:[%s2 + $0xe8] sm:$0xff] %vm3041, %v2733
  %3071 = vst [vmem:[%s2 + $0xf0] sm:$0xff] %v2734
  %3072 = vst.msk [vmem:[%s2 + $0xf8] sm:$0xff] %vm3041, %v2735
  %3073 = vst [vmem:[%s2 + $0x100] sm:$0xff] %v2736
  %3074 = vst.msk [vmem:[%s2 + $0x108] sm:$0xff] %vm3041, %v2737
  %3075 = vst [vmem:[%s2 + $0x110] sm:$0xff] %v2738
  %3076 = vst.msk [vmem:[%s2 + $0x118] sm:$0xff] %vm3041, %v2739
  %3077 = vst [vmem:[%s2 + $0x120] sm:$0xff] %v2740
  %3078 = vst.msk [vmem:[%s2 + $0x128] sm:$0xff] %vm3041, %v2741
  %3079 = vst [vmem:[%s2 + $0x130] sm:$0xff] %v2742
  %3080 = vst.msk [vmem:[%s2 + $0x138] sm:$0xff] %vm3041, %v2743
  %3081 = vst [vmem:[%s2 + $0x140] sm:$0xff] %v2744
  %3082 = vst.msk [vmem:[%s2 + $0x148] sm:$0xff] %vm3041, %v2745
  %3083 = vst [vmem:[%s2 + $0x150] sm:$0xff] %v2746
  %3084 = vst.msk [vmem:[%s2 + $0x158] sm:$0xff] %vm3041, %v2747
  %3085 = vst [vmem:[%s2 + $0x160] sm:$0xff] %v2748
  %3086 = vst.msk [vmem:[%s2 + $0x168] sm:$0xff] %vm3041, %v2749
  %3087 = vst [vmem:[%s2 + $0x170] sm:$0xff] %v2750
  %3088 = vst.msk [vmem:[%s2 + $0x178] sm:$0xff] %vm3041, %v2751
  %3089 = vst [vmem:[%s2 + $0x180] sm:$0xff] %v2752
  %3090 = vst.msk [vmem:[%s2 + $0x188] sm:$0xff] %vm3041, %v2753
  %3091 = vst [vmem:[%s2 + $0x190] sm:$0xff] %v2754
  %3092 = vst.msk [vmem:[%s2 + $0x198] sm:$0xff] %vm3041, %v2755
  %3093 = vst [vmem:[%s2 + $0x1a0] sm:$0xff] %v2756
  %3094 = vst.msk [vmem:[%s2 + $0x1a8] sm:$0xff] %vm3041, %v2757
  %3095 = vst [vmem:[%s2 + $0x1b0] sm:$0xff] %v2758
  %3096 = vst.msk [vmem:[%s2 + $0x1b8] sm:$0xff] %vm3041, %v2759
  %3097 = vst [vmem:[%s2 + $0x1c0] sm:$0xff] %v2760
  %3098 = vst.msk [vmem:[%s2 + $0x1c8] sm:$0xff] %vm3041, %v2761
  %3099 = vst [vmem:[%s2 + $0x1d0] sm:$0xff] %v2762
  %3100 = vst.msk [vmem:[%s2 + $0x1d8] sm:$0xff] %vm3041, %v2763
  %3101 = vst [vmem:[%s2 + $0x1e0] sm:$0xff] %v2764
  %3102 = vst.msk [vmem:[%s2 + $0x1e8] sm:$0xff] %vm3041, %v2765
  %3103 = vst [vmem:[%s2 + $0x1f0] sm:$0xff] %v2766
  %3104 = vst.msk [vmem:[%s2 + $0x1f8] sm:$0xff] %vm3041, %v2767
  %3105 = vst [vmem:[%s2 + $0x200] sm:$0xff] %v2768
  %3106 = vst.msk [vmem:[%s2 + $0x208] sm:$0xff] %vm3041, %v2769
  %3107 = vst [vmem:[%s2 + $0x210] sm:$0xff] %v2770
  %3108 = vst.msk [vmem:[%s2 + $0x218] sm:$0xff] %vm3041, %v2771
  %3109 = vst [vmem:[%s2 + $0x220] sm:$0xff] %v2772
  %3110 = vst.msk [vmem:[%s2 + $0x228] sm:$0xff] %vm3041, %v2773
  %3111 = vst [vmem:[%s2 + $0x230] sm:$0xff] %v2774
  %3112 = vst.msk [vmem:[%s2 + $0x238] sm:$0xff] %vm3041, %v2775
  %3113 = vst [vmem:[%s2 + $0x240] sm:$0xff] %v2776
  %3114 = vst.msk [vmem:[%s2 + $0x248] sm:$0xff] %vm3041, %v2777
  %3115 = vst [vmem:[%s2 + $0x250] sm:$0xff] %v2778
  %3116 = vst.msk [vmem:[%s2 + $0x258] sm:$0xff] %vm3041, %v2779
  %3117 = vst [vmem:[%s2 + $0x260] sm:$0xff] %v2780
  %3118 = vst.msk [vmem:[%s2 + $0x268] sm:$0xff] %vm3041, %v2781
  %3119 = vst [vmem:[%s2 + $0x270] sm:$0xff] %v2782
  %3120 = vst.msk [vmem:[%s2 + $0x278] sm:$0xff] %vm3041, %v2783
  %3121 = vst [vmem:[%s2 + $0x280] sm:$0xff] %v2784
  %3122 = vst.msk [vmem:[%s2 + $0x288] sm:$0xff] %vm3041, %v2785
  %3123 = vst [vmem:[%s2 + $0x290] sm:$0xff] %v2786
  %3124 = vst.msk [vmem:[%s2 + $0x298] sm:$0xff] %vm3041, %v2787
  %3125 = vst [vmem:[%s2 + $0x2a0] sm:$0xff] %v2788
  %3126 = vst.msk [vmem:[%s2 + $0x2a8] sm:$0xff] %vm3041, %v2789
  %3127 = vst [vmem:[%s2 + $0x2b0] sm:$0xff] %v2790
  %3128 = vst.msk [vmem:[%s2 + $0x2b8] sm:$0xff] %vm3041, %v2791
  %3129 = vst [vmem:[%s2 + $0x2c0] sm:$0xff] %v2792
  %3130 = vst.msk [vmem:[%s2 + $0x2c8] sm:$0xff] %vm3041, %v2793
  %3131 = vst [vmem:[%s2 + $0x2d0] sm:$0xff] %v2794
  %3132 = vst.msk [vmem:[%s2 + $0x2d8] sm:$0xff] %vm3041, %v2795
  %3133 = vst [vmem:[%s2 + $0x2e0] sm:$0xff] %v2796
  %3134 = vst.msk [vmem:[%s2 + $0x2e8] sm:$0xff] %vm3041, %v2797
  %3135 = vst [vmem:[%s2 + $0x2f0] sm:$0xff] %v2798
  %3136 = vst.msk [vmem:[%s2 + $0x2f8] sm:$0xff] %vm3041, %v2799
  %3137 = vst [vmem:[%s2 + $0x300] sm:$0xff] %v2800
  %3138 = vst.msk [vmem:[%s2 + $0x308] sm:$0xff] %vm3041, %v2801
  %3139 = vst [vmem:[%s2 + $0x310] sm:$0xff] %v2802
  %3140 = vst.msk [vmem:[%s2 + $0x318] sm:$0xff] %vm3041, %v2803
  %3141 = vst [vmem:[%s2 + $0x320] sm:$0xff] %v2804
  %3142 = vst.msk [vmem:[%s2 + $0x328] sm:$0xff] %vm3041, %v2805
  %3143 = vst [vmem:[%s2 + $0x330] sm:$0xff] %v2806
  %3144 = vst.msk [vmem:[%s2 + $0x338] sm:$0xff] %vm3041, %v2807
  %3145 = vst [vmem:[%s2 + $0x340] sm:$0xff] %v2808
  %3146 = vst.msk [vmem:[%s2 + $0x348] sm:$0xff] %vm3041, %v2809
  %3147 = vst [vmem:[%s2 + $0x350] sm:$0xff] %v2810
  %3148 = vst.msk [vmem:[%s2 + $0x358] sm:$0xff] %vm3041, %v2811
  %3149 = vst [vmem:[%s2 + $0x360] sm:$0xff] %v2812
  %3150 = vst.msk [vmem:[%s2 + $0x368] sm:$0xff] %vm3041, %v2813
  %3151 = vst [vmem:[%s2 + $0x370] sm:$0xff] %v2814
  %3152 = vst.msk [vmem:[%s2 + $0x378] sm:$0xff] %vm3041, %v2815
  %3153 = vst [vmem:[%s2 + $0x380] sm:$0xff] %v2816
  %3154 = vst.msk [vmem:[%s2 + $0x388] sm:$0xff] %vm3041, %v2817
  %3155 = vst [vmem:[%s2 + $0x390] sm:$0xff] %v2818
  %3156 = vst.msk [vmem:[%s2 + $0x398] sm:$0xff] %vm3041, %v2819
  %3157 = vst [vmem:[%s2 + $0x3a0] sm:$0xff] %v2820
  %3158 = vst.msk [vmem:[%s2 + $0x3a8] sm:$0xff] %vm3041, %v2821
  %3159 = vst [vmem:[%s2 + $0x3b0] sm:$0xff] %v2822
  %3160 = vst.msk [vmem:[%s2 + $0x3b8] sm:$0xff] %vm3041, %v2823
  %3161 = vst [vmem:[%s2 + $0x3c0] sm:$0xff] %v2824
  %3162 = vst.msk [vmem:[%s2 + $0x3c8] sm:$0xff] %vm3041, %v2825
  %3163 = vst [vmem:[%s2 + $0x3d0] sm:$0xff] %v2826
  %3164 = vst.msk [vmem:[%s2 + $0x3d8] sm:$0xff] %vm3041, %v2827
  %3165 = vst [vmem:[%s2 + $0x3e0] sm:$0xff] %v2828
  %3166 = vst.msk [vmem:[%s2 + $0x3e8] sm:$0xff] %vm3041, %v2829
  %3167 = vst [vmem:[%s2 + $0x3f0] sm:$0xff] %v2830
  %3168 = vst.msk [vmem:[%s2 + $0x3f8] sm:$0xff] %vm3041, %v2831
  %3169 = vst [vmem:[%s2 + $0x400] sm:$0xff] %v2832
  %3170 = vst.msk [vmem:[%s2 + $0x408] sm:$0xff] %vm3041, %v2833
  %3171 = vst [vmem:[%s2 + $0x410] sm:$0xff] %v2834
  %3172 = vst.msk [vmem:[%s2 + $0x418] sm:$0xff] %vm3041, %v2835
  %3173 = vst [vmem:[%s2 + $0x420] sm:$0xff] %v2836
  %3174 = vst.msk [vmem:[%s2 + $0x428] sm:$0xff] %vm3041, %v2837
  %3175 = vst [vmem:[%s2 + $0x430] sm:$0xff] %v2838
  %3176 = vst.msk [vmem:[%s2 + $0x438] sm:$0xff] %vm3041, %v2839
  %3177 = vst [vmem:[%s2 + $0x440] sm:$0xff] %v2840
  %3178 = vst.msk [vmem:[%s2 + $0x448] sm:$0xff] %vm3041, %v2841
  %3179 = vst [vmem:[%s2 + $0x450] sm:$0xff] %v2842
  %3180 = vst.msk [vmem:[%s2 + $0x458] sm:$0xff] %vm3041, %v2843
  %3181 = vst [vmem:[%s2 + $0x460] sm:$0xff] %v2844
  %3182 = vst.msk [vmem:[%s2 + $0x468] sm:$0xff] %vm3041, %v2845
  %3183 = vst [vmem:[%s2 + $0x470] sm:$0xff] %v2846
  %3184 = vst.msk [vmem:[%s2 + $0x478] sm:$0xff] %vm3041, %v2847
  %3185 = vst [vmem:[%s2 + $0x480] sm:$0xff] %v2848
  %3186 = vst.msk [vmem:[%s2 + $0x488] sm:$0xff] %vm3041, %v2849
  %3187 = vst [vmem:[%s2 + $0x490] sm:$0xff] %v2850
  %3188 = vst.msk [vmem:[%s2 + $0x498] sm:$0xff] %vm3041, %v2851
  %3189 = vst [vmem:[%s2 + $0x4a0] sm:$0xff] %v2852
  %3190 = vst.msk [vmem:[%s2 + $0x4a8] sm:$0xff] %vm3041, %v2853
  %3191 = vst [vmem:[%s2 + $0x4b0] sm:$0xff] %v2854
  %3192 = vst.msk [vmem:[%s2 + $0x4b8] sm:$0xff] %vm3041, %v2855
  %3193 = vst [vmem:[%s2 + $0x4c0] sm:$0xff] %v2856
  %3194 = vst.msk [vmem:[%s2 + $0x4c8] sm:$0xff] %vm3041, %v2857
  %3195 = vst [vmem:[%s2 + $0x4d0] sm:$0xff] %v2858
  %3196 = vst.msk [vmem:[%s2 + $0x4d8] sm:$0xff] %vm3041, %v2859
  %3197 = vst [vmem:[%s2 + $0x4e0] sm:$0xff] %v2860
  %3198 = vst.msk [vmem:[%s2 + $0x4e8] sm:$0xff] %vm3041, %v2861
  %3199 = vst [vmem:[%s2 + $0x4f0] sm:$0xff] %v2862
  %3200 = vst.msk [vmem:[%s2 + $0x4f8] sm:$0xff] %vm3041, %v2863
  %3201 = vst [vmem:[%s2 + $0x500] sm:$0xff] %v2864
  %3202 = vst.msk [vmem:[%s2 + $0x508] sm:$0xff] %vm3041, %v2865
  %3203 = vst [vmem:[%s2 + $0x510] sm:$0xff] %v2866
  %3204 = vst.msk [vmem:[%s2 + $0x518] sm:$0xff] %vm3041, %v2867
  %3205 = vst [vmem:[%s2 + $0x520] sm:$0xff] %v2868
  %3206 = vst.msk [vmem:[%s2 + $0x528] sm:$0xff] %vm3041, %v2869
  %3207 = vst [vmem:[%s2 + $0x530] sm:$0xff] %v2870
  %3208 = vst.msk [vmem:[%s2 + $0x538] sm:$0xff] %vm3041, %v2871
  %3209 = vst [vmem:[%s2 + $0x540] sm:$0xff] %v2872
  %3210 = vst.msk [vmem:[%s2 + $0x548] sm:$0xff] %vm3041, %v2873
  %3211 = vst [vmem:[%s2 + $0x550] sm:$0xff] %v2874
  %3212 = vst.msk [vmem:[%s2 + $0x558] sm:$0xff] %vm3041, %v2875
  %3213 = vst [vmem:[%s2 + $0x560] sm:$0xff] %v2876
  %3214 = vst.msk [vmem:[%s2 + $0x568] sm:$0xff] %vm3041, %v2877
  %3215 = vst [vmem:[%s2 + $0x570] sm:$0xff] %v2878
  %3216 = vst.msk [vmem:[%s2 + $0x578] sm:$0xff] %vm3041, %v2879
  %3217 = vst [vmem:[%s2 + $0x580] sm:$0xff] %v2880
  %3218 = vst.msk [vmem:[%s2 + $0x588] sm:$0xff] %vm3041, %v2881
  %3219 = vst [vmem:[%s2 + $0x590] sm:$0xff] %v2882
  %3220 = vst.msk [vmem:[%s2 + $0x598] sm:$0xff] %vm3041, %v2883
  %3221 = vst [vmem:[%s2 + $0x5a0] sm:$0xff] %v2884
  %3222 = vst.msk [vmem:[%s2 + $0x5a8] sm:$0xff] %vm3041, %v2885
  %3223 = vst [vmem:[%s2 + $0x5b0] sm:$0xff] %v2886
  %3224 = vst.msk [vmem:[%s2 + $0x5b8] sm:$0xff] %vm3041, %v2887
  %3225 = vst [vmem:[%s2 + $0x5c0] sm:$0xff] %v2888
  %3226 = vst.msk [vmem:[%s2 + $0x5c8] sm:$0xff] %vm3041, %v2889
  %3227 = vst [vmem:[%s2 + $0x5d0] sm:$0xff] %v2890
  %3228 = vst.msk [vmem:[%s2 + $0x5d8] sm:$0xff] %vm3041, %v2891
  %3229 = vst [vmem:[%s2 + $0x5e0] sm:$0xff] %v2892
  %3230 = vst.msk [vmem:[%s2 + $0x5e8] sm:$0xff] %vm3041, %v2893
  %3231 = vst [vmem:[%s2 + $0x5f0] sm:$0xff] %v2894
  %3232 = vst.msk [vmem:[%s2 + $0x5f8] sm:$0xff] %vm3041, %v2895
  %3233 = vst [vmem:[%s2 + $0x600] sm:$0xff] %v2896
  %3234 = vst.msk [vmem:[%s2 + $0x608] sm:$0xff] %vm3041, %v2897
  %3235 = vst [vmem:[%s2 + $0x610] sm:$0xff] %v2898
  %3236 = vst.msk [vmem:[%s2 + $0x618] sm:$0xff] %vm3041, %v2899
  %3237 = vst [vmem:[%s2 + $0x620] sm:$0xff] %v2900
  %3238 = vst.msk [vmem:[%s2 + $0x628] sm:$0xff] %vm3041, %v2901
  %3239 = vst [vmem:[%s2 + $0x630] sm:$0xff] %v2902
  %3240 = vst.msk [vmem:[%s2 + $0x638] sm:$0xff] %vm3041, %v2903
  %3241 = vst [vmem:[%s2 + $0x640] sm:$0xff] %v2904
  %3242 = vst.msk [vmem:[%s2 + $0x648] sm:$0xff] %vm3041, %v2905
  %3243 = vst [vmem:[%s2 + $0x650] sm:$0xff] %v2906
  %3244 = vst.msk [vmem:[%s2 + $0x658] sm:$0xff] %vm3041, %v2907
  %3245 = vst [vmem:[%s2 + $0x660] sm:$0xff] %v2908
  %3246 = vst.msk [vmem:[%s2 + $0x668] sm:$0xff] %vm3041, %v2909
  %3247 = vst [vmem:[%s2 + $0x670] sm:$0xff] %v2910
  %3248 = vst.msk [vmem:[%s2 + $0x678] sm:$0xff] %vm3041, %v2911
  %3249 = vst [vmem:[%s2 + $0x680] sm:$0xff] %v2912
  %3250 = vst.msk [vmem:[%s2 + $0x688] sm:$0xff] %vm3041, %v2913
  %3251 = vst [vmem:[%s2 + $0x690] sm:$0xff] %v2914
  %3252 = vst.msk [vmem:[%s2 + $0x698] sm:$0xff] %vm3041, %v2915
  %3253 = vst [vmem:[%s2 + $0x6a0] sm:$0xff] %v2916
  %3254 = vst.msk [vmem:[%s2 + $0x6a8] sm:$0xff] %vm3041, %v2917
  %3255 = vst [vmem:[%s2 + $0x6b0] sm:$0xff] %v2918
  %3256 = vst.msk [vmem:[%s2 + $0x6b8] sm:$0xff] %vm3041, %v2919
  %3257 = vst [vmem:[%s2 + $0x6c0] sm:$0xff] %v2920
  %3258 = vst.msk [vmem:[%s2 + $0x6c8] sm:$0xff] %vm3041, %v2921
  %3259 = vst [vmem:[%s2 + $0x6d0] sm:$0xff] %v2922
  %3260 = vst.msk [vmem:[%s2 + $0x6d8] sm:$0xff] %vm3041, %v2923
  %3261 = vst [vmem:[%s2 + $0x6e0] sm:$0xff] %v2924
  %3262 = vst.msk [vmem:[%s2 + $0x6e8] sm:$0xff] %vm3041, %v2925
  %3263 = vst [vmem:[%s2 + $0x6f0] sm:$0xff] %v2926
  %3264 = vst.msk [vmem:[%s2 + $0x6f8] sm:$0xff] %vm3041, %v2927
  %3265 = vst [vmem:[%s2 + $0x700] sm:$0xff] %v2928
  %3266 = vst.msk [vmem:[%s2 + $0x708] sm:$0xff] %vm3041, %v2929
  %3267 = vst [vmem:[%s2 + $0x710] sm:$0xff] %v2930
  %3268 = vst.msk [vmem:[%s2 + $0x718] sm:$0xff] %vm3041, %v2931
  %3269 = vst [vmem:[%s2 + $0x720] sm:$0xff] %v2932
  %3270 = vst.msk [vmem:[%s2 + $0x728] sm:$0xff] %vm3041, %v2933
  %3271 = vst [vmem:[%s2 + $0x730] sm:$0xff] %v2934
  %3272 = vst.msk [vmem:[%s2 + $0x738] sm:$0xff] %vm3041, %v2935
  %3273 = vst [vmem:[%s2 + $0x740] sm:$0xff] %v2936
  %3274 = vst.msk [vmem:[%s2 + $0x748] sm:$0xff] %vm3041, %v2937
  %3275 = vst [vmem:[%s2 + $0x750] sm:$0xff] %v2938
  %3276 = vst.msk [vmem:[%s2 + $0x758] sm:$0xff] %vm3041, %v2939
  %3277 = vst [vmem:[%s2 + $0x760] sm:$0xff] %v2940
  %3278 = vst.msk [vmem:[%s2 + $0x768] sm:$0xff] %vm3041, %v2941
  %3279 = vst [vmem:[%s2 + $0x770] sm:$0xff] %v2942
  %3280 = vst.msk [vmem:[%s2 + $0x778] sm:$0xff] %vm3041, %v2943
  %3281 = vst [vmem:[%s2 + $0x780] sm:$0xff] %v2944
  %3282 = vst.msk [vmem:[%s2 + $0x788] sm:$0xff] %vm3041, %v2945
  %3283 = vst [vmem:[%s2 + $0x790] sm:$0xff] %v2946
  %3284 = vst.msk [vmem:[%s2 + $0x798] sm:$0xff] %vm3041, %v2947
  %3285 = vst [vmem:[%s2 + $0x7a0] sm:$0xff] %v2948
  %3286 = vst.msk [vmem:[%s2 + $0x7a8] sm:$0xff] %vm3041, %v2949
  %3287 = vst [vmem:[%s2 + $0x7b0] sm:$0xff] %v2950
  %3288 = vst.msk [vmem:[%s2 + $0x7b8] sm:$0xff] %vm3041, %v2951
  %3289 = vst [vmem:[%s2 + $0x7c0] sm:$0xff] %v2952
  %3290 = vst.msk [vmem:[%s2 + $0x7c8] sm:$0xff] %vm3041, %v2953
  %3291 = vst [vmem:[%s2 + $0x7d0] sm:$0xff] %v2954
  %3292 = vst.msk [vmem:[%s2 + $0x7d8] sm:$0xff] %vm3041, %v2955
  %3293 = vst [vmem:[%s2 + $0x7e0] sm:$0xff] %v2956
  %3294 = vst.msk [vmem:[%s2 + $0x7e8] sm:$0xff] %vm3041, %v2957
  %3295 = vst [vmem:[%s2 + $0x7f0] sm:$0xff] %v2958
  %3296 = vst.msk [vmem:[%s2 + $0x7f8] sm:$0xff] %vm3041, %v2959
  %3297 = vst [vmem:[%s2 + $0x800] sm:$0xff] %v2960
  %3298 = vst.msk [vmem:[%s2 + $0x808] sm:$0xff] %vm3041, %v2961
  %3299 = vst [vmem:[%s2 + $0x810] sm:$0xff] %v2962
  %3300 = vst.msk [vmem:[%s2 + $0x818] sm:$0xff] %vm3041, %v2963
  %3301 = vst [vmem:[%s2 + $0x820] sm:$0xff] %v2964
  %3302 = vst.msk [vmem:[%s2 + $0x828] sm:$0xff] %vm3041, %v2965
  %3303 = vst [vmem:[%s2 + $0x830] sm:$0xff] %v2966
  %3304 = vst.msk [vmem:[%s2 + $0x838] sm:$0xff] %vm3041, %v2967
  %3305 = vst [vmem:[%s2 + $0x840] sm:$0xff] %v2968
  %3306 = vst.msk [vmem:[%s2 + $0x848] sm:$0xff] %vm3041, %v2969
  %3307 = vst [vmem:[%s2 + $0x850] sm:$0xff] %v2970
  %3308 = vst.msk [vmem:[%s2 + $0x858] sm:$0xff] %vm3041, %v2971
  %3309 = vst [vmem:[%s2 + $0x860] sm:$0xff] %v2972
  %3310 = vst.msk [vmem:[%s2 + $0x868] sm:$0xff] %vm3041, %v2973
  %3311 = vst [vmem:[%s2 + $0x870] sm:$0xff] %v2974
  %3312 = vst.msk [vmem:[%s2 + $0x878] sm:$0xff] %vm3041, %v2975
  %3313 = vst [vmem:[%s2 + $0x880] sm:$0xff] %v2976
  %3314 = vst.msk [vmem:[%s2 + $0x888] sm:$0xff] %vm3041, %v2977
  %3315 = vst [vmem:[%s2 + $0x890] sm:$0xff] %v2978
  %3316 = vst.msk [vmem:[%s2 + $0x898] sm:$0xff] %vm3041, %v2979
  %3317 = vst [vmem:[%s2 + $0x8a0] sm:$0xff] %v2980
  %3318 = vst.msk [vmem:[%s2 + $0x8a8] sm:$0xff] %vm3041, %v2981
  %3319 = vst [vmem:[%s2 + $0x8b0] sm:$0xff] %v2982
  %3320 = vst.msk [vmem:[%s2 + $0x8b8] sm:$0xff] %vm3041, %v2983
  %3321 = vst [vmem:[%s2 + $0x8c0] sm:$0xff] %v2984
  %3322 = vst.msk [vmem:[%s2 + $0x8c8] sm:$0xff] %vm3041, %v2985
  %3323 = vst [vmem:[%s2 + $0x8d0] sm:$0xff] %v2986
  %3324 = vst.msk [vmem:[%s2 + $0x8d8] sm:$0xff] %vm3041, %v2987
  %3325 = vst [vmem:[%s2 + $0x8e0] sm:$0xff] %v2988
  %3326 = vst.msk [vmem:[%s2 + $0x8e8] sm:$0xff] %vm3041, %v2989
  %3327 = vst [vmem:[%s2 + $0x8f0] sm:$0xff] %v2990
  %3328 = vst.msk [vmem:[%s2 + $0x8f8] sm:$0xff] %vm3041, %v2991
  %3329 = vst [vmem:[%s2 + $0x900] sm:$0xff] %v2992
  %3330 = vst.msk [vmem:[%s2 + $0x908] sm:$0xff] %vm3041, %v2993
  %3331 = vst [vmem:[%s2 + $0x910] sm:$0xff] %v2994
  %3332 = vst.msk [vmem:[%s2 + $0x918] sm:$0xff] %vm3041, %v2995
  %3333 = vst [vmem:[%s2 + $0x920] sm:$0xff] %v2996
  %3334 = vst.msk [vmem:[%s2 + $0x928] sm:$0xff] %vm3041, %v2997
  %3335 = vst [vmem:[%s2 + $0x930] sm:$0xff] %v2998
  %3336 = vst.msk [vmem:[%s2 + $0x938] sm:$0xff] %vm3041, %v2999
  %3337 = vst [vmem:[%s2 + $0x940] sm:$0xff] %v3000
  %3338 = vst.msk [vmem:[%s2 + $0x948] sm:$0xff] %vm3041, %v3001
  %3339 = vst [vmem:[%s2 + $0x950] sm:$0xff] %v3002
  %3340 = vst.msk [vmem:[%s2 + $0x958] sm:$0xff] %vm3041, %v3003
  %3341 = vst [vmem:[%s2 + $0x960] sm:$0xff] %v3004
  %3342 = vst.msk [vmem:[%s2 + $0x968] sm:$0xff] %vm3041, %v3005
  %3343 = vst [vmem:[%s2 + $0x970] sm:$0xff] %v3006
  %3344 = vst.msk [vmem:[%s2 + $0x978] sm:$0xff] %vm3041, %v3007
  %3345 = vst [vmem:[%s2 + $0x980] sm:$0xff] %v3008
  %3346 = vst.msk [vmem:[%s2 + $0x988] sm:$0xff] %vm3041, %v3009
  %3347 = vst [vmem:[%s2 + $0x990] sm:$0xff] %v3010
  %3348 = vst.msk [vmem:[%s2 + $0x998] sm:$0xff] %vm3041, %v3011
  %3349 = vst [vmem:[%s2 + $0x9a0] sm:$0xff] %v3012
  %3350 = vst.msk [vmem:[%s2 + $0x9a8] sm:$0xff] %vm3041, %v3013
  %3351 = vst [vmem:[%s2 + $0x9b0] sm:$0xff] %v3014
  %3352 = vst.msk [vmem:[%s2 + $0x9b8] sm:$0xff] %vm3041, %v3015
  %3353 = vst [vmem:[%s2 + $0x9c0] sm:$0xff] %v3016
  %3354 = vst.msk [vmem:[%s2 + $0x9c8] sm:$0xff] %vm3041, %v3017
  %3355 = vst [vmem:[%s2 + $0x9d0] sm:$0xff] %v3018
  %3356 = vst.msk [vmem:[%s2 + $0x9d8] sm:$0xff] %vm3041, %v3019
  %3357 = vst [vmem:[%s2 + $0x9e0] sm:$0xff] %v3020
  %3358 = vst.msk [vmem:[%s2 + $0x9e8] sm:$0xff] %vm3041, %v3021
  %3359 = vst [vmem:[%s2 + $0x9f0] sm:$0xff] %v3022
  %3360 = vst.msk [vmem:[%s2 + $0x9f8] sm:$0xff] %vm3041, %v3023
  %3361 = vst [vmem:[%s2 + $0xa00] sm:$0xff] %v3024
  %3362 = vst.msk [vmem:[%s2 + $0xa08] sm:$0xff] %vm3041, %v3025
  %3363 = vst [vmem:[%s2 + $0xa10] sm:$0xff] %v3026
  %3364 = vst.msk [vmem:[%s2 + $0xa18] sm:$0xff] %vm3041, %v3027
  %3365 = vst [vmem:[%s2 + $0xa20] sm:$0xff] %v3028
  %3366 = vst.msk [vmem:[%s2 + $0xa28] sm:$0xff] %vm3041, %v3029
  %3367 = vst [vmem:[%s2 + $0xa30] sm:$0xff] %v3030
  %3368 = vst.msk [vmem:[%s2 + $0xa38] sm:$0xff] %vm3041, %v3031
  %3369 = vst [vmem:[%s2 + $0xa40] sm:$0xff] %v3032
  %3370 = vst.msk [vmem:[%s2 + $0xa48] sm:$0xff] %vm3041, %v3033
  %3371 = vst [vmem:[%s2 + $0xa50] sm:$0xff] %v3034
  %3372 = vst.msk [vmem:[%s2 + $0xa58] sm:$0xff] %vm3041, %v3035
  %3373 = vst [vmem:[%s2 + $0xa60] sm:$0xff] %v3036
  %3374 = vst.msk [vmem:[%s2 + $0xa68] sm:$0xff] %vm3041, %v3037
  %3375 = vst [vmem:[%s2 + $0xa70] sm:$0xff] %v3038
  %3376 = vst.msk [vmem:[%s2 + $0xa78] sm:$0xff] %vm3041, %v3039
  // Predicated region
  $region14: #{tpu_custom_call.1} parent=0 // pred_check
    _
  $region15: #{tpu_custom_call.1} parent=0 // pred_check_branch
    %3378 = sbr.rel (0) target = $region17
  $region16: #{tpu_custom_call.1} parent=0 // pred_region
    _
  $region17: #{tpu_custom_call.1} parent=0 // pred_fallthru
    _
  // Predicated region
  $region18: #{tpu_custom_call.1} parent=0 // pred_check
    _
  $region19: #{tpu_custom_call.1} parent=0 // pred_check_branch
    %3380 = sbr.rel (0) target = $region21
  $region20: #{tpu_custom_call.1} parent=0 // pred_region
    _
  $region21: #{tpu_custom_call.1} parent=0 // pred_fallthru
    _

</llo_original>
